<compile_context>
chip_gen: v7x
topology: tpu7x:2x2x1
jax: 0.10.0
libtpu: 0.0.40
codegen_flags: <defaults>
</compile_context>

<pallas_src>
import functools

import jax
import jax.numpy as jnp
from jax import lax
from jax.experimental import pallas as pl
from jax.experimental.pallas import tpu as pltpu

BN_EPS = 1e-5
H1, H2, H3, OUT = 512, 256, 128, 40
OUT_PAD = 128          # last layer padded to a lane-dense 128-wide output slab
DEFAULT_TB = 512       # batch tile (big tiles -> ~85% of HBM roofline)


def _round_up(n, m):
    return ((n + m - 1) // m) * m


def _choose_tile(batch, block_batch):
    """Pick (tb, b_pad, nb). Prefer >=2 grid steps (v7x 2-TC split) as long as
    tiles stay >=128 rows."""
    tb = min(block_batch, _round_up(batch, 8))
    b_pad = _round_up(batch, tb)
    nb = b_pad // tb
    if nb == 1 and tb >= 256:
        tb = _round_up(tb // 2, 8)
        b_pad = _round_up(batch, tb)
        nb = b_pad // tb
    return tb, b_pad, nb


# --------------------------------------------------------------------------- #
# Pass 1: per-tile BatchNorm partial sums of h1 = x @ W1 + b1
#         (bf16 MXU, f32 accumulation; padded batch rows masked out).
# --------------------------------------------------------------------------- #
def _bn_stats_kernel(x_ref, w1_ref, b1_ref, sum_ref, sq_ref, *, batch, tb):
    h1 = jnp.dot(x_ref[...].astype(jnp.bfloat16), w1_ref[...],
                 preferred_element_type=jnp.float32) + b1_ref[...]
    # Mask batch-padding rows out of the BatchNorm statistics.
    row = pl.program_id(0) * tb + lax.broadcasted_iota(jnp.int32, (tb, 1), 0)
    valid = (row < batch).astype(jnp.float32)
    h1v = h1 * valid
    sum_ref[...] = jnp.sum(h1v, axis=0, keepdims=True).reshape(1, 1, H1)
    sq_ref[...] = jnp.sum(h1v * h1, axis=0, keepdims=True).reshape(1, 1, H1)


# --------------------------------------------------------------------------- #
# Pass 2: cross-tile BN reduction + fold to scale/shift (inside the kernel),
#         recompute h1 = x@W1+b1, BN + ReLU, then Linear(512,256)+ReLU,
#         Linear(256,128)+ReLU, Linear(128,40 padded to 128).
# --------------------------------------------------------------------------- #
def _mlp_kernel(x_ref, w1_ref, b1_ref, sum_ref, sq_ref, gamma_ref, beta_ref,
                w2_ref, b2_ref, w3_ref, b3_ref, w4_ref, b4_ref, o_ref, *, batch):
    inv_b = 1.0 / batch
    s = jnp.sum(sum_ref[...], axis=0)          # (1, H1)
    ss = jnp.sum(sq_ref[...], axis=0)          # (1, H1)
    mean = s * inv_b
    var = jnp.maximum(ss * inv_b - mean * mean, 0.0)   # biased (train-mode) var
    scale = gamma_ref[...] * lax.rsqrt(var + BN_EPS)
    shift = beta_ref[...] - mean * scale

    h1 = jnp.dot(x_ref[...].astype(jnp.bfloat16), w1_ref[...],
                 preferred_element_type=jnp.float32) + b1_ref[...]
    h1 = jnp.maximum(h1 * scale + shift, 0.0)
    h2 = jnp.maximum(
        jnp.dot(h1.astype(jnp.bfloat16), w2_ref[...],
                preferred_element_type=jnp.float32) + b2_ref[...], 0.0)
    h3 = jnp.maximum(
        jnp.dot(h2.astype(jnp.bfloat16), w3_ref[...],
                preferred_element_type=jnp.float32) + b3_ref[...], 0.0)
    o_ref[...] = (jnp.dot(h3.astype(jnp.bfloat16), w4_ref[...],
                          preferred_element_type=jnp.float32)
                  + b4_ref[...]).astype(o_ref.dtype)


# --------------------------------------------------------------------------- #
# Wrapper
# --------------------------------------------------------------------------- #
@functools.partial(jax.jit, static_argnames=("block_batch",))
def encoder_pet_forward(x, params, *, block_batch=DEFAULT_TB):
    """x: (B, input_size) float32 -> (B, 40) float32."""
    B, D = x.shape
    tb, b_pad, nb = _choose_tile(B, block_batch)
    if b_pad != B:
        x = jnp.pad(x, ((0, b_pad - B), (0, 0)))

    # bf16 MXU operands; biases / BN params stay f32. Pad layer 4 to 128 lanes.
    w1 = params["w1"].astype(jnp.bfloat16)
    w2 = params["w2"].astype(jnp.bfloat16)
    w3 = params["w3"].astype(jnp.bfloat16)
    w4 = jnp.pad(params["w4"], ((0, 0), (0, OUT_PAD - OUT))).astype(jnp.bfloat16)
    b1, b2, b3 = params["b1"], params["b2"], params["b3"]
    b4 = jnp.pad(params["b4"], ((0, 0), (0, OUT_PAD - OUT)))
    gamma, beta = params["gamma"], params["beta"]

    def const(shape):
        ndim = len(shape)
        return pl.BlockSpec(shape, lambda i, _n=ndim: (0,) * _n)

    # ---------------- Pass 1: BN partial sums only ----------------
    w1_bytes = D * H1 * 2
    flops1 = 2 * b_pad * D * H1
    bytes1 = b_pad * D * 4 + w1_bytes + H1 * 4 + 2 * nb * H1 * 4
    vmem1 = int(1.4 * (2 * tb * D * 4 + 2 * w1_bytes + 2 * H1 * 4
                       + 2 * 2 * H1 * 4 + tb * H1 * 4)) + (2 << 20)
    vmem1 = min(max(vmem1, 8 << 20), 48 << 20)

    sums, sqs = pl.pallas_call(
        functools.partial(_bn_stats_kernel, batch=B, tb=tb),
        grid=(nb,),
        in_specs=[pl.BlockSpec((tb, D), lambda i: (i, 0)),
                  const((D, H1)),
                  const((1, H1))],
        out_specs=(pl.BlockSpec((1, 1, H1), lambda i: (i, 0, 0)),
                   pl.BlockSpec((1, 1, H1), lambda i: (i, 0, 0))),
        out_shape=(jax.ShapeDtypeStruct((nb, 1, H1), jnp.float32),
                   jax.ShapeDtypeStruct((nb, 1, H1), jnp.float32)),
        compiler_params=pltpu.CompilerParams(
            dimension_semantics=("parallel",), vmem_limit_bytes=vmem1),
        cost_estimate=pl.CostEstimate(flops=flops1, transcendentals=0,
                                      bytes_accessed=bytes1),
    )(x, w1, b1)

    # ---------------- Pass 2: recompute h1 + folded BN + MLP ----------------
    w_all_bytes = (D * H1 + H1 * H2 + H2 * H3 + H3 * OUT_PAD) * 2
    small_bytes = (4 * H1 + H2 + H3 + OUT_PAD + 2 * nb * H1) * 4
    flops2 = 2 * b_pad * (D * H1 + H1 * H2 + H2 * H3 + H3 * OUT_PAD)
    bytes2 = b_pad * D * 4 + w_all_bytes + small_bytes + b_pad * OUT_PAD * 4
    vmem2 = int(1.4 * (2 * tb * D * 4 + 2 * w_all_bytes + 2 * small_bytes
                       + 2 * tb * OUT_PAD * 4
                       + tb * (2 * H1 + H2 + H3) * 4)) + (2 << 20)
    vmem2 = min(max(vmem2, 8 << 20), 48 << 20)

    out_pad = pl.pallas_call(
        functools.partial(_mlp_kernel, batch=B),
        grid=(nb,),
        in_specs=[pl.BlockSpec((tb, D), lambda i: (i, 0)),
                  const((D, H1)), const((1, H1)),
                  const((nb, 1, H1)), const((nb, 1, H1)),
                  const((1, H1)), const((1, H1)),
                  const((H1, H2)), const((1, H2)),
                  const((H2, H3)), const((1, H3)),
                  const((H3, OUT_PAD)), const((1, OUT_PAD))],
        out_specs=pl.BlockSpec((tb, OUT_PAD), lambda i: (i, 0)),
        out_shape=jax.ShapeDtypeStruct((b_pad, OUT_PAD), jnp.float32),
        compiler_params=pltpu.CompilerParams(
            dimension_semantics=("parallel",), vmem_limit_bytes=vmem2),
        cost_estimate=pl.CostEstimate(flops=flops2, transcendentals=0,
                                      bytes_accessed=bytes2),
    )(x, w1, b1, sums, sqs, gamma, beta, w2, b2, w3, b3, w4, b4)

    # Cheap slice back to the module's (B, 40) contract; drop if a padded
    # (b_pad, 128) output is acceptable downstream.
    return out_pad[:B, :OUT]


# --------------------------------------------------------------------------- #
# Params & references
# --------------------------------------------------------------------------- #
def init_params(key, input_size):
    """PyTorch-style init U(-1/sqrt(fan_in), 1/sqrt(fan_in)); weights stored
    (in, out) = transposed PyTorch layout, f32 masters (cast to bf16 at call)."""
    dims = [(input_size, H1), (H1, H2), (H2, H3), (H3, OUT)]
    params = {}
    for idx, (fan_in, fan_out) in enumerate(dims, start=1):
        key, kw, kb = jax.random.split(key, 3)
        bound = 1.0 / jnp.sqrt(jnp.float32(fan_in))
        params[f"w{idx}"] = jax.random.uniform(
            kw, (fan_in, fan_out), jnp.float32, -bound, bound)
        params[f"b{idx}"] = jax.random.uniform(
            kb, (1, fan_out), jnp.float32, -bound, bound)
    params["gamma"] = jnp.ones((1, H1), jnp.float32)
    params["beta"] = jnp.zeros((1, H1), jnp.float32)
    return params


def reference_matched(x, params):
    """Mirrors the kernel's numerics: bf16 MXU operands / f32 accumulation,
    one-pass batch stats (E[x^2]-E[x]^2), BN folded to scale/shift."""
    def mm(a, w):
        return jnp.dot(a.astype(jnp.bfloat16), w.astype(jnp.bfloat16),
                       preferred_element_type=jnp.float32)
    B = x.shape[0]
    h1 = mm(x, params["w1"]) + params["b1"]
    mean = jnp.sum(h1, axis=0) / B
    var = jnp.maximum(jnp.sum(h1 * h1, axis=0) / B - mean * mean, 0.0)
    scale = params["gamma"] * lax.rsqrt(var + BN_EPS)[None, :]
    shift = params["beta"] - mean[None, :] * scale
    h1 = jnp.maximum(h1 * scale + shift, 0.0)
    h2 = jnp.maximum(mm(h1, params["w2"]) + params["b2"], 0.0)
    h3 = jnp.maximum(mm(h2, params["w3"]) + params["b3"], 0.0)
    return mm(h3, params["w4"]) + params["b4"]


def reference_f32(x, params):
    """Pure-f32 PyTorch train()-mode reference (loose check vs bf16 MXU path)."""
    h1 = x @ params["w1"] + params["b1"]
    mean = jnp.mean(h1, axis=0, keepdims=True)
    var = jnp.mean((h1 - mean) ** 2, axis=0, keepdims=True)
    h1 = (h1 - mean) / jnp.sqrt(var + BN_EPS) * params["gamma"] + params["beta"]
    h1 = jnp.maximum(h1, 0.0)
    h2 = jnp.maximum(h1 @ params["w2"] + params["b2"], 0.0)
    h3 = jnp.maximum(h2 @ params["w3"] + params["b3"], 0.0)
    return h3 @ params["w4"] + params["b4"]


if __name__ == "__main__":
    key = jax.random.PRNGKey(0)
    k_params, k_x = jax.random.split(key)

    INPUT_SIZE = 64
    params = init_params(k_params, INPUT_SIZE)

    # Batch 256 (splits into 2 tiles -> exercises the two-TC-friendly grid) and
    # batch 200 (ragged tile -> masked BN statistics path).
    for B in (256, 200):
        kx = jax.random.fold_in(k_x, B)
        x = jax.random.normal(kx, (B, INPUT_SIZE), jnp.float32)

        out = jax.block_until_ready(encoder_pet_forward(x, params))
        assert out.shape == (B, OUT), out.shape

        ref_m = reference_matched(x, params)
        assert jnp.allclose(out, ref_m, atol=5e-3, rtol=5e-3), \
            ("matched-ref mismatch", float(jnp.max(jnp.abs(out - ref_m))))

        ref32 = reference_f32(x, params)
        assert jnp.allclose(out, ref32, atol=1e-1, rtol=1e-1), \
            ("f32-ref mismatch", float(jnp.max(jnp.abs(out - ref32))))

    print("KERNEL_OK")
</pallas_src>

<mosaic_0001>
module attributes {stable_mosaic.version = 11 : i64} {
  func.func @_bn_stats_kernel(%arg0: i32, %arg1: memref<128x64xf32, #tpu.memory_space<vmem>>, %arg2: memref<64x512xbf16, #tpu.memory_space<vmem>>, %arg3: memref<1x512xf32, #tpu.memory_space<vmem>>, %arg4: memref<1x1x512xf32, #tpu.memory_space<vmem>>, %arg5: memref<1x1x512xf32, #tpu.memory_space<vmem>>) attributes {dimension_semantics = [#tpu.dimension_semantics<parallel>], iteration_bounds = array<i64: 2>, scalar_prefetch = 0 : i64, scratch_operands = 0 : i64, tpu.core_type = #tpu.core_type<tc>, window_params = [{transform_indices = @transform_0, window_bounds = array<i64: 128, 64>}, {pipeline_mode = #tpu.pipeline_mode<synchronous>, transform_indices = @transform_1, window_bounds = array<i64: 64, 512>}, {pipeline_mode = #tpu.pipeline_mode<synchronous>, transform_indices = @transform_2, window_bounds = array<i64: 1, 512>}, {transform_indices = @transform_3, window_bounds = array<i64: 1, 1, 512>}, {transform_indices = @transform_4, window_bounds = array<i64: 1, 1, 512>}]} {
    %c0 = arith.constant 0 : index
    %c0_0 = arith.constant 0 : index
    %0 = vector.load %arg1[%c0, %c0_0] : memref<128x64xf32, #tpu.memory_space<vmem>>, vector<128x64xf32>
    %1 = arith.truncf %0 : vector<128x64xf32> to vector<128x64xbf16>
    %c0_1 = arith.constant 0 : index
    %c0_2 = arith.constant 0 : index
    %2 = vector.load %arg2[%c0_1, %c0_2] : memref<64x512xbf16, #tpu.memory_space<vmem>>, vector<64x512xbf16>
    %cst = arith.constant dense<0.000000e+00> : vector<128x512xf32>
    %3 = tpu.matmul %1, %2, %cst {dimension_numbers = #tpu.dot_dimension_numbers<[1], [0], [0], [1], [0, 0, 1, 1], [], []>} : vector<128x64xbf16>, vector<64x512xbf16>, vector<128x512xf32> -> vector<128x512xf32>
    %c0_3 = arith.constant 0 : index
    %c0_4 = arith.constant 0 : index
    %4 = vector.load %arg3[%c0_3, %c0_4] : memref<1x512xf32, #tpu.memory_space<vmem>>, vector<1x512xf32>
    %5 = vector.broadcast %4 : vector<1x512xf32> to vector<128x512xf32>
    %6 = arith.addf %3, %5 : vector<128x512xf32>
    %c128_i32 = arith.constant 128 : i32
    %7 = arith.muli %arg0, %c128_i32 : i32
    %8 = tpu.iota {dimensions = array<i32: 0>} : vector<128x1xi32>
    %9 = vector.broadcast %7 : i32 to vector<128x1xi32>
    %10 = arith.addi %9, %8 : vector<128x1xi32>
    %c256_i32 = arith.constant 256 : i32
    %11 = vector.broadcast %c256_i32 : i32 to vector<128x1xi32>
    %12 = arith.cmpi slt, %10, %11 : vector<128x1xi32>
    %13 = arith.extui %12 : vector<128x1xi1> to vector<128x1xi32>
    %14 = arith.sitofp %13 : vector<128x1xi32> to vector<128x1xf32>
    %15 = vector.broadcast %14 : vector<128x1xf32> to vector<128x512xf32>
    %16 = arith.mulf %6, %15 : vector<128x512xf32>
    %cst_5 = arith.constant dense<0.000000e+00> : vector<512xf32>
    %17 = vector.multi_reduction <add>, %16, %cst_5 [0] : vector<128x512xf32> to vector<512xf32>
    %18 = vector.shape_cast %17 : vector<512xf32> to vector<1x512xf32>
    %19 = vector.shape_cast %18 : vector<1x512xf32> to vector<1x1x512xf32>
    %c0_6 = arith.constant 0 : index
    %c0_7 = arith.constant 0 : index
    %c0_8 = arith.constant 0 : index
    %20 = vector.load %arg4[%c0_6, %c0_7, %c0_8] : memref<1x1x512xf32, #tpu.memory_space<vmem>>, vector<1x1x512xf32>
    tpu.vector_store %arg4[%c0_6, %c0_7, %c0_8], %19 {strides = array<i32>} : memref<1x1x512xf32, #tpu.memory_space<vmem>>, vector<1x1x512xf32>,
    %21 = arith.mulf %16, %6 : vector<128x512xf32>
    %cst_9 = arith.constant dense<0.000000e+00> : vector<512xf32>
    %22 = vector.multi_reduction <add>, %21, %cst_9 [0] : vector<128x512xf32> to vector<512xf32>
    %23 = vector.shape_cast %22 : vector<512xf32> to vector<1x512xf32>
    %24 = vector.shape_cast %23 : vector<1x512xf32> to vector<1x1x512xf32>
    %c0_10 = arith.constant 0 : index
    %c0_11 = arith.constant 0 : index
    %c0_12 = arith.constant 0 : index
    %25 = vector.load %arg5[%c0_10, %c0_11, %c0_12] : memref<1x1x512xf32, #tpu.memory_space<vmem>>, vector<1x1x512xf32>
    tpu.vector_store %arg5[%c0_10, %c0_11, %c0_12], %24 {strides = array<i32>} : memref<1x1x512xf32, #tpu.memory_space<vmem>>, vector<1x1x512xf32>,
    return
  }
  func.func @transform_0(%arg0: i32) -> (i32, i32) {
    %c0_i32 = arith.constant 0 : i32
    %c0_i32_0 = arith.constant 0 : i32
    return %arg0, %c0_i32 : i32, i32
  }
  func.func @transform_1(%arg0: i32) -> (i32, i32) {
    %c0_i32 = arith.constant 0 : i32
    %c0_i32_0 = arith.constant 0 : i32
    %c0_i32_1 = arith.constant 0 : i32
    return %c0_i32, %c0_i32_0 : i32, i32
  }
  func.func @transform_2(%arg0: i32) -> (i32, i32) {
    %c0_i32 = arith.constant 0 : i32
    %c0_i32_0 = arith.constant 0 : i32
    %c0_i32_1 = arith.constant 0 : i32
    return %c0_i32, %c0_i32_0 : i32, i32
  }
  func.func @transform_3(%arg0: i32) -> (i32, i32, i32) {
    %c0_i32 = arith.constant 0 : i32
    %c0_i32_0 = arith.constant 0 : i32
    %c0_i32_1 = arith.constant 0 : i32
    return %arg0, %c0_i32, %c0_i32_0 : i32, i32, i32
  }
  func.func @transform_4(%arg0: i32) -> (i32, i32, i32) {
    %c0_i32 = arith.constant 0 : i32
    %c0_i32_0 = arith.constant 0 : i32
    %c0_i32_1 = arith.constant 0 : i32
    return %arg0, %c0_i32, %c0_i32_0 : i32, i32, i32
  }
}

module attributes {stable_mosaic.version = 11 : i64} {
  func.func @_mlp_kernel(%arg0: i32, %arg1: memref<128x64xf32, #tpu.memory_space<vmem>>, %arg2: memref<64x512xbf16, #tpu.memory_space<vmem>>, %arg3: memref<1x512xf32, #tpu.memory_space<vmem>>, %arg4: memref<2x1x512xf32, #tpu.memory_space<vmem>>, %arg5: memref<2x1x512xf32, #tpu.memory_space<vmem>>, %arg6: memref<1x512xf32, #tpu.memory_space<vmem>>, %arg7: memref<1x512xf32, #tpu.memory_space<vmem>>, %arg8: memref<512x256xbf16, #tpu.memory_space<vmem>>, %arg9: memref<1x256xf32, #tpu.memory_space<vmem>>, %arg10: memref<256x128xbf16, #tpu.memory_space<vmem>>, %arg11: memref<1x128xf32, #tpu.memory_space<vmem>>, %arg12: memref<128x128xbf16, #tpu.memory_space<vmem>>, %arg13: memref<1x128xf32, #tpu.memory_space<vmem>>, %arg14: memref<128x128xf32, #tpu.memory_space<vmem>>) attributes {dimension_semantics = [#tpu.dimension_semantics<parallel>], iteration_bounds = array<i64: 2>, scalar_prefetch = 0 : i64, scratch_operands = 0 : i64, tpu.core_type = #tpu.core_type<tc>, window_params = [{transform_indices = @transform_0, window_bounds = array<i64: 128, 64>}, {pipeline_mode = #tpu.pipeline_mode<synchronous>, transform_indices = @transform_1, window_bounds = array<i64: 64, 512>}, {pipeline_mode = #tpu.pipeline_mode<synchronous>, transform_indices = @transform_2, window_bounds = array<i64: 1, 512>}, {pipeline_mode = #tpu.pipeline_mode<synchronous>, transform_indices = @transform_3, window_bounds = array<i64: 2, 1, 512>}, {pipeline_mode = #tpu.pipeline_mode<synchronous>, transform_indices = @transform_4, window_bounds = array<i64: 2, 1, 512>}, {pipeline_mode = #tpu.pipeline_mode<synchronous>, transform_indices = @transform_5, window_bounds = array<i64: 1, 512>}, {pipeline_mode = #tpu.pipeline_mode<synchronous>, transform_indices = @transform_6, window_bounds = array<i64: 1, 512>}, {pipeline_mode = #tpu.pipeline_mode<synchronous>, transform_indices = @transform_7, window_bounds = array<i64: 512, 256>}, {pipeline_mode = #tpu.pipeline_mode<synchronous>, transform_indices = @transform_8, window_bounds = array<i64: 1, 256>}, {pipeline_mode = #tpu.pipeline_mode<synchronous>, transform_indices = @transform_9, window_bounds = array<i64: 256, 128>}, {pipeline_mode = #tpu.pipeline_mode<synchronous>, transform_indices = @transform_10, window_bounds = array<i64: 1, 128>}, {pipeline_mode = #tpu.pipeline_mode<synchronous>, transform_indices = @transform_11, window_bounds = array<i64: 128, 128>}, {pipeline_mode = #tpu.pipeline_mode<synchronous>, transform_indices = @transform_12, window_bounds = array<i64: 1, 128>}, {transform_indices = @transform_13, window_bounds = array<i64: 128, 128>}]} {
    %c0 = arith.constant 0 : index
    %c0_0 = arith.constant 0 : index
    %c0_1 = arith.constant 0 : index
    %0 = vector.load %arg4[%c0, %c0_0, %c0_1] : memref<2x1x512xf32, #tpu.memory_space<vmem>>, vector<2x1x512xf32>
    %cst = arith.constant dense<0.000000e+00> : vector<1x512xf32>
    %1 = vector.multi_reduction <add>, %0, %cst [0] : vector<2x1x512xf32> to vector<1x512xf32>
    %c0_2 = arith.constant 0 : index
    %c0_3 = arith.constant 0 : index
    %c0_4 = arith.constant 0 : index
    %2 = vector.load %arg5[%c0_2, %c0_3, %c0_4] : memref<2x1x512xf32, #tpu.memory_space<vmem>>, vector<2x1x512xf32>
    %cst_5 = arith.constant dense<0.000000e+00> : vector<1x512xf32>
    %3 = vector.multi_reduction <add>, %2, %cst_5 [0] : vector<2x1x512xf32> to vector<1x512xf32>
    %cst_6 = arith.constant 3.906250e-03 : f32
    %4 = vector.broadcast %cst_6 : f32 to vector<1x512xf32>
    %5 = arith.mulf %1, %4 : vector<1x512xf32>
    %cst_7 = arith.constant 3.906250e-03 : f32
    %6 = vector.broadcast %cst_7 : f32 to vector<1x512xf32>
    %7 = arith.mulf %3, %6 : vector<1x512xf32>
    %8 = arith.mulf %5, %5 : vector<1x512xf32>
    %9 = arith.subf %7, %8 : vector<1x512xf32>
    %cst_8 = arith.constant 0.000000e+00 : f32
    %10 = vector.broadcast %cst_8 : f32 to vector<1x512xf32>
    %11 = arith.maximumf %9, %10 : vector<1x512xf32>
    %c0_9 = arith.constant 0 : index
    %c0_10 = arith.constant 0 : index
    %12 = vector.load %arg6[%c0_9, %c0_10] : memref<1x512xf32, #tpu.memory_space<vmem>>, vector<1x512xf32>
    %cst_11 = arith.constant 9.99999974E-6 : f32
    %13 = vector.broadcast %cst_11 : f32 to vector<1x512xf32>
    %14 = arith.addf %11, %13 : vector<1x512xf32>
    %15 = math.rsqrt %14 : vector<1x512xf32>
    %16 = arith.mulf %12, %15 : vector<1x512xf32>
    %c0_12 = arith.constant 0 : index
    %c0_13 = arith.constant 0 : index
    %17 = vector.load %arg7[%c0_12, %c0_13] : memref<1x512xf32, #tpu.memory_space<vmem>>, vector<1x512xf32>
    %18 = arith.mulf %5, %16 : vector<1x512xf32>
    %19 = arith.subf %17, %18 : vector<1x512xf32>
    %c0_14 = arith.constant 0 : index
    %c0_15 = arith.constant 0 : index
    %20 = vector.load %arg1[%c0_14, %c0_15] : memref<128x64xf32, #tpu.memory_space<vmem>>, vector<128x64xf32>
    %21 = arith.truncf %20 : vector<128x64xf32> to vector<128x64xbf16>
    %c0_16 = arith.constant 0 : index
    %c0_17 = arith.constant 0 : index
    %22 = vector.load %arg2[%c0_16, %c0_17] : memref<64x512xbf16, #tpu.memory_space<vmem>>, vector<64x512xbf16>
    %cst_18 = arith.constant dense<0.000000e+00> : vector<128x512xf32>
    %23 = tpu.matmul %21, %22, %cst_18 {dimension_numbers = #tpu.dot_dimension_numbers<[1], [0], [0], [1], [0, 0, 1, 1], [], []>} : vector<128x64xbf16>, vector<64x512xbf16>, vector<128x512xf32> -> vector<128x512xf32>
    %c0_19 = arith.constant 0 : index
    %c0_20 = arith.constant 0 : index
    %24 = vector.load %arg3[%c0_19, %c0_20] : memref<1x512xf32, #tpu.memory_space<vmem>>, vector<1x512xf32>
    %25 = vector.broadcast %24 : vector<1x512xf32> to vector<128x512xf32>
    %26 = arith.addf %23, %25 : vector<128x512xf32>
    %27 = vector.broadcast %16 : vector<1x512xf32> to vector<128x512xf32>
    %28 = arith.mulf %26, %27 : vector<128x512xf32>
    %29 = vector.broadcast %19 : vector<1x512xf32> to vector<128x512xf32>
    %30 = arith.addf %28, %29 : vector<128x512xf32>
    %cst_21 = arith.constant 0.000000e+00 : f32
    %31 = vector.broadcast %cst_21 : f32 to vector<128x512xf32>
    %32 = arith.maximumf %30, %31 : vector<128x512xf32>
    %33 = arith.truncf %32 : vector<128x512xf32> to vector<128x512xbf16>
    %c0_22 = arith.constant 0 : index
    %c0_23 = arith.constant 0 : index
    %34 = vector.load %arg8[%c0_22, %c0_23] : memref<512x256xbf16, #tpu.memory_space<vmem>>, vector<512x256xbf16>
    %cst_24 = arith.constant dense<0.000000e+00> : vector<128x256xf32>
    %35 = tpu.matmul %33, %34, %cst_24 {dimension_numbers = #tpu.dot_dimension_numbers<[1], [0], [0], [1], [0, 0, 1, 1], [], []>} : vector<128x512xbf16>, vector<512x256xbf16>, vector<128x256xf32> -> vector<128x256xf32>
    %c0_25 = arith.constant 0 : index
    %c0_26 = arith.constant 0 : index
    %36 = vector.load %arg9[%c0_25, %c0_26] : memref<1x256xf32, #tpu.memory_space<vmem>>, vector<1x256xf32>
    %37 = vector.broadcast %36 : vector<1x256xf32> to vector<128x256xf32>
    %38 = arith.addf %35, %37 : vector<128x256xf32>
    %cst_27 = arith.constant 0.000000e+00 : f32
    %39 = vector.broadcast %cst_27 : f32 to vector<128x256xf32>
    %40 = arith.maximumf %38, %39 : vector<128x256xf32>
    %41 = arith.truncf %40 : vector<128x256xf32> to vector<128x256xbf16>
    %c0_28 = arith.constant 0 : index
    %c0_29 = arith.constant 0 : index
    %42 = vector.load %arg10[%c0_28, %c0_29] : memref<256x128xbf16, #tpu.memory_space<vmem>>, vector<256x128xbf16>
    %cst_30 = arith.constant dense<0.000000e+00> : vector<128x128xf32>
    %43 = tpu.matmul %41, %42, %cst_30 {dimension_numbers = #tpu.dot_dimension_numbers<[1], [0], [0], [1], [0, 0, 1, 1], [], []>} : vector<128x256xbf16>, vector<256x128xbf16>, vector<128x128xf32> -> vector<128x128xf32>
    %c0_31 = arith.constant 0 : index
    %c0_32 = arith.constant 0 : index
    %44 = vector.load %arg11[%c0_31, %c0_32] : memref<1x128xf32, #tpu.memory_space<vmem>>, vector<1x128xf32>
    %45 = vector.broadcast %44 : vector<1x128xf32> to vector<128x128xf32>
    %46 = arith.addf %43, %45 : vector<128x128xf32>
    %cst_33 = arith.constant 0.000000e+00 : f32
    %47 = vector.broadcast %cst_33 : f32 to vector<128x128xf32>
    %48 = arith.maximumf %46, %47 : vector<128x128xf32>
    %49 = arith.truncf %48 : vector<128x128xf32> to vector<128x128xbf16>
    %c0_34 = arith.constant 0 : index
    %c0_35 = arith.constant 0 : index
    %50 = vector.load %arg12[%c0_34, %c0_35] : memref<128x128xbf16, #tpu.memory_space<vmem>>, vector<128x128xbf16>
    %cst_36 = arith.constant dense<0.000000e+00> : vector<128x128xf32>
    %51 = tpu.matmul %49, %50, %cst_36 {dimension_numbers = #tpu.dot_dimension_numbers<[1], [0], [0], [1], [0, 0, 1, 1], [], []>} : vector<128x128xbf16>, vector<128x128xbf16>, vector<128x128xf32> -> vector<128x128xf32>
    %c0_37 = arith.constant 0 : index
    %c0_38 = arith.constant 0 : index
    %52 = vector.load %arg13[%c0_37, %c0_38] : memref<1x128xf32, #tpu.memory_space<vmem>>, vector<1x128xf32>
    %53 = vector.broadcast %52 : vector<1x128xf32> to vector<128x128xf32>
    %54 = arith.addf %51, %53 : vector<128x128xf32>
    %c0_39 = arith.constant 0 : index
    %c0_40 = arith.constant 0 : index
    %55 = vector.load %arg14[%c0_39, %c0_40] : memref<128x128xf32, #tpu.memory_space<vmem>>, vector<128x128xf32>
    tpu.vector_store %arg14[%c0_39, %c0_40], %54 {strides = array<i32>} : memref<128x128xf32, #tpu.memory_space<vmem>>, vector<128x128xf32>,
    return
  }
  func.func @transform_0(%arg0: i32) -> (i32, i32) {
    %c0_i32 = arith.constant 0 : i32
    %c0_i32_0 = arith.constant 0 : i32
    return %arg0, %c0_i32 : i32, i32
  }
  func.func @transform_1(%arg0: i32) -> (i32, i32) {
    %c0_i32 = arith.constant 0 : i32
    %c0_i32_0 = arith.constant 0 : i32
    %c0_i32_1 = arith.constant 0 : i32
    return %c0_i32, %c0_i32_0 : i32, i32
  }
  func.func @transform_2(%arg0: i32) -> (i32, i32) {
    %c0_i32 = arith.constant 0 : i32
    %c0_i32_0 = arith.constant 0 : i32
    %c0_i32_1 = arith.constant 0 : i32
    return %c0_i32, %c0_i32_0 : i32, i32
  }
  func.func @transform_3(%arg0: i32) -> (i32, i32, i32) {
    %c0_i32 = arith.constant 0 : i32
    %c0_i32_0 = arith.constant 0 : i32
    %c0_i32_1 = arith.constant 0 : i32
    %c0_i32_2 = arith.constant 0 : i32
    return %c0_i32, %c0_i32_0, %c0_i32_1 : i32, i32, i32
  }
  func.func @transform_4(%arg0: i32) -> (i32, i32, i32) {
    %c0_i32 = arith.constant 0 : i32
    %c0_i32_0 = arith.constant 0 : i32
    %c0_i32_1 = arith.constant 0 : i32
    %c0_i32_2 = arith.constant 0 : i32
    return %c0_i32, %c0_i32_0, %c0_i32_1 : i32, i32, i32
  }
  func.func @transform_5(%arg0: i32) -> (i32, i32) {
    %c0_i32 = arith.constant 0 : i32
    %c0_i32_0 = arith.constant 0 : i32
    %c0_i32_1 = arith.constant 0 : i32
    return %c0_i32, %c0_i32_0 : i32, i32
  }
  func.func @transform_6(%arg0: i32) -> (i32, i32) {
    %c0_i32 = arith.constant 0 : i32
    %c0_i32_0 = arith.constant 0 : i32
    %c0_i32_1 = arith.constant 0 : i32
    return %c0_i32, %c0_i32_0 : i32, i32
  }
  func.func @transform_7(%arg0: i32) -> (i32, i32) {
    %c0_i32 = arith.constant 0 : i32
    %c0_i32_0 = arith.constant 0 : i32
    %c0_i32_1 = arith.constant 0 : i32
    return %c0_i32, %c0_i32_0 : i32, i32
  }
  func.func @transform_8(%arg0: i32) -> (i32, i32) {
    %c0_i32 = arith.constant 0 : i32
    %c0_i32_0 = arith.constant 0 : i32
    %c0_i32_1 = arith.constant 0 : i32
    return %c0_i32, %c0_i32_0 : i32, i32
  }
  func.func @transform_9(%arg0: i32) -> (i32, i32) {
    %c0_i32 = arith.constant 0 : i32
    %c0_i32_0 = arith.constant 0 : i32
    %c0_i32_1 = arith.constant 0 : i32
    return %c0_i32, %c0_i32_0 : i32, i32
  }
  func.func @transform_10(%arg0: i32) -> (i32, i32) {
    %c0_i32 = arith.constant 0 : i32
    %c0_i32_0 = arith.constant 0 : i32
    %c0_i32_1 = arith.constant 0 : i32
    return %c0_i32, %c0_i32_0 : i32, i32
  }
  func.func @transform_11(%arg0: i32) -> (i32, i32) {
    %c0_i32 = arith.constant 0 : i32
    %c0_i32_0 = arith.constant 0 : i32
    %c0_i32_1 = arith.constant 0 : i32
    return %c0_i32, %c0_i32_0 : i32, i32
  }
  func.func @transform_12(%arg0: i32) -> (i32, i32) {
    %c0_i32 = arith.constant 0 : i32
    %c0_i32_0 = arith.constant 0 : i32
    %c0_i32_1 = arith.constant 0 : i32
    return %c0_i32, %c0_i32_0 : i32, i32
  }
  func.func @transform_13(%arg0: i32) -> (i32, i32) {
    %c0_i32 = arith.constant 0 : i32
    %c0_i32_0 = arith.constant 0 : i32
    return %arg0, %c0_i32 : i32, i32
  }
}

</mosaic_0001>

<llo_original>
// kernel: encoder_pet_forward.2
$region0: #{encoder_pet_forward.2}
  #allocation0 [shape = 'u32[]', space=smem, size = 0x4, offset = 0x4, fixed_abs, tag = 'smem constant byte address 0x4 - core index']
  #allocation1 [shape = 'u32[144,128]{1,0:T(1,128)}', space=vmem, size = 0x12000, scoped, tag = 'internal scratch']
  %s0 = inlined_call_operand.vmem [shape: f32[256,64], index: 0, kind: input, shape index: {}]
  %s1 = inlined_call_operand.vmem [shape: bf16[64,512], index: 1, kind: input, shape index: {}]
  %s2 = inlined_call_operand.vmem [shape: f32[1,512], index: 2, kind: input, shape index: {}]
  %s3 = inlined_call_operand.vmem [shape: f32[2,1,512], index: 3, kind: output, shape index: {0}]
  %s4 = inlined_call_operand.vmem [shape: f32[2,1,512], index: 4, kind: output, shape index: {1}]
  %5 = xla_tuple %s3, %s4
  %s6 = sld [smem:[#allocation0]]
  $region53: #{encoder_pet_forward.2} parent=0
    _
  %s8 = ssub.s32 1, %s6
  %s9 = scalar_select 0, %s8, %s6
  loop: start=0, step=1, limit=4
  $region2: #{encoder_pet_forward.2} parent=0 // loop_pre_header
    _
  $region3: #{encoder_pet_forward.2} parent=0 // loop_header
    %s11 = sphi 0, %s15
    %p12 = scmp.ge.s32.totalorder %s11, 4
    %s21 = sphi 0, %s23
    %s24 = sphi 0, %s21
    %s25 = sphi 0, %s24
    %s41 = sphi 0, %s25
    %s45 = sphi 0, %s45
    %s47 = sphi 0, %s45
    %s48 = sphi 0, %s47
    %s62 = sphi 0, %s48
    %s66 = sphi 0, %s66
    %s68 = sphi 0, %s66
    %s69 = sphi 0, %s68
    %s83 = sphi 0, %s69
    %s89 = sphi 0, %s91
    %s92 = sphi 0, %s89
    %s93 = sphi 0, %s92
    %s109 = sphi 0, %s93
    %s115 = sphi 0, %s117
    %s118 = sphi 0, %s115
    %s119 = sphi 0, %s118
    %s135 = sphi 0, %s119
  $region4: #{encoder_pet_forward.2} parent=0 // loop_header_branch
    %14 = sbr.rel (%p12) target = $region8
  $region5: #{encoder_pet_forward.2} parent=0 // loop_body
    %s16 = ssub.s32 %s11, 1
    %s17 = ssub.s32 %s11, 2
    %s18 = sadd.s32 %s11, 1
    %s19 = ssub.s32 %s11, %s18
    %p20 = scmp.eq.s32.totalorder %s19, 0
    %s22 = sadd.s32 %s21, 1
    %s23 = scalar_select %p20, %s21, %s22
    %p26 = pneg %p20
    %p27 = scmp.eq.s32.totalorder %s11, 1
    %p28 = por %p26, %p27
    %p29 = scmp.ne.s32.totalorder %s21, %s24
    %p30 = scmp.eq.s32.totalorder %s11, 0
    %p31 = por %p29, %p30
    %p32 = scmp.ne.s32.totalorder %s21, %s24
    %p33 = scmp.eq.s32.totalorder %s16, 1
    %p34 = por %p32, %p33
    %p35 = scmp.ne.s32.totalorder %s24, %s25
    %p36 = scmp.eq.s32.totalorder %s16, 0
    %p37 = por %p35, %p36
    %p38 = scmp.ne.s32.totalorder %s24, %s25
    %p39 = scmp.eq.s32.totalorder %s17, 1
    %p40 = por %p38, %p39
    %p42 = scmp.ne.s32.totalorder %s25, %s41
    %p43 = scmp.eq.s32.totalorder %s17, 0
    %p44 = por %p42, %p43
    %s46 = sadd.s32 %s45, 1
    %p49 = scmp.eq.s32.totalorder %s11, 1
    %p50 = scmp.ne.s32.totalorder %s45, %s47
    %p51 = scmp.eq.s32.totalorder %s11, 0
    %p52 = por %p50, %p51
    %p53 = scmp.ne.s32.totalorder %s45, %s47
    %p54 = scmp.eq.s32.totalorder %s16, 1
    %p55 = por %p53, %p54
    %p56 = scmp.ne.s32.totalorder %s47, %s48
    %p57 = scmp.eq.s32.totalorder %s16, 0
    %p58 = por %p56, %p57
    %p59 = scmp.ne.s32.totalorder %s47, %s48
    %p60 = scmp.eq.s32.totalorder %s17, 1
    %p61 = por %p59, %p60
    %p63 = scmp.ne.s32.totalorder %s48, %s62
    %p64 = scmp.eq.s32.totalorder %s17, 0
    %p65 = por %p63, %p64
    %s67 = sadd.s32 %s66, 1
    %p70 = scmp.eq.s32.totalorder %s11, 1
    %p71 = scmp.ne.s32.totalorder %s66, %s68
    %p72 = scmp.eq.s32.totalorder %s11, 0
    %p73 = por %p71, %p72
    %p74 = scmp.ne.s32.totalorder %s66, %s68
    %p75 = scmp.eq.s32.totalorder %s16, 1
    %p76 = por %p74, %p75
    %p77 = scmp.ne.s32.totalorder %s68, %s69
    %p78 = scmp.eq.s32.totalorder %s16, 0
    %p79 = por %p77, %p78
    %p80 = scmp.ne.s32.totalorder %s68, %s69
    %p81 = scmp.eq.s32.totalorder %s17, 1
    %p82 = por %p80, %p81
    %p84 = scmp.ne.s32.totalorder %s69, %s83
    %p85 = scmp.eq.s32.totalorder %s17, 0
    %p86 = por %p84, %p85
    %s87 = ssub.s32 %s11, %s18
    %p88 = scmp.eq.s32.totalorder %s87, 0
    %s90 = sadd.s32 %s89, 1
    %s91 = scalar_select %p88, %s89, %s90
    %p94 = pneg %p88
    %p95 = scmp.eq.s32.totalorder %s11, 1
    %p96 = por %p94, %p95
    %p97 = scmp.ne.s32.totalorder %s89, %s92
    %p98 = scmp.eq.s32.totalorder %s11, 0
    %p99 = por %p97, %p98
    %p100 = scmp.ne.s32.totalorder %s89, %s92
    %p101 = scmp.eq.s32.totalorder %s16, 1
    %p102 = por %p100, %p101
    %p103 = scmp.ne.s32.totalorder %s92, %s93
    %p104 = scmp.eq.s32.totalorder %s16, 0
    %p105 = por %p103, %p104
    %p106 = scmp.ne.s32.totalorder %s92, %s93
    %p107 = scmp.eq.s32.totalorder %s17, 1
    %p108 = por %p106, %p107
    %p110 = scmp.ne.s32.totalorder %s93, %s109
    %p111 = scmp.eq.s32.totalorder %s17, 0
    %p112 = por %p110, %p111
    %s113 = ssub.s32 %s11, %s18
    %p114 = scmp.eq.s32.totalorder %s113, 0
    %s116 = sadd.s32 %s115, 1
    %s117 = scalar_select %p114, %s115, %s116
    %p120 = pneg %p114
    %p121 = scmp.eq.s32.totalorder %s11, 1
    %p122 = por %p120, %p121
    %p123 = scmp.ne.s32.totalorder %s115, %s118
    %p124 = scmp.eq.s32.totalorder %s11, 0
    %p125 = por %p123, %p124
    %p126 = scmp.ne.s32.totalorder %s115, %s118
    %p127 = scmp.eq.s32.totalorder %s16, 1
    %p128 = por %p126, %p127
    %p129 = scmp.ne.s32.totalorder %s118, %s119
    %p130 = scmp.eq.s32.totalorder %s16, 0
    %p131 = por %p129, %p130
    %p132 = scmp.ne.s32.totalorder %s118, %s119
    %p133 = scmp.eq.s32.totalorder %s17, 1
    %p134 = por %p132, %p133
    %p136 = scmp.ne.s32.totalorder %s119, %s135
    %p137 = scmp.eq.s32.totalorder %s17, 0
    %p138 = por %p136, %p137
    %p139 = scmp.le.s32.totalorder 1, %s11
    %p140 = scmp.lt.s32.totalorder %s11, 3
    %p141 = pnand %p139, %p140
    %p142 = pneg %p141
    // Predicated region
    $region9: #{encoder_pet_forward.2} parent=5 // pred_check
      _
    $region10: #{encoder_pet_forward.2} parent=5 // pred_check_branch
      %144 = sbr.rel (%p141) target = $region12
    $region11: #{encoder_pet_forward.2} parent=5 // pred_region
      %s145 = ssub.s32 %s11, 1
      // Predicated region
      $region13: #{encoder_pet_forward.2} parent=11 // pred_check
        %p146 = pneg %p58
      $region14: #{encoder_pet_forward.2} parent=11 // pred_check_branch
        %148 = sbr.rel (%p146) target = $region16
      $region15: #{encoder_pet_forward.2} parent=11 // pred_region
        _
      $region16: #{encoder_pet_forward.2} parent=11 // pred_fallthru
        _
      // Predicated region
      $region17: #{encoder_pet_forward.2} parent=11 // pred_check
        %p149 = pneg %p79
      $region18: #{encoder_pet_forward.2} parent=11 // pred_check_branch
        %151 = sbr.rel (%p149) target = $region20
      $region19: #{encoder_pet_forward.2} parent=11 // pred_region
        _
      $region20: #{encoder_pet_forward.2} parent=11 // pred_fallthru
        _
    $region12: #{encoder_pet_forward.2} parent=5 // pred_fallthru
      _
    %p152 = scmp.lt.s32.totalorder %s11, 2
    // Predicated region
    $region21: #{encoder_pet_forward.2} parent=5 // pred_check
      %p153 = pneg %p152
    $region22: #{encoder_pet_forward.2} parent=5 // pred_check_branch
      %155 = sbr.rel (%p153) target = $region24
    $region23: #{encoder_pet_forward.2} parent=5 // pred_region
      // Predicated region
      $region25: #{encoder_pet_forward.2} parent=23 // pred_check
        %p156 = pneg %p31
      $region26: #{encoder_pet_forward.2} parent=23 // pred_check_branch
        %158 = sbr.rel (%p156) target = $region28
      $region27: #{encoder_pet_forward.2} parent=23 // pred_region
        %s159 = smul.u32 16, %s11
        %p160 = scmp.lt.s32.totalorder %s159, 31
        %s161 = scalar_select %p160, %s159, 31
        %s162 = smul.addr %s161, 8
        %s163 = scalar_lea.vmem %s0, %s162
        %s164 = smul.u32 16, %s11
      $region28: #{encoder_pet_forward.2} parent=23 // pred_fallthru
        _
    $region24: #{encoder_pet_forward.2} parent=5 // pred_fallthru
      _
    %p165 = scmp.le.s32.totalorder 1, %s11
    %p166 = scmp.lt.s32.totalorder %s11, 3
    %p167 = pnand %p165, %p166
    %p168 = pneg %p167
    // Predicated region
    $region29: #{encoder_pet_forward.2} parent=5 // pred_check
      _
    $region30: #{encoder_pet_forward.2} parent=5 // pred_check_branch
      %170 = sbr.rel (%p167) target = $region32
    $region31: #{encoder_pet_forward.2} parent=5 // pred_region
      %s171 = ssub.s32 %s11, 1
      %s172 = smul.u32 16, %s16
      %p173 = scmp.lt.s32.totalorder %s172, 31
      %s174 = scalar_select %p173, %s172, 31
      %s175 = smul.addr %s174, 8
      %s176 = scalar_lea.vmem %s0, %s175
      %p177 = pneg %p37
      %p178 = pneg %p34
      %p179 = pneg %p58
      %p180 = pneg %p55
      %p181 = pneg %p79
      %p182 = pneg %p76
      %p183 = pneg %p105
      %p184 = pneg %p102
      %p185 = scmp.lt.s32.totalorder %s16, 1
      %s186 = scalar_select %p185, %s16, 1
      %s187 = smul.addr %s186, 4
      %s188 = scalar_lea.vmem %s3, %s187
      %p189 = pneg %p131
      %p190 = pneg %p128
      %p191 = scmp.lt.s32.totalorder %s16, 1
      %s192 = scalar_select %p191, %s16, 1
      %s193 = smul.addr %s192, 4
      %s194 = scalar_lea.vmem %s4, %s193
      %s195 = smul.u32 16, %s16
      %p196 = scmp.lt.s32.totalorder %s195, 31
      %s197 = scalar_select %p196, %s195, 31
      %s198 = smul.addr %s197, 8
      %s199 = scalar_lea.vmem %s0, %s198
      %s200 = smul.u32 16, %s16
      %p201 = scmp.lt.s32.totalorder %s16, 1
      %s202 = scalar_select %p201, %s16, 1
      %s203 = smul.addr %s202, 4
      %s204 = scalar_lea.vmem %s3, %s203
      %p205 = scmp.lt.s32.totalorder %s16, 1
      %s206 = scalar_select %p205, %s16, 1
      %s207 = smul.addr %s206, 4
      %s208 = scalar_lea.vmem %s4, %s207
      %v210 = vld [vmem:[%s199] sm:$0xff]
      %v211 = vld [vmem:[%s199 + $0x8] sm:$0xff]
      %v212 = vld [vmem:[%s199 + $0x10] sm:$0xff]
      %v213 = vld [vmem:[%s199 + $0x18] sm:$0xff]
      %v214 = vld [vmem:[%s199 + $0x20] sm:$0xff]
      %v215 = vld [vmem:[%s199 + $0x28] sm:$0xff]
      %v216 = vld [vmem:[%s199 + $0x30] sm:$0xff]
      %v217 = vld [vmem:[%s199 + $0x38] sm:$0xff]
      %v218 = vld [vmem:[%s199 + $0x40] sm:$0xff]
      %v219 = vld [vmem:[%s199 + $0x48] sm:$0xff]
      %v220 = vld [vmem:[%s199 + $0x50] sm:$0xff]
      %v221 = vld [vmem:[%s199 + $0x58] sm:$0xff]
      %v222 = vld [vmem:[%s199 + $0x60] sm:$0xff]
      %v223 = vld [vmem:[%s199 + $0x68] sm:$0xff]
      %v224 = vld [vmem:[%s199 + $0x70] sm:$0xff]
      %v225 = vld [vmem:[%s199 + $0x78] sm:$0xff]
      %v226 = vpack.c.bf16 %v211, %v210
      %v227 = vpack.c.bf16 %v213, %v212
      %v228 = vpack.c.bf16 %v215, %v214
      %v229 = vpack.c.bf16 %v217, %v216
      %v230 = vpack.c.bf16 %v219, %v218
      %v231 = vpack.c.bf16 %v221, %v220
      %v232 = vpack.c.bf16 %v223, %v222
      %v233 = vpack.c.bf16 %v225, %v224
      %v234 = vld [vmem:[%s1] sm:$0xff]
      %v235 = vld [vmem:[%s1 + $0x8] sm:$0xff]
      %v236 = vld [vmem:[%s1 + $0x10] sm:$0xff]
      %v237 = vld [vmem:[%s1 + $0x18] sm:$0xff]
      %v238 = vld [vmem:[%s1 + $0x20] sm:$0xff]
      %v239 = vld [vmem:[%s1 + $0x28] sm:$0xff]
      %v240 = vld [vmem:[%s1 + $0x30] sm:$0xff]
      %v241 = vld [vmem:[%s1 + $0x38] sm:$0xff]
      %v242 = vld [vmem:[%s1 + $0x40] sm:$0xff]
      %v243 = vld [vmem:[%s1 + $0x48] sm:$0xff]
      %v244 = vld [vmem:[%s1 + $0x50] sm:$0xff]
      %v245 = vld [vmem:[%s1 + $0x58] sm:$0xff]
      %v246 = vld [vmem:[%s1 + $0x60] sm:$0xff]
      %v247 = vld [vmem:[%s1 + $0x68] sm:$0xff]
      %v248 = vld [vmem:[%s1 + $0x70] sm:$0xff]
      %v249 = vld [vmem:[%s1 + $0x78] sm:$0xff]
      %v250 = vld [vmem:[%s2] sm:$0xf]
      %v252 = vlaneseq
      %v253 = vshrl.u32 %v252, 7
      %v254 = vsub.s32 0, %v253
      %v255 = vrot.slane %v250, %v254
      %v256 = vlaneseq
      %v257 = vshrl.u32 %v256, 7
      %v258 = vsub.s32 1, %v257
      %v259 = vrot.slane %v250, %v258
      %v260 = vlaneseq
      %v261 = vshrl.u32 %v260, 7
      %v262 = vsub.s32 2, %v261
      %v263 = vrot.slane %v250, %v262
      %v264 = vlaneseq
      %v265 = vshrl.u32 %v264, 7
      %v266 = vsub.s32 3, %v265
      %v267 = vrot.slane %v250, %v266
      %v288 = vunpack.c.l.b16 %v234
      %v289 = vunpack.c.h.b16 %v234
      %v290 = vunpack.c.l.b16 %v235
      %v291 = vunpack.c.h.b16 %v235
      %v292 = vunpack.c.l.b16 %v236
      %v293 = vunpack.c.h.b16 %v236
      %v294 = vunpack.c.l.b16 %v237
      %v295 = vunpack.c.h.b16 %v237
      %v296 = vunpack.c.l.b16 %v238
      %v297 = vunpack.c.h.b16 %v238
      %v298 = vunpack.c.l.b16 %v239
      %v299 = vunpack.c.h.b16 %v239
      %v300 = vunpack.c.l.b16 %v240
      %v301 = vunpack.c.h.b16 %v240
      %v302 = vunpack.c.l.b16 %v241
      %v303 = vunpack.c.h.b16 %v241
      %v304 = vunpack.c.l.b16 %v242
      %v305 = vunpack.c.h.b16 %v242
      %v306 = vunpack.c.l.b16 %v243
      %v307 = vunpack.c.h.b16 %v243
      %v308 = vunpack.c.l.b16 %v244
      %v309 = vunpack.c.h.b16 %v244
      %v310 = vunpack.c.l.b16 %v245
      %v311 = vunpack.c.h.b16 %v245
      %v312 = vunpack.c.l.b16 %v246
      %v313 = vunpack.c.h.b16 %v246
      %v314 = vunpack.c.l.b16 %v247
      %v315 = vunpack.c.h.b16 %v247
      %v316 = vunpack.c.l.b16 %v248
      %v317 = vunpack.c.h.b16 %v248
      %v318 = vunpack.c.l.b16 %v249
      %v319 = vunpack.c.h.b16 %v249
      %v320 = vpack.c.b16 %v292, %v288
      %v321 = vpack.c.b16 %v293, %v289
      %v322 = vpack.c.b16 %v294, %v290
      %v323 = vpack.c.b16 %v295, %v291
      %v324 = vpack.c.b16 %v300, %v296
      %v325 = vpack.c.b16 %v301, %v297
      %v326 = vpack.c.b16 %v302, %v298
      %v327 = vpack.c.b16 %v303, %v299
      %v328 = vpack.c.b16 %v308, %v304
      %v329 = vpack.c.b16 %v309, %v305
      %v330 = vpack.c.b16 %v310, %v306
      %v331 = vpack.c.b16 %v311, %v307
      %v332 = vpack.c.b16 %v316, %v312
      %v333 = vpack.c.b16 %v317, %v313
      %v334 = vpack.c.b16 %v318, %v314
      %v335 = vpack.c.b16 %v319, %v315
      %vm352 = vcmask 523264
      %v354 = vsel %vm352, %v226, 0
      %v357 = vsel %vm352, %v227, 0
      %v360 = vsel %vm352, %v228, 0
      %v363 = vsel %vm352, %v229, 0
      %v366 = vsel %vm352, %v230, 0
      %v369 = vsel %vm352, %v231, 0
      %v372 = vsel %vm352, %v232, 0
      %v375 = vsel %vm352, %v233, 0
      %377 = vmatprep.subr.bf16.mxu0 %v321
      %378 = vmatpush1.bf16.msra.mxu0 %v320
      %379 = vmatprep.subr.bf16.mxu0 %v325
      %380 = vmatpush1.bf16.msra.mxu0 %v324
      %381 = vmatprep.subr.bf16.mxu0 %v329
      %382 = vmatpush1.bf16.msra.mxu0 %v328
      %383 = vmatprep.subr.bf16.mxu0 %v333
      %384 = vmatpush1.bf16.msra.mxu0 %v332
      %385 = vmatprep.subr.bf16.mxu0 0
      %386 = vmatpush1.bf16.msra.mxu0 0
      %387 = vmatprep.subr.bf16.mxu0 0
      %388 = vmatpush1.bf16.msra.mxu0 0
      %389 = vmatprep.subr.bf16.mxu0 0
      %390 = vmatpush1.bf16.msra.mxu0 0
      %391 = vmatprep.subr.bf16.mxu0 0
      %392 = vmatpush1.bf16.msra.mxu0 0
      %393 = vmatprep.subr.bf16.mxu0 0
      %394 = vmatpush1.bf16.msra.mxu0 0
      %395 = vmatprep.subr.bf16.mxu0 0
      %396 = vmatpush1.bf16.msra.mxu0 0
      %397 = vmatprep.subr.bf16.mxu0 0
      %398 = vmatpush1.bf16.msra.mxu0 0
      %399 = vmatprep.subr.bf16.mxu0 0
      %400 = vmatpush1.bf16.msra.mxu0 0
      %401 = vmatprep.subr.bf16.mxu0 0
      %402 = vmatpush1.bf16.msra.mxu0 0
      %403 = vmatprep.subr.bf16.mxu0 0
      %404 = vmatpush1.bf16.msra.mxu0 0
      %405 = vmatprep.subr.bf16.mxu0 0
      %406 = vmatpush1.bf16.msra.mxu0 0
      %407 = vmatprep.subr.bf16.mxu0 0
      %408 = vmatpush1.bf16.msra.mxu0 0
      %409 = vmatprep.mubr.bf16.mxu0 0
      %410 = vmatmul.mubr.bf16.gmra.mrb[0].mxu0 %v354
      %v411 = vpop.f32.mrb[0].mxu0
      %v412 = vadd.f32 %v255, %v411
      %v413 = vpop.f32.mrb[0].mxu0
      %v414 = vadd.f32 %v259, %v413
      %v415 = vpop.f32.mrb[0].mxu0
      %v416 = vadd.f32 %v255, %v415
      %v417 = vpop.f32.mrb[0].mxu0
      %v418 = vadd.f32 %v259, %v417
      %419 = vmatprep.mubr.bf16.mxu0 0
      %420 = vmatmul.mubr.bf16.gmra.mrb[0].mxu0 %v357
      %v421 = vpop.f32.mrb[0].mxu0
      %v422 = vadd.f32 %v255, %v421
      %v423 = vpop.f32.mrb[0].mxu0
      %v424 = vadd.f32 %v259, %v423
      %v425 = vpop.f32.mrb[0].mxu0
      %v426 = vadd.f32 %v255, %v425
      %v427 = vpop.f32.mrb[0].mxu0
      %v428 = vadd.f32 %v259, %v427
      %429 = vmatprep.mubr.bf16.mxu0 0
      %430 = vmatmul.mubr.bf16.gmra.mrb[0].mxu0 %v360
      %v431 = vpop.f32.mrb[0].mxu0
      %v432 = vadd.f32 %v255, %v431
      %v433 = vpop.f32.mrb[0].mxu0
      %v434 = vadd.f32 %v259, %v433
      %v435 = vpop.f32.mrb[0].mxu0
      %v436 = vadd.f32 %v255, %v435
      %v437 = vpop.f32.mrb[0].mxu0
      %v438 = vadd.f32 %v259, %v437
      %439 = vmatprep.mubr.bf16.mxu0 0
      %440 = vmatmul.mubr.bf16.gmra.mrb[0].mxu0 %v363
      %v441 = vpop.f32.mrb[0].mxu0
      %v442 = vadd.f32 %v255, %v441
      %v443 = vpop.f32.mrb[0].mxu0
      %v444 = vadd.f32 %v259, %v443
      %v445 = vpop.f32.mrb[0].mxu0
      %v446 = vadd.f32 %v255, %v445
      %v447 = vpop.f32.mrb[0].mxu0
      %v448 = vadd.f32 %v259, %v447
      %449 = vmatprep.mubr.bf16.mxu0 0
      %450 = vmatmul.mubr.bf16.gmra.mrb[0].mxu0 %v366
      %v451 = vpop.f32.mrb[0].mxu0
      %v452 = vadd.f32 %v255, %v451
      %v453 = vpop.f32.mrb[0].mxu0
      %v454 = vadd.f32 %v259, %v453
      %v455 = vpop.f32.mrb[0].mxu0
      %v456 = vadd.f32 %v255, %v455
      %v457 = vpop.f32.mrb[0].mxu0
      %v458 = vadd.f32 %v259, %v457
      %459 = vmatprep.mubr.bf16.mxu0 0
      %460 = vmatmul.mubr.bf16.gmra.mrb[0].mxu0 %v369
      %v461 = vpop.f32.mrb[0].mxu0
      %v462 = vadd.f32 %v255, %v461
      %v463 = vpop.f32.mrb[0].mxu0
      %v464 = vadd.f32 %v259, %v463
      %v465 = vpop.f32.mrb[0].mxu0
      %v466 = vadd.f32 %v255, %v465
      %v467 = vpop.f32.mrb[0].mxu0
      %v468 = vadd.f32 %v259, %v467
      %469 = vmatprep.mubr.bf16.mxu0 0
      %470 = vmatmul.mubr.bf16.gmra.mrb[0].mxu0 %v372
      %v471 = vpop.f32.mrb[0].mxu0
      %v472 = vadd.f32 %v255, %v471
      %v473 = vpop.f32.mrb[0].mxu0
      %v474 = vadd.f32 %v259, %v473
      %v475 = vpop.f32.mrb[0].mxu0
      %v476 = vadd.f32 %v255, %v475
      %v477 = vpop.f32.mrb[0].mxu0
      %v478 = vadd.f32 %v259, %v477
      %479 = vmatprep.mubr.bf16.mxu0 0
      %480 = vmatmul.mubr.bf16.gmra.mrb[0].mxu0 %v375
      %v481 = vpop.f32.mrb[0].mxu0
      %v482 = vadd.f32 %v255, %v481
      %v483 = vpop.f32.mrb[0].mxu0
      %v484 = vadd.f32 %v259, %v483
      %v485 = vpop.f32.mrb[0].mxu0
      %v486 = vadd.f32 %v255, %v485
      %v487 = vpop.f32.mrb[0].mxu0
      %v488 = vadd.f32 %v259, %v487
      %489 = vdwg.mxu0
      %490 = vmatprep.subr.bf16.mxu0 %v323
      %491 = vmatpush1.bf16.msra.mxu0 %v322
      %492 = vmatprep.subr.bf16.mxu0 %v327
      %493 = vmatpush1.bf16.msra.mxu0 %v326
      %494 = vmatprep.subr.bf16.mxu0 %v331
      %495 = vmatpush1.bf16.msra.mxu0 %v330
      %496 = vmatprep.subr.bf16.mxu0 %v335
      %497 = vmatpush1.bf16.msra.mxu0 %v334
      %498 = vmatprep.subr.bf16.mxu0 0
      %499 = vmatpush1.bf16.msra.mxu0 0
      %500 = vmatprep.subr.bf16.mxu0 0
      %501 = vmatpush1.bf16.msra.mxu0 0
      %502 = vmatprep.subr.bf16.mxu0 0
      %503 = vmatpush1.bf16.msra.mxu0 0
      %504 = vmatprep.subr.bf16.mxu0 0
      %505 = vmatpush1.bf16.msra.mxu0 0
      %506 = vmatprep.subr.bf16.mxu0 0
      %507 = vmatpush1.bf16.msra.mxu0 0
      %508 = vmatprep.subr.bf16.mxu0 0
      %509 = vmatpush1.bf16.msra.mxu0 0
      %510 = vmatprep.subr.bf16.mxu0 0
      %511 = vmatpush1.bf16.msra.mxu0 0
      %512 = vmatprep.subr.bf16.mxu0 0
      %513 = vmatpush1.bf16.msra.mxu0 0
      %514 = vmatprep.subr.bf16.mxu0 0
      %515 = vmatpush1.bf16.msra.mxu0 0
      %516 = vmatprep.subr.bf16.mxu0 0
      %517 = vmatpush1.bf16.msra.mxu0 0
      %518 = vmatprep.subr.bf16.mxu0 0
      %519 = vmatpush1.bf16.msra.mxu0 0
      %520 = vmatprep.subr.bf16.mxu0 0
      %521 = vmatpush1.bf16.msra.mxu0 0
      %522 = vmatprep.mubr.bf16.mxu0 0
      %523 = vmatmul.mubr.bf16.gmra.mrb[0].mxu0 %v354
      %v524 = vpop.f32.mrb[0].mxu0
      %v525 = vadd.f32 %v263, %v524
      %v526 = vpop.f32.mrb[0].mxu0
      %v527 = vadd.f32 %v267, %v526
      %v528 = vpop.f32.mrb[0].mxu0
      %v529 = vadd.f32 %v263, %v528
      %v530 = vpop.f32.mrb[0].mxu0
      %v531 = vadd.f32 %v267, %v530
      %532 = vmatprep.mubr.bf16.mxu0 0
      %533 = vmatmul.mubr.bf16.gmra.mrb[0].mxu0 %v357
      %v534 = vpop.f32.mrb[0].mxu0
      %v535 = vadd.f32 %v263, %v534
      %v536 = vpop.f32.mrb[0].mxu0
      %v537 = vadd.f32 %v267, %v536
      %v538 = vpop.f32.mrb[0].mxu0
      %v539 = vadd.f32 %v263, %v538
      %v540 = vpop.f32.mrb[0].mxu0
      %v541 = vadd.f32 %v267, %v540
      %542 = vmatprep.mubr.bf16.mxu0 0
      %543 = vmatmul.mubr.bf16.gmra.mrb[0].mxu0 %v360
      %v544 = vpop.f32.mrb[0].mxu0
      %v545 = vadd.f32 %v263, %v544
      %v546 = vpop.f32.mrb[0].mxu0
      %v547 = vadd.f32 %v267, %v546
      %v548 = vpop.f32.mrb[0].mxu0
      %v549 = vadd.f32 %v263, %v548
      %v550 = vpop.f32.mrb[0].mxu0
      %v551 = vadd.f32 %v267, %v550
      %552 = vmatprep.mubr.bf16.mxu0 0
      %553 = vmatmul.mubr.bf16.gmra.mrb[0].mxu0 %v363
      %v554 = vpop.f32.mrb[0].mxu0
      %v555 = vadd.f32 %v263, %v554
      %v556 = vpop.f32.mrb[0].mxu0
      %v557 = vadd.f32 %v267, %v556
      %v558 = vpop.f32.mrb[0].mxu0
      %v559 = vadd.f32 %v263, %v558
      %v560 = vpop.f32.mrb[0].mxu0
      %v561 = vadd.f32 %v267, %v560
      %562 = vmatprep.mubr.bf16.mxu0 0
      %563 = vmatmul.mubr.bf16.gmra.mrb[0].mxu0 %v366
      %v564 = vpop.f32.mrb[0].mxu0
      %v565 = vadd.f32 %v263, %v564
      %v566 = vpop.f32.mrb[0].mxu0
      %v567 = vadd.f32 %v267, %v566
      %v568 = vpop.f32.mrb[0].mxu0
      %v569 = vadd.f32 %v263, %v568
      %v570 = vpop.f32.mrb[0].mxu0
      %v571 = vadd.f32 %v267, %v570
      %572 = vmatprep.mubr.bf16.mxu0 0
      %573 = vmatmul.mubr.bf16.gmra.mrb[0].mxu0 %v369
      %v574 = vpop.f32.mrb[0].mxu0
      %v575 = vadd.f32 %v263, %v574
      %v576 = vpop.f32.mrb[0].mxu0
      %v577 = vadd.f32 %v267, %v576
      %v578 = vpop.f32.mrb[0].mxu0
      %v579 = vadd.f32 %v263, %v578
      %v580 = vpop.f32.mrb[0].mxu0
      %v581 = vadd.f32 %v267, %v580
      %582 = vmatprep.mubr.bf16.mxu0 0
      %583 = vmatmul.mubr.bf16.gmra.mrb[0].mxu0 %v372
      %v584 = vpop.f32.mrb[0].mxu0
      %v585 = vadd.f32 %v263, %v584
      %v586 = vpop.f32.mrb[0].mxu0
      %v587 = vadd.f32 %v267, %v586
      %v588 = vpop.f32.mrb[0].mxu0
      %v589 = vadd.f32 %v263, %v588
      %v590 = vpop.f32.mrb[0].mxu0
      %v591 = vadd.f32 %v267, %v590
      %592 = vmatprep.mubr.bf16.mxu0 0
      %593 = vmatmul.mubr.bf16.gmra.mrb[0].mxu0 %v375
      %v594 = vpop.f32.mrb[0].mxu0
      %v595 = vadd.f32 %v263, %v594
      %v596 = vpop.f32.mrb[0].mxu0
      %v597 = vadd.f32 %v267, %v596
      %v598 = vpop.f32.mrb[0].mxu0
      %v599 = vadd.f32 %v263, %v598
      %v600 = vpop.f32.mrb[0].mxu0
      %v601 = vadd.f32 %v267, %v600
      %602 = vdwg.mxu0
      %s603 = smul.u32 %s16, 128
      %v604 = vlaneseq
      %v605 = vshrl.u32 %v604, 7
      %v606 = vadd.s32 %v605, 8
      %v607 = vadd.s32 %v605, 16
      %v608 = vadd.s32 %v605, 24
      %v609 = vadd.s32 %v605, 32
      %v610 = vadd.s32 %v605, 40
      %v611 = vadd.s32 %v605, 48
      %v612 = vadd.s32 %v605, 56
      %v613 = vadd.s32 %v605, 64
      %v614 = vadd.s32 %v605, 72
      %v615 = vadd.s32 %v605, 80
      %v616 = vadd.s32 %v605, 88
      %v617 = vadd.s32 %v605, 96
      %v618 = vadd.s32 %v605, 104
      %v619 = vadd.s32 %v605, 112
      %v620 = vadd.s32 %v605, 120
      %v621 = vstv %s603
      %v622 = vadd.s32 %v621, %v605
      %v623 = vadd.s32 %v621, %v606
      %v624 = vadd.s32 %v621, %v607
      %v625 = vadd.s32 %v621, %v608
      %v626 = vadd.s32 %v621, %v609
      %v627 = vadd.s32 %v621, %v610
      %v628 = vadd.s32 %v621, %v611
      %v629 = vadd.s32 %v621, %v612
      %v630 = vadd.s32 %v621, %v613
      %v631 = vadd.s32 %v621, %v614
      %v632 = vadd.s32 %v621, %v615
      %v633 = vadd.s32 %v621, %v616
      %v634 = vadd.s32 %v621, %v617
      %v635 = vadd.s32 %v621, %v618
      %v636 = vadd.s32 %v621, %v619
      %v637 = vadd.s32 %v621, %v620
      %vm638 = vcmp.lt.s32.totalorder %v622, 256
      %vm639 = vcmp.lt.s32.totalorder %v623, 256
      %vm640 = vcmp.lt.s32.totalorder %v624, 256
      %vm641 = vcmp.lt.s32.totalorder %v625, 256
      %vm642 = vcmp.lt.s32.totalorder %v626, 256
      %vm643 = vcmp.lt.s32.totalorder %v627, 256
      %vm644 = vcmp.lt.s32.totalorder %v628, 256
      %vm645 = vcmp.lt.s32.totalorder %v629, 256
      %vm646 = vcmp.lt.s32.totalorder %v630, 256
      %vm647 = vcmp.lt.s32.totalorder %v631, 256
      %vm648 = vcmp.lt.s32.totalorder %v632, 256
      %vm649 = vcmp.lt.s32.totalorder %v633, 256
      %vm650 = vcmp.lt.s32.totalorder %v634, 256
      %vm651 = vcmp.lt.s32.totalorder %v635, 256
      %vm652 = vcmp.lt.s32.totalorder %v636, 256
      %vm653 = vcmp.lt.s32.totalorder %v637, 256
      %v654 = vsel %vm638, 1, 0
      %v655 = vsel %vm639, 1, 0
      %v656 = vsel %vm640, 1, 0
      %v657 = vsel %vm641, 1, 0
      %v658 = vsel %vm642, 1, 0
      %v659 = vsel %vm643, 1, 0
      %v660 = vsel %vm644, 1, 0
      %v661 = vsel %vm645, 1, 0
      %v662 = vsel %vm646, 1, 0
      %v663 = vsel %vm647, 1, 0
      %v664 = vsel %vm648, 1, 0
      %v665 = vsel %vm649, 1, 0
      %v666 = vsel %vm650, 1, 0
      %v667 = vsel %vm651, 1, 0
      %v668 = vsel %vm652, 1, 0
      %v669 = vsel %vm653, 1, 0
      %v670 = vcvt.s32.f32 %v654
      %v671 = vcvt.s32.f32 %v655
      %v672 = vcvt.s32.f32 %v656
      %v673 = vcvt.s32.f32 %v657
      %v674 = vcvt.s32.f32 %v658
      %v675 = vcvt.s32.f32 %v659
      %v676 = vcvt.s32.f32 %v660
      %v677 = vcvt.s32.f32 %v661
      %v678 = vcvt.s32.f32 %v662
      %v679 = vcvt.s32.f32 %v663
      %v680 = vcvt.s32.f32 %v664
      %v681 = vcvt.s32.f32 %v665
      %v682 = vcvt.s32.f32 %v666
      %v683 = vcvt.s32.f32 %v667
      %v684 = vcvt.s32.f32 %v668
      %v685 = vcvt.s32.f32 %v669
      %v686 = vmul.f32 %v412, %v670
      %v687 = vmul.f32 %v414, %v670
      %v688 = vmul.f32 %v525, %v670
      %v689 = vmul.f32 %v527, %v670
      %v690 = vmul.f32 %v416, %v671
      %v691 = vmul.f32 %v418, %v671
      %v692 = vmul.f32 %v529, %v671
      %v693 = vmul.f32 %v531, %v671
      %v694 = vmul.f32 %v422, %v672
      %v695 = vmul.f32 %v424, %v672
      %v696 = vmul.f32 %v535, %v672
      %v697 = vmul.f32 %v537, %v672
      %v698 = vmul.f32 %v426, %v673
      %v699 = vmul.f32 %v428, %v673
      %v700 = vmul.f32 %v539, %v673
      %v701 = vmul.f32 %v541, %v673
      %v702 = vmul.f32 %v432, %v674
      %v703 = vmul.f32 %v434, %v674
      %v704 = vmul.f32 %v545, %v674
      %v705 = vmul.f32 %v547, %v674
      %v706 = vmul.f32 %v436, %v675
      %v707 = vmul.f32 %v438, %v675
      %v708 = vmul.f32 %v549, %v675
      %v709 = vmul.f32 %v551, %v675
      %v710 = vmul.f32 %v442, %v676
      %v711 = vmul.f32 %v444, %v676
      %v712 = vmul.f32 %v555, %v676
      %v713 = vmul.f32 %v557, %v676
      %v714 = vmul.f32 %v446, %v677
      %v715 = vmul.f32 %v448, %v677
      %v716 = vmul.f32 %v559, %v677
      %v717 = vmul.f32 %v561, %v677
      %v718 = vmul.f32 %v452, %v678
      %v719 = vmul.f32 %v454, %v678
      %v720 = vmul.f32 %v565, %v678
      %v721 = vmul.f32 %v567, %v678
      %v722 = vmul.f32 %v456, %v679
      %v723 = vmul.f32 %v458, %v679
      %v724 = vmul.f32 %v569, %v679
      %v725 = vmul.f32 %v571, %v679
      %v726 = vmul.f32 %v462, %v680
      %v727 = vmul.f32 %v464, %v680
      %v728 = vmul.f32 %v575, %v680
      %v729 = vmul.f32 %v577, %v680
      %v730 = vmul.f32 %v466, %v681
      %v731 = vmul.f32 %v468, %v681
      %v732 = vmul.f32 %v579, %v681
      %v733 = vmul.f32 %v581, %v681
      %v734 = vmul.f32 %v472, %v682
      %v735 = vmul.f32 %v474, %v682
      %v736 = vmul.f32 %v585, %v682
      %v737 = vmul.f32 %v587, %v682
      %v738 = vmul.f32 %v476, %v683
      %v739 = vmul.f32 %v478, %v683
      %v740 = vmul.f32 %v589, %v683
      %v741 = vmul.f32 %v591, %v683
      %v742 = vmul.f32 %v482, %v684
      %v743 = vmul.f32 %v484, %v684
      %v744 = vmul.f32 %v595, %v684
      %v745 = vmul.f32 %v597, %v684
      %v746 = vmul.f32 %v486, %v685
      %v747 = vmul.f32 %v488, %v685
      %v748 = vmul.f32 %v599, %v685
      %v749 = vmul.f32 %v601, %v685
      %v750 = vadd.f32 %v686, %v690
      %v751 = vadd.f32 %v750, %v694
      %v752 = vadd.f32 %v751, %v698
      %v753 = vadd.f32 %v752, %v702
      %v754 = vadd.f32 %v753, %v706
      %v755 = vadd.f32 %v754, %v710
      %v756 = vadd.f32 %v755, %v714
      %v757 = vadd.f32 %v756, %v718
      %v758 = vadd.f32 %v757, %v722
      %v759 = vadd.f32 %v758, %v726
      %v760 = vadd.f32 %v759, %v730
      %v761 = vadd.f32 %v760, %v734
      %v762 = vadd.f32 %v761, %v738
      %v763 = vadd.f32 %v762, %v742
      %v764 = vadd.f32 %v763, %v746
      %v765 = vrot.slane %v764, 4
      %v766 = vadd.f32 %v764, %v765
      %v767 = vrot.slane %v766, 2
      %v768 = vadd.f32 %v766, %v767
      %v769 = vrot.slane %v768, 1
      %v770 = vadd.f32 %v768, %v769
      %v771 = vadd.f32 %v687, %v691
      %v772 = vadd.f32 %v771, %v695
      %v773 = vadd.f32 %v772, %v699
      %v774 = vadd.f32 %v773, %v703
      %v775 = vadd.f32 %v774, %v707
      %v776 = vadd.f32 %v775, %v711
      %v777 = vadd.f32 %v776, %v715
      %v778 = vadd.f32 %v777, %v719
      %v779 = vadd.f32 %v778, %v723
      %v780 = vadd.f32 %v779, %v727
      %v781 = vadd.f32 %v780, %v731
      %v782 = vadd.f32 %v781, %v735
      %v783 = vadd.f32 %v782, %v739
      %v784 = vadd.f32 %v783, %v743
      %v785 = vadd.f32 %v784, %v747
      %v786 = vrot.slane %v785, 4
      %v787 = vadd.f32 %v785, %v786
      %v788 = vrot.slane %v787, 2
      %v789 = vadd.f32 %v787, %v788
      %v790 = vrot.slane %v789, 1
      %v791 = vadd.f32 %v789, %v790
      %v792 = vadd.f32 %v688, %v692
      %v793 = vadd.f32 %v792, %v696
      %v794 = vadd.f32 %v793, %v700
      %v795 = vadd.f32 %v794, %v704
      %v796 = vadd.f32 %v795, %v708
      %v797 = vadd.f32 %v796, %v712
      %v798 = vadd.f32 %v797, %v716
      %v799 = vadd.f32 %v798, %v720
      %v800 = vadd.f32 %v799, %v724
      %v801 = vadd.f32 %v800, %v728
      %v802 = vadd.f32 %v801, %v732
      %v803 = vadd.f32 %v802, %v736
      %v804 = vadd.f32 %v803, %v740
      %v805 = vadd.f32 %v804, %v744
      %v806 = vadd.f32 %v805, %v748
      %v807 = vrot.slane %v806, 4
      %v808 = vadd.f32 %v806, %v807
      %v809 = vrot.slane %v808, 2
      %v810 = vadd.f32 %v808, %v809
      %v811 = vrot.slane %v810, 1
      %v812 = vadd.f32 %v810, %v811
      %v813 = vadd.f32 %v689, %v693
      %v814 = vadd.f32 %v813, %v697
      %v815 = vadd.f32 %v814, %v701
      %v816 = vadd.f32 %v815, %v705
      %v817 = vadd.f32 %v816, %v709
      %v818 = vadd.f32 %v817, %v713
      %v819 = vadd.f32 %v818, %v717
      %v820 = vadd.f32 %v819, %v721
      %v821 = vadd.f32 %v820, %v725
      %v822 = vadd.f32 %v821, %v729
      %v823 = vadd.f32 %v822, %v733
      %v824 = vadd.f32 %v823, %v737
      %v825 = vadd.f32 %v824, %v741
      %v826 = vadd.f32 %v825, %v745
      %v827 = vadd.f32 %v826, %v749
      %v828 = vrot.slane %v827, 4
      %v829 = vadd.f32 %v827, %v828
      %v830 = vrot.slane %v829, 2
      %v831 = vadd.f32 %v829, %v830
      %v832 = vrot.slane %v831, 1
      %v833 = vadd.f32 %v831, %v832
      %v838 = vcombine.low %v770, %v791
      %v839 = vcombine.low %v812, %v833
      %v841 = vunpack.c.l.s4 1966171168
      %v842 = vunpack.c.0.s8 %v841
      %v843 = vlaneseq
      %v844 = vshrl.u32 %v843, 7
      %v845 = vsub.s32 %v842, %v844
      %v846 = vrot.slane %v838, %v845
      %v848 = vunpack.c.l.s4 1966171168
      %v849 = vunpack.c.0.s8 %v848
      %v850 = vlaneseq
      %v851 = vshrl.u32 %v850, 7
      %v852 = vsub.s32 %v849, %v851
      %v853 = vrot.slane %v839, %v852
      %v854 = vcombine.low %v846, %v853
      %v856 = vunpack.c.l.s4 1966171168
      %v857 = vunpack.c.0.s8 %v856
      %v858 = vlaneseq
      %v859 = vshrl.u32 %v858, 7
      %v860 = vsub.s32 %v857, %v859
      %v861 = vrot.slane %v854, %v860
      %v863 = vlaneseq
      %vm864 = vcmp.ge.s32.totalorder %v863, 0
      %vm865 = vcmp.lt.s32.totalorder %v863, 512
      %vm866 = vmand %vm864, %vm865
      %867 = vst.msk [vmem:[%s204] sm:$0xf] %vm866, %v861
      %v868 = vmul.f32 %v686, %v412
      %v869 = vmul.f32 %v687, %v414
      %v870 = vmul.f32 %v688, %v525
      %v871 = vmul.f32 %v689, %v527
      %v872 = vmul.f32 %v690, %v416
      %v873 = vmul.f32 %v691, %v418
      %v874 = vmul.f32 %v692, %v529
      %v875 = vmul.f32 %v693, %v531
      %v876 = vmul.f32 %v694, %v422
      %v877 = vmul.f32 %v695, %v424
      %v878 = vmul.f32 %v696, %v535
      %v879 = vmul.f32 %v697, %v537
      %v880 = vmul.f32 %v698, %v426
      %v881 = vmul.f32 %v699, %v428
      %v882 = vmul.f32 %v700, %v539
      %v883 = vmul.f32 %v701, %v541
      %v884 = vmul.f32 %v702, %v432
      %v885 = vmul.f32 %v703, %v434
      %v886 = vmul.f32 %v704, %v545
      %v887 = vmul.f32 %v705, %v547
      %v888 = vmul.f32 %v706, %v436
      %v889 = vmul.f32 %v707, %v438
      %v890 = vmul.f32 %v708, %v549
      %v891 = vmul.f32 %v709, %v551
      %v892 = vmul.f32 %v710, %v442
      %v893 = vmul.f32 %v711, %v444
      %v894 = vmul.f32 %v712, %v555
      %v895 = vmul.f32 %v713, %v557
      %v896 = vmul.f32 %v714, %v446
      %v897 = vmul.f32 %v715, %v448
      %v898 = vmul.f32 %v716, %v559
      %v899 = vmul.f32 %v717, %v561
      %v900 = vmul.f32 %v718, %v452
      %v901 = vmul.f32 %v719, %v454
      %v902 = vmul.f32 %v720, %v565
      %v903 = vmul.f32 %v721, %v567
      %v904 = vmul.f32 %v722, %v456
      %v905 = vmul.f32 %v723, %v458
      %v906 = vmul.f32 %v724, %v569
      %v907 = vmul.f32 %v725, %v571
      %v908 = vmul.f32 %v726, %v462
      %v909 = vmul.f32 %v727, %v464
      %v910 = vmul.f32 %v728, %v575
      %v911 = vmul.f32 %v729, %v577
      %v912 = vmul.f32 %v730, %v466
      %v913 = vmul.f32 %v731, %v468
      %v914 = vmul.f32 %v732, %v579
      %v915 = vmul.f32 %v733, %v581
      %v916 = vmul.f32 %v734, %v472
      %v917 = vmul.f32 %v735, %v474
      %v918 = vmul.f32 %v736, %v585
      %v919 = vmul.f32 %v737, %v587
      %v920 = vmul.f32 %v738, %v476
      %v921 = vmul.f32 %v739, %v478
      %v922 = vmul.f32 %v740, %v589
      %v923 = vmul.f32 %v741, %v591
      %v924 = vmul.f32 %v742, %v482
      %v925 = vmul.f32 %v743, %v484
      %v926 = vmul.f32 %v744, %v595
      %v927 = vmul.f32 %v745, %v597
      %v928 = vmul.f32 %v746, %v486
      %v929 = vmul.f32 %v747, %v488
      %v930 = vmul.f32 %v748, %v599
      %v931 = vmul.f32 %v749, %v601
      %v932 = vadd.f32 %v868, %v872
      %v933 = vadd.f32 %v932, %v876
      %v934 = vadd.f32 %v933, %v880
      %v935 = vadd.f32 %v934, %v884
      %v936 = vadd.f32 %v935, %v888
      %v937 = vadd.f32 %v936, %v892
      %v938 = vadd.f32 %v937, %v896
      %v939 = vadd.f32 %v938, %v900
      %v940 = vadd.f32 %v939, %v904
      %v941 = vadd.f32 %v940, %v908
      %v942 = vadd.f32 %v941, %v912
      %v943 = vadd.f32 %v942, %v916
      %v944 = vadd.f32 %v943, %v920
      %v945 = vadd.f32 %v944, %v924
      %v946 = vadd.f32 %v945, %v928
      %v947 = vrot.slane %v946, 4
      %v948 = vadd.f32 %v946, %v947
      %v949 = vrot.slane %v948, 2
      %v950 = vadd.f32 %v948, %v949
      %v951 = vrot.slane %v950, 1
      %v952 = vadd.f32 %v950, %v951
      %v953 = vadd.f32 %v869, %v873
      %v954 = vadd.f32 %v953, %v877
      %v955 = vadd.f32 %v954, %v881
      %v956 = vadd.f32 %v955, %v885
      %v957 = vadd.f32 %v956, %v889
      %v958 = vadd.f32 %v957, %v893
      %v959 = vadd.f32 %v958, %v897
      %v960 = vadd.f32 %v959, %v901
      %v961 = vadd.f32 %v960, %v905
      %v962 = vadd.f32 %v961, %v909
      %v963 = vadd.f32 %v962, %v913
      %v964 = vadd.f32 %v963, %v917
      %v965 = vadd.f32 %v964, %v921
      %v966 = vadd.f32 %v965, %v925
      %v967 = vadd.f32 %v966, %v929
      %v968 = vrot.slane %v967, 4
      %v969 = vadd.f32 %v967, %v968
      %v970 = vrot.slane %v969, 2
      %v971 = vadd.f32 %v969, %v970
      %v972 = vrot.slane %v971, 1
      %v973 = vadd.f32 %v971, %v972
      %v974 = vadd.f32 %v870, %v874
      %v975 = vadd.f32 %v974, %v878
      %v976 = vadd.f32 %v975, %v882
      %v977 = vadd.f32 %v976, %v886
      %v978 = vadd.f32 %v977, %v890
      %v979 = vadd.f32 %v978, %v894
      %v980 = vadd.f32 %v979, %v898
      %v981 = vadd.f32 %v980, %v902
      %v982 = vadd.f32 %v981, %v906
      %v983 = vadd.f32 %v982, %v910
      %v984 = vadd.f32 %v983, %v914
      %v985 = vadd.f32 %v984, %v918
      %v986 = vadd.f32 %v985, %v922
      %v987 = vadd.f32 %v986, %v926
      %v988 = vadd.f32 %v987, %v930
      %v989 = vrot.slane %v988, 4
      %v990 = vadd.f32 %v988, %v989
      %v991 = vrot.slane %v990, 2
      %v992 = vadd.f32 %v990, %v991
      %v993 = vrot.slane %v992, 1
      %v994 = vadd.f32 %v992, %v993
      %v995 = vadd.f32 %v871, %v875
      %v996 = vadd.f32 %v995, %v879
      %v997 = vadd.f32 %v996, %v883
      %v998 = vadd.f32 %v997, %v887
      %v999 = vadd.f32 %v998, %v891
      %v1000 = vadd.f32 %v999, %v895
      %v1001 = vadd.f32 %v1000, %v899
      %v1002 = vadd.f32 %v1001, %v903
      %v1003 = vadd.f32 %v1002, %v907
      %v1004 = vadd.f32 %v1003, %v911
      %v1005 = vadd.f32 %v1004, %v915
      %v1006 = vadd.f32 %v1005, %v919
      %v1007 = vadd.f32 %v1006, %v923
      %v1008 = vadd.f32 %v1007, %v927
      %v1009 = vadd.f32 %v1008, %v931
      %v1010 = vrot.slane %v1009, 4
      %v1011 = vadd.f32 %v1009, %v1010
      %v1012 = vrot.slane %v1011, 2
      %v1013 = vadd.f32 %v1011, %v1012
      %v1014 = vrot.slane %v1013, 1
      %v1015 = vadd.f32 %v1013, %v1014
      %v1020 = vcombine.low %v952, %v973
      %v1021 = vcombine.low %v994, %v1015
      %v1023 = vunpack.c.l.s4 1966171168
      %v1024 = vunpack.c.0.s8 %v1023
      %v1025 = vlaneseq
      %v1026 = vshrl.u32 %v1025, 7
      %v1027 = vsub.s32 %v1024, %v1026
      %v1028 = vrot.slane %v1020, %v1027
      %v1030 = vunpack.c.l.s4 1966171168
      %v1031 = vunpack.c.0.s8 %v1030
      %v1032 = vlaneseq
      %v1033 = vshrl.u32 %v1032, 7
      %v1034 = vsub.s32 %v1031, %v1033
      %v1035 = vrot.slane %v1021, %v1034
      %v1036 = vcombine.low %v1028, %v1035
      %v1038 = vunpack.c.l.s4 1966171168
      %v1039 = vunpack.c.0.s8 %v1038
      %v1040 = vlaneseq
      %v1041 = vshrl.u32 %v1040, 7
      %v1042 = vsub.s32 %v1039, %v1041
      %v1043 = vrot.slane %v1036, %v1042
      %1045 = vst.msk [vmem:[%s208] sm:$0xf] %vm866, %v1043
      %p1046 = scmp.lt.s32.totalorder %s16, 1
      %s1047 = scalar_select %p1046, %s16, 1
      %s1048 = smul.addr %s1047, 4
      %s1049 = scalar_lea.vmem %s3, %s1048
      %p1050 = scmp.lt.s32.totalorder %s16, 1
      %s1051 = scalar_select %p1050, %s16, 1
      %s1052 = smul.addr %s1051, 4
      %s1053 = scalar_lea.vmem %s4, %s1052
      // Predicated region
      $region33: #{encoder_pet_forward.2} parent=31 // pred_check
        %p1054 = pneg %p102
      $region34: #{encoder_pet_forward.2} parent=31 // pred_check_branch
        %1056 = sbr.rel (%p1054) target = $region36
      $region35: #{encoder_pet_forward.2} parent=31 // pred_region
        _
      $region36: #{encoder_pet_forward.2} parent=31 // pred_fallthru
        _
      // Predicated region
      $region37: #{encoder_pet_forward.2} parent=31 // pred_check
        %p1057 = pneg %p128
      $region38: #{encoder_pet_forward.2} parent=31 // pred_check_branch
        %1059 = sbr.rel (%p1057) target = $region40
      $region39: #{encoder_pet_forward.2} parent=31 // pred_region
        _
      $region40: #{encoder_pet_forward.2} parent=31 // pred_fallthru
        _
    $region32: #{encoder_pet_forward.2} parent=5 // pred_fallthru
      _
    %p1060 = scmp.le.s32.totalorder 2, %s11
    // Predicated region
    $region41: #{encoder_pet_forward.2} parent=5 // pred_check
      %p1061 = pneg %p1060
    $region42: #{encoder_pet_forward.2} parent=5 // pred_check_branch
      %1063 = sbr.rel (%p1061) target = $region44
    $region43: #{encoder_pet_forward.2} parent=5 // pred_region
      %s1064 = ssub.s32 %s11, 2
      // Predicated region
      $region45: #{encoder_pet_forward.2} parent=43 // pred_check
        %p1065 = pneg %p108
      $region46: #{encoder_pet_forward.2} parent=43 // pred_check_branch
        %1067 = sbr.rel (%p1065) target = $region48
      $region47: #{encoder_pet_forward.2} parent=43 // pred_region
        %p1068 = scmp.lt.s32.totalorder %s17, 1
        %s1069 = scalar_select %p1068, %s17, 1
        %s1070 = smul.addr %s1069, 4
        %s1071 = scalar_lea.vmem %s3, %s1070
      $region48: #{encoder_pet_forward.2} parent=43 // pred_fallthru
        _
      // Predicated region
      $region49: #{encoder_pet_forward.2} parent=43 // pred_check
        %p1072 = pneg %p134
      $region50: #{encoder_pet_forward.2} parent=43 // pred_check_branch
        %1074 = sbr.rel (%p1072) target = $region52
      $region51: #{encoder_pet_forward.2} parent=43 // pred_region
        %p1075 = scmp.lt.s32.totalorder %s17, 1
        %s1076 = scalar_select %p1075, %s17, 1
        %s1077 = smul.addr %s1076, 4
        %s1078 = scalar_lea.vmem %s4, %s1077
      $region52: #{encoder_pet_forward.2} parent=43 // pred_fallthru
        _
    $region44: #{encoder_pet_forward.2} parent=5 // pred_fallthru
      _
  $region6: #{encoder_pet_forward.2} parent=0 // loop_footer
    %s15 = sadd.s32 1, %s11
  $region7: #{encoder_pet_forward.2} parent=0 // loop_footer_branch
    %10 = sbr.rel target = $region3
  $region8: #{encoder_pet_forward.2} parent=0 // loop_exit
    _

// kernel: encoder_pet_forward.3
$region0: #{encoder_pet_forward.3}
  #allocation0 [shape = 'u32[]', space=smem, size = 0x4, offset = 0x4, fixed_abs, tag = 'smem constant byte address 0x4 - core index']
  #allocation1 [shape = 'u32[144,128]{1,0:T(1,128)}', space=vmem, size = 0x12000, scoped, tag = 'internal scratch']
  %s0 = inlined_call_operand.vmem [shape: f32[256,64], index: 0, kind: input, shape index: {}]
  %s1 = inlined_call_operand.vmem [shape: bf16[64,512], index: 1, kind: input, shape index: {}]
  %s2 = inlined_call_operand.vmem [shape: f32[1,512], index: 2, kind: input, shape index: {}]
  %s3 = inlined_call_operand.vmem [shape: f32[2,1,512], index: 3, kind: input, shape index: {}]
  %s4 = inlined_call_operand.vmem [shape: f32[2,1,512], index: 4, kind: input, shape index: {}]
  %s5 = inlined_call_operand.vmem [shape: f32[1,512], index: 5, kind: input, shape index: {}]
  %s6 = inlined_call_operand.vmem [shape: f32[1,512], index: 6, kind: input, shape index: {}]
  %s7 = inlined_call_operand.vmem [shape: bf16[512,256], index: 7, kind: input, shape index: {}]
  %s8 = inlined_call_operand.vmem [shape: f32[1,256], index: 8, kind: input, shape index: {}]
  %s9 = inlined_call_operand.vmem [shape: bf16[256,128], index: 9, kind: input, shape index: {}]
  %s10 = inlined_call_operand.vmem [shape: f32[1,128], index: 10, kind: input, shape index: {}]
  %s11 = inlined_call_operand.vmem [shape: bf16[128,128], index: 11, kind: input, shape index: {}]
  %s12 = inlined_call_operand.vmem [shape: f32[1,128], index: 12, kind: input, shape index: {}]
  %s13 = inlined_call_operand.vmem [shape: f32[256,128], index: 13, kind: output, shape index: {}]
  %s14 = sld [smem:[#allocation0]]
  $region85: #{encoder_pet_forward.3} parent=0
    _
  %s16 = ssub.s32 1, %s14
  %s17 = scalar_select 0, %s16, %s14
  loop: start=0, step=1, limit=4
  $region2: #{encoder_pet_forward.3} parent=0 // loop_pre_header
    _
  $region3: #{encoder_pet_forward.3} parent=0 // loop_header
    %s19 = sphi 0, %s23
    %p20 = scmp.ge.s32.totalorder %s19, 4
    %s29 = sphi 0, %s31
    %s32 = sphi 0, %s29
    %s33 = sphi 0, %s32
    %s49 = sphi 0, %s33
    %s53 = sphi 0, %s53
    %s55 = sphi 0, %s53
    %s56 = sphi 0, %s55
    %s70 = sphi 0, %s56
    %s74 = sphi 0, %s74
    %s76 = sphi 0, %s74
    %s77 = sphi 0, %s76
    %s91 = sphi 0, %s77
    %s95 = sphi 0, %s95
    %s97 = sphi 0, %s95
    %s98 = sphi 0, %s97
    %s112 = sphi 0, %s98
    %s116 = sphi 0, %s116
    %s118 = sphi 0, %s116
    %s119 = sphi 0, %s118
    %s133 = sphi 0, %s119
    %s137 = sphi 0, %s137
    %s139 = sphi 0, %s137
    %s140 = sphi 0, %s139
    %s154 = sphi 0, %s140
    %s158 = sphi 0, %s158
    %s160 = sphi 0, %s158
    %s161 = sphi 0, %s160
    %s175 = sphi 0, %s161
    %s179 = sphi 0, %s179
    %s181 = sphi 0, %s179
    %s182 = sphi 0, %s181
    %s196 = sphi 0, %s182
    %s200 = sphi 0, %s200
    %s202 = sphi 0, %s200
    %s203 = sphi 0, %s202
    %s217 = sphi 0, %s203
    %s221 = sphi 0, %s221
    %s223 = sphi 0, %s221
    %s224 = sphi 0, %s223
    %s238 = sphi 0, %s224
    %s242 = sphi 0, %s242
    %s244 = sphi 0, %s242
    %s245 = sphi 0, %s244
    %s259 = sphi 0, %s245
    %s263 = sphi 0, %s263
    %s265 = sphi 0, %s263
    %s266 = sphi 0, %s265
    %s280 = sphi 0, %s266
    %s284 = sphi 0, %s284
    %s286 = sphi 0, %s284
    %s287 = sphi 0, %s286
    %s301 = sphi 0, %s287
    %s307 = sphi 0, %s309
    %s310 = sphi 0, %s307
    %s311 = sphi 0, %s310
    %s327 = sphi 0, %s311
  $region4: #{encoder_pet_forward.3} parent=0 // loop_header_branch
    %22 = sbr.rel (%p20) target = $region8
  $region5: #{encoder_pet_forward.3} parent=0 // loop_body
    %s24 = ssub.s32 %s19, 1
    %s25 = ssub.s32 %s19, 2
    %s26 = sadd.s32 %s19, 1
    %s27 = ssub.s32 %s19, %s26
    %p28 = scmp.eq.s32.totalorder %s27, 0
    %s30 = sadd.s32 %s29, 1
    %s31 = scalar_select %p28, %s29, %s30
    %p34 = pneg %p28
    %p35 = scmp.eq.s32.totalorder %s19, 1
    %p36 = por %p34, %p35
    %p37 = scmp.ne.s32.totalorder %s29, %s32
    %p38 = scmp.eq.s32.totalorder %s19, 0
    %p39 = por %p37, %p38
    %p40 = scmp.ne.s32.totalorder %s29, %s32
    %p41 = scmp.eq.s32.totalorder %s24, 1
    %p42 = por %p40, %p41
    %p43 = scmp.ne.s32.totalorder %s32, %s33
    %p44 = scmp.eq.s32.totalorder %s24, 0
    %p45 = por %p43, %p44
    %p46 = scmp.ne.s32.totalorder %s32, %s33
    %p47 = scmp.eq.s32.totalorder %s25, 1
    %p48 = por %p46, %p47
    %p50 = scmp.ne.s32.totalorder %s33, %s49
    %p51 = scmp.eq.s32.totalorder %s25, 0
    %p52 = por %p50, %p51
    %s54 = sadd.s32 %s53, 1
    %p57 = scmp.eq.s32.totalorder %s19, 1
    %p58 = scmp.ne.s32.totalorder %s53, %s55
    %p59 = scmp.eq.s32.totalorder %s19, 0
    %p60 = por %p58, %p59
    %p61 = scmp.ne.s32.totalorder %s53, %s55
    %p62 = scmp.eq.s32.totalorder %s24, 1
    %p63 = por %p61, %p62
    %p64 = scmp.ne.s32.totalorder %s55, %s56
    %p65 = scmp.eq.s32.totalorder %s24, 0
    %p66 = por %p64, %p65
    %p67 = scmp.ne.s32.totalorder %s55, %s56
    %p68 = scmp.eq.s32.totalorder %s25, 1
    %p69 = por %p67, %p68
    %p71 = scmp.ne.s32.totalorder %s56, %s70
    %p72 = scmp.eq.s32.totalorder %s25, 0
    %p73 = por %p71, %p72
    %s75 = sadd.s32 %s74, 1
    %p78 = scmp.eq.s32.totalorder %s19, 1
    %p79 = scmp.ne.s32.totalorder %s74, %s76
    %p80 = scmp.eq.s32.totalorder %s19, 0
    %p81 = por %p79, %p80
    %p82 = scmp.ne.s32.totalorder %s74, %s76
    %p83 = scmp.eq.s32.totalorder %s24, 1
    %p84 = por %p82, %p83
    %p85 = scmp.ne.s32.totalorder %s76, %s77
    %p86 = scmp.eq.s32.totalorder %s24, 0
    %p87 = por %p85, %p86
    %p88 = scmp.ne.s32.totalorder %s76, %s77
    %p89 = scmp.eq.s32.totalorder %s25, 1
    %p90 = por %p88, %p89
    %p92 = scmp.ne.s32.totalorder %s77, %s91
    %p93 = scmp.eq.s32.totalorder %s25, 0
    %p94 = por %p92, %p93
    %s96 = sadd.s32 %s95, 1
    %p99 = scmp.eq.s32.totalorder %s19, 1
    %p100 = scmp.ne.s32.totalorder %s95, %s97
    %p101 = scmp.eq.s32.totalorder %s19, 0
    %p102 = por %p100, %p101
    %p103 = scmp.ne.s32.totalorder %s95, %s97
    %p104 = scmp.eq.s32.totalorder %s24, 1
    %p105 = por %p103, %p104
    %p106 = scmp.ne.s32.totalorder %s97, %s98
    %p107 = scmp.eq.s32.totalorder %s24, 0
    %p108 = por %p106, %p107
    %p109 = scmp.ne.s32.totalorder %s97, %s98
    %p110 = scmp.eq.s32.totalorder %s25, 1
    %p111 = por %p109, %p110
    %p113 = scmp.ne.s32.totalorder %s98, %s112
    %p114 = scmp.eq.s32.totalorder %s25, 0
    %p115 = por %p113, %p114
    %s117 = sadd.s32 %s116, 1
    %p120 = scmp.eq.s32.totalorder %s19, 1
    %p121 = scmp.ne.s32.totalorder %s116, %s118
    %p122 = scmp.eq.s32.totalorder %s19, 0
    %p123 = por %p121, %p122
    %p124 = scmp.ne.s32.totalorder %s116, %s118
    %p125 = scmp.eq.s32.totalorder %s24, 1
    %p126 = por %p124, %p125
    %p127 = scmp.ne.s32.totalorder %s118, %s119
    %p128 = scmp.eq.s32.totalorder %s24, 0
    %p129 = por %p127, %p128
    %p130 = scmp.ne.s32.totalorder %s118, %s119
    %p131 = scmp.eq.s32.totalorder %s25, 1
    %p132 = por %p130, %p131
    %p134 = scmp.ne.s32.totalorder %s119, %s133
    %p135 = scmp.eq.s32.totalorder %s25, 0
    %p136 = por %p134, %p135
    %s138 = sadd.s32 %s137, 1
    %p141 = scmp.eq.s32.totalorder %s19, 1
    %p142 = scmp.ne.s32.totalorder %s137, %s139
    %p143 = scmp.eq.s32.totalorder %s19, 0
    %p144 = por %p142, %p143
    %p145 = scmp.ne.s32.totalorder %s137, %s139
    %p146 = scmp.eq.s32.totalorder %s24, 1
    %p147 = por %p145, %p146
    %p148 = scmp.ne.s32.totalorder %s139, %s140
    %p149 = scmp.eq.s32.totalorder %s24, 0
    %p150 = por %p148, %p149
    %p151 = scmp.ne.s32.totalorder %s139, %s140
    %p152 = scmp.eq.s32.totalorder %s25, 1
    %p153 = por %p151, %p152
    %p155 = scmp.ne.s32.totalorder %s140, %s154
    %p156 = scmp.eq.s32.totalorder %s25, 0
    %p157 = por %p155, %p156
    %s159 = sadd.s32 %s158, 1
    %p162 = scmp.eq.s32.totalorder %s19, 1
    %p163 = scmp.ne.s32.totalorder %s158, %s160
    %p164 = scmp.eq.s32.totalorder %s19, 0
    %p165 = por %p163, %p164
    %p166 = scmp.ne.s32.totalorder %s158, %s160
    %p167 = scmp.eq.s32.totalorder %s24, 1
    %p168 = por %p166, %p167
    %p169 = scmp.ne.s32.totalorder %s160, %s161
    %p170 = scmp.eq.s32.totalorder %s24, 0
    %p171 = por %p169, %p170
    %p172 = scmp.ne.s32.totalorder %s160, %s161
    %p173 = scmp.eq.s32.totalorder %s25, 1
    %p174 = por %p172, %p173
    %p176 = scmp.ne.s32.totalorder %s161, %s175
    %p177 = scmp.eq.s32.totalorder %s25, 0
    %p178 = por %p176, %p177
    %s180 = sadd.s32 %s179, 1
    %p183 = scmp.eq.s32.totalorder %s19, 1
    %p184 = scmp.ne.s32.totalorder %s179, %s181
    %p185 = scmp.eq.s32.totalorder %s19, 0
    %p186 = por %p184, %p185
    %p187 = scmp.ne.s32.totalorder %s179, %s181
    %p188 = scmp.eq.s32.totalorder %s24, 1
    %p189 = por %p187, %p188
    %p190 = scmp.ne.s32.totalorder %s181, %s182
    %p191 = scmp.eq.s32.totalorder %s24, 0
    %p192 = por %p190, %p191
    %p193 = scmp.ne.s32.totalorder %s181, %s182
    %p194 = scmp.eq.s32.totalorder %s25, 1
    %p195 = por %p193, %p194
    %p197 = scmp.ne.s32.totalorder %s182, %s196
    %p198 = scmp.eq.s32.totalorder %s25, 0
    %p199 = por %p197, %p198
    %s201 = sadd.s32 %s200, 1
    %p204 = scmp.eq.s32.totalorder %s19, 1
    %p205 = scmp.ne.s32.totalorder %s200, %s202
    %p206 = scmp.eq.s32.totalorder %s19, 0
    %p207 = por %p205, %p206
    %p208 = scmp.ne.s32.totalorder %s200, %s202
    %p209 = scmp.eq.s32.totalorder %s24, 1
    %p210 = por %p208, %p209
    %p211 = scmp.ne.s32.totalorder %s202, %s203
    %p212 = scmp.eq.s32.totalorder %s24, 0
    %p213 = por %p211, %p212
    %p214 = scmp.ne.s32.totalorder %s202, %s203
    %p215 = scmp.eq.s32.totalorder %s25, 1
    %p216 = por %p214, %p215
    %p218 = scmp.ne.s32.totalorder %s203, %s217
    %p219 = scmp.eq.s32.totalorder %s25, 0
    %p220 = por %p218, %p219
    %s222 = sadd.s32 %s221, 1
    %p225 = scmp.eq.s32.totalorder %s19, 1
    %p226 = scmp.ne.s32.totalorder %s221, %s223
    %p227 = scmp.eq.s32.totalorder %s19, 0
    %p228 = por %p226, %p227
    %p229 = scmp.ne.s32.totalorder %s221, %s223
    %p230 = scmp.eq.s32.totalorder %s24, 1
    %p231 = por %p229, %p230
    %p232 = scmp.ne.s32.totalorder %s223, %s224
    %p233 = scmp.eq.s32.totalorder %s24, 0
    %p234 = por %p232, %p233
    %p235 = scmp.ne.s32.totalorder %s223, %s224
    %p236 = scmp.eq.s32.totalorder %s25, 1
    %p237 = por %p235, %p236
    %p239 = scmp.ne.s32.totalorder %s224, %s238
    %p240 = scmp.eq.s32.totalorder %s25, 0
    %p241 = por %p239, %p240
    %s243 = sadd.s32 %s242, 1
    %p246 = scmp.eq.s32.totalorder %s19, 1
    %p247 = scmp.ne.s32.totalorder %s242, %s244
    %p248 = scmp.eq.s32.totalorder %s19, 0
    %p249 = por %p247, %p248
    %p250 = scmp.ne.s32.totalorder %s242, %s244
    %p251 = scmp.eq.s32.totalorder %s24, 1
    %p252 = por %p250, %p251
    %p253 = scmp.ne.s32.totalorder %s244, %s245
    %p254 = scmp.eq.s32.totalorder %s24, 0
    %p255 = por %p253, %p254
    %p256 = scmp.ne.s32.totalorder %s244, %s245
    %p257 = scmp.eq.s32.totalorder %s25, 1
    %p258 = por %p256, %p257
    %p260 = scmp.ne.s32.totalorder %s245, %s259
    %p261 = scmp.eq.s32.totalorder %s25, 0
    %p262 = por %p260, %p261
    %s264 = sadd.s32 %s263, 1
    %p267 = scmp.eq.s32.totalorder %s19, 1
    %p268 = scmp.ne.s32.totalorder %s263, %s265
    %p269 = scmp.eq.s32.totalorder %s19, 0
    %p270 = por %p268, %p269
    %p271 = scmp.ne.s32.totalorder %s263, %s265
    %p272 = scmp.eq.s32.totalorder %s24, 1
    %p273 = por %p271, %p272
    %p274 = scmp.ne.s32.totalorder %s265, %s266
    %p275 = scmp.eq.s32.totalorder %s24, 0
    %p276 = por %p274, %p275
    %p277 = scmp.ne.s32.totalorder %s265, %s266
    %p278 = scmp.eq.s32.totalorder %s25, 1
    %p279 = por %p277, %p278
    %p281 = scmp.ne.s32.totalorder %s266, %s280
    %p282 = scmp.eq.s32.totalorder %s25, 0
    %p283 = por %p281, %p282
    %s285 = sadd.s32 %s284, 1
    %p288 = scmp.eq.s32.totalorder %s19, 1
    %p289 = scmp.ne.s32.totalorder %s284, %s286
    %p290 = scmp.eq.s32.totalorder %s19, 0
    %p291 = por %p289, %p290
    %p292 = scmp.ne.s32.totalorder %s284, %s286
    %p293 = scmp.eq.s32.totalorder %s24, 1
    %p294 = por %p292, %p293
    %p295 = scmp.ne.s32.totalorder %s286, %s287
    %p296 = scmp.eq.s32.totalorder %s24, 0
    %p297 = por %p295, %p296
    %p298 = scmp.ne.s32.totalorder %s286, %s287
    %p299 = scmp.eq.s32.totalorder %s25, 1
    %p300 = por %p298, %p299
    %p302 = scmp.ne.s32.totalorder %s287, %s301
    %p303 = scmp.eq.s32.totalorder %s25, 0
    %p304 = por %p302, %p303
    %s305 = ssub.s32 %s19, %s26
    %p306 = scmp.eq.s32.totalorder %s305, 0
    %s308 = sadd.s32 %s307, 1
    %s309 = scalar_select %p306, %s307, %s308
    %p312 = pneg %p306
    %p313 = scmp.eq.s32.totalorder %s19, 1
    %p314 = por %p312, %p313
    %p315 = scmp.ne.s32.totalorder %s307, %s310
    %p316 = scmp.eq.s32.totalorder %s19, 0
    %p317 = por %p315, %p316
    %p318 = scmp.ne.s32.totalorder %s307, %s310
    %p319 = scmp.eq.s32.totalorder %s24, 1
    %p320 = por %p318, %p319
    %p321 = scmp.ne.s32.totalorder %s310, %s311
    %p322 = scmp.eq.s32.totalorder %s24, 0
    %p323 = por %p321, %p322
    %p324 = scmp.ne.s32.totalorder %s310, %s311
    %p325 = scmp.eq.s32.totalorder %s25, 1
    %p326 = por %p324, %p325
    %p328 = scmp.ne.s32.totalorder %s311, %s327
    %p329 = scmp.eq.s32.totalorder %s25, 0
    %p330 = por %p328, %p329
    %p331 = scmp.le.s32.totalorder 1, %s19
    %p332 = scmp.lt.s32.totalorder %s19, 3
    %p333 = pnand %p331, %p332
    %p334 = pneg %p333
    // Predicated region
    $region9: #{encoder_pet_forward.3} parent=5 // pred_check
      _
    $region10: #{encoder_pet_forward.3} parent=5 // pred_check_branch
      %336 = sbr.rel (%p333) target = $region12
    $region11: #{encoder_pet_forward.3} parent=5 // pred_region
      %s337 = ssub.s32 %s19, 1
      // Predicated region
      $region13: #{encoder_pet_forward.3} parent=11 // pred_check
        %p338 = pneg %p66
      $region14: #{encoder_pet_forward.3} parent=11 // pred_check_branch
        %340 = sbr.rel (%p338) target = $region16
      $region15: #{encoder_pet_forward.3} parent=11 // pred_region
        _
      $region16: #{encoder_pet_forward.3} parent=11 // pred_fallthru
        _
      // Predicated region
      $region17: #{encoder_pet_forward.3} parent=11 // pred_check
        %p341 = pneg %p87
      $region18: #{encoder_pet_forward.3} parent=11 // pred_check_branch
        %343 = sbr.rel (%p341) target = $region20
      $region19: #{encoder_pet_forward.3} parent=11 // pred_region
        _
      $region20: #{encoder_pet_forward.3} parent=11 // pred_fallthru
        _
      // Predicated region
      $region21: #{encoder_pet_forward.3} parent=11 // pred_check
        %p344 = pneg %p108
      $region22: #{encoder_pet_forward.3} parent=11 // pred_check_branch
        %346 = sbr.rel (%p344) target = $region24
      $region23: #{encoder_pet_forward.3} parent=11 // pred_region
        _
      $region24: #{encoder_pet_forward.3} parent=11 // pred_fallthru
        _
      // Predicated region
      $region25: #{encoder_pet_forward.3} parent=11 // pred_check
        %p347 = pneg %p129
      $region26: #{encoder_pet_forward.3} parent=11 // pred_check_branch
        %349 = sbr.rel (%p347) target = $region28
      $region27: #{encoder_pet_forward.3} parent=11 // pred_region
        _
      $region28: #{encoder_pet_forward.3} parent=11 // pred_fallthru
        _
      // Predicated region
      $region29: #{encoder_pet_forward.3} parent=11 // pred_check
        %p350 = pneg %p150
      $region30: #{encoder_pet_forward.3} parent=11 // pred_check_branch
        %352 = sbr.rel (%p350) target = $region32
      $region31: #{encoder_pet_forward.3} parent=11 // pred_region
        _
      $region32: #{encoder_pet_forward.3} parent=11 // pred_fallthru
        _
      // Predicated region
      $region33: #{encoder_pet_forward.3} parent=11 // pred_check
        %p353 = pneg %p171
      $region34: #{encoder_pet_forward.3} parent=11 // pred_check_branch
        %355 = sbr.rel (%p353) target = $region36
      $region35: #{encoder_pet_forward.3} parent=11 // pred_region
        _
      $region36: #{encoder_pet_forward.3} parent=11 // pred_fallthru
        _
      // Predicated region
      $region37: #{encoder_pet_forward.3} parent=11 // pred_check
        %p356 = pneg %p192
      $region38: #{encoder_pet_forward.3} parent=11 // pred_check_branch
        %358 = sbr.rel (%p356) target = $region40
      $region39: #{encoder_pet_forward.3} parent=11 // pred_region
        _
      $region40: #{encoder_pet_forward.3} parent=11 // pred_fallthru
        _
      // Predicated region
      $region41: #{encoder_pet_forward.3} parent=11 // pred_check
        %p359 = pneg %p213
      $region42: #{encoder_pet_forward.3} parent=11 // pred_check_branch
        %361 = sbr.rel (%p359) target = $region44
      $region43: #{encoder_pet_forward.3} parent=11 // pred_region
        _
      $region44: #{encoder_pet_forward.3} parent=11 // pred_fallthru
        _
      // Predicated region
      $region45: #{encoder_pet_forward.3} parent=11 // pred_check
        %p362 = pneg %p234
      $region46: #{encoder_pet_forward.3} parent=11 // pred_check_branch
        %364 = sbr.rel (%p362) target = $region48
      $region47: #{encoder_pet_forward.3} parent=11 // pred_region
        _
      $region48: #{encoder_pet_forward.3} parent=11 // pred_fallthru
        _
      // Predicated region
      $region49: #{encoder_pet_forward.3} parent=11 // pred_check
        %p365 = pneg %p255
      $region50: #{encoder_pet_forward.3} parent=11 // pred_check_branch
        %367 = sbr.rel (%p365) target = $region52
      $region51: #{encoder_pet_forward.3} parent=11 // pred_region
        _
      $region52: #{encoder_pet_forward.3} parent=11 // pred_fallthru
        _
      // Predicated region
      $region53: #{encoder_pet_forward.3} parent=11 // pred_check
        %p368 = pneg %p276
      $region54: #{encoder_pet_forward.3} parent=11 // pred_check_branch
        %370 = sbr.rel (%p368) target = $region56
      $region55: #{encoder_pet_forward.3} parent=11 // pred_region
        _
      $region56: #{encoder_pet_forward.3} parent=11 // pred_fallthru
        _
      // Predicated region
      $region57: #{encoder_pet_forward.3} parent=11 // pred_check
        %p371 = pneg %p297
      $region58: #{encoder_pet_forward.3} parent=11 // pred_check_branch
        %373 = sbr.rel (%p371) target = $region60
      $region59: #{encoder_pet_forward.3} parent=11 // pred_region
        _
      $region60: #{encoder_pet_forward.3} parent=11 // pred_fallthru
        _
    $region12: #{encoder_pet_forward.3} parent=5 // pred_fallthru
      _
    %p374 = scmp.lt.s32.totalorder %s19, 2
    // Predicated region
    $region61: #{encoder_pet_forward.3} parent=5 // pred_check
      %p375 = pneg %p374
    $region62: #{encoder_pet_forward.3} parent=5 // pred_check_branch
      %377 = sbr.rel (%p375) target = $region64
    $region63: #{encoder_pet_forward.3} parent=5 // pred_region
      // Predicated region
      $region65: #{encoder_pet_forward.3} parent=63 // pred_check
        %p378 = pneg %p39
      $region66: #{encoder_pet_forward.3} parent=63 // pred_check_branch
        %380 = sbr.rel (%p378) target = $region68
      $region67: #{encoder_pet_forward.3} parent=63 // pred_region
        %s381 = smul.u32 16, %s19
        %p382 = scmp.lt.s32.totalorder %s381, 31
        %s383 = scalar_select %p382, %s381, 31
        %s384 = smul.addr %s383, 8
        %s385 = scalar_lea.vmem %s0, %s384
        %s386 = smul.u32 16, %s19
      $region68: #{encoder_pet_forward.3} parent=63 // pred_fallthru
        _
    $region64: #{encoder_pet_forward.3} parent=5 // pred_fallthru
      _
    %p387 = scmp.le.s32.totalorder 1, %s19
    %p388 = scmp.lt.s32.totalorder %s19, 3
    %p389 = pnand %p387, %p388
    %p390 = pneg %p389
    // Predicated region
    $region69: #{encoder_pet_forward.3} parent=5 // pred_check
      _
    $region70: #{encoder_pet_forward.3} parent=5 // pred_check_branch
      %392 = sbr.rel (%p389) target = $region72
    $region71: #{encoder_pet_forward.3} parent=5 // pred_region
      %s393 = ssub.s32 %s19, 1
      %s394 = smul.u32 16, %s24
      %p395 = scmp.lt.s32.totalorder %s394, 31
      %s396 = scalar_select %p395, %s394, 31
      %s397 = smul.addr %s396, 8
      %s398 = scalar_lea.vmem %s0, %s397
      %p399 = pneg %p45
      %p400 = pneg %p42
      %p401 = pneg %p66
      %p402 = pneg %p63
      %p403 = pneg %p87
      %p404 = pneg %p84
      %p405 = pneg %p108
      %p406 = pneg %p105
      %p407 = pneg %p129
      %p408 = pneg %p126
      %p409 = pneg %p150
      %p410 = pneg %p147
      %p411 = pneg %p171
      %p412 = pneg %p168
      %p413 = pneg %p192
      %p414 = pneg %p189
      %p415 = pneg %p213
      %p416 = pneg %p210
      %p417 = pneg %p234
      %p418 = pneg %p231
      %p419 = pneg %p255
      %p420 = pneg %p252
      %p421 = pneg %p276
      %p422 = pneg %p273
      %p423 = pneg %p297
      %p424 = pneg %p294
      %p425 = pneg %p323
      %p426 = pneg %p320
      %s427 = smul.u32 16, %s24
      %p428 = scmp.lt.s32.totalorder %s427, 31
      %s429 = scalar_select %p428, %s427, 31
      %s430 = smul.addr %s429, 8
      %s431 = scalar_lea.vmem %s13, %s430
      %s432 = smul.u32 16, %s24
      %p433 = scmp.lt.s32.totalorder %s432, 31
      %s434 = scalar_select %p433, %s432, 31
      %s435 = smul.addr %s434, 8
      %s436 = scalar_lea.vmem %s0, %s435
      %s437 = smul.u32 16, %s24
      %s438 = smul.u32 16, %s24
      %p439 = scmp.lt.s32.totalorder %s438, 31
      %s440 = scalar_select %p439, %s438, 31
      %s441 = smul.addr %s440, 8
      %s442 = scalar_lea.vmem %s13, %s441
      %s443 = smul.u32 16, %s24
      %v445 = vld [vmem:[%s3] sm:$0xf]
      %v446 = vld [vmem:[%s3 + $0x4] sm:$0xf]
      %v449 = vlaneseq
      %v450 = vshrl.u32 %v449, 7
      %v451 = vsub.s32 0, %v450
      %v452 = vrot.slane %v445, %v451
      %v453 = vlaneseq
      %v454 = vshrl.u32 %v453, 7
      %v455 = vsub.s32 1, %v454
      %v456 = vrot.slane %v445, %v455
      %v457 = vlaneseq
      %v458 = vshrl.u32 %v457, 7
      %v459 = vsub.s32 2, %v458
      %v460 = vrot.slane %v445, %v459
      %v461 = vlaneseq
      %v462 = vshrl.u32 %v461, 7
      %v463 = vsub.s32 3, %v462
      %v464 = vrot.slane %v445, %v463
      %v465 = vlaneseq
      %v466 = vshrl.u32 %v465, 7
      %v467 = vsub.s32 0, %v466
      %v468 = vrot.slane %v446, %v467
      %v469 = vlaneseq
      %v470 = vshrl.u32 %v469, 7
      %v471 = vsub.s32 1, %v470
      %v472 = vrot.slane %v446, %v471
      %v473 = vlaneseq
      %v474 = vshrl.u32 %v473, 7
      %v475 = vsub.s32 2, %v474
      %v476 = vrot.slane %v446, %v475
      %v477 = vlaneseq
      %v478 = vshrl.u32 %v477, 7
      %v479 = vsub.s32 3, %v478
      %v480 = vrot.slane %v446, %v479
      %vm489 = vcmask 1040384
      %v490 = vsel %vm489, %v452, 0.0
      %v491 = vsel %vm489, %v468, 0.0
      %v492 = vadd.f32 %v490, %v491
      %v493 = vsel %vm489, %v456, 0.0
      %v494 = vsel %vm489, %v472, 0.0
      %v495 = vadd.f32 %v493, %v494
      %v496 = vsel %vm489, %v460, 0.0
      %v497 = vsel %vm489, %v476, 0.0
      %v498 = vadd.f32 %v496, %v497
      %v499 = vsel %vm489, %v464, 0.0
      %v500 = vsel %vm489, %v480, 0.0
      %v501 = vadd.f32 %v499, %v500
      %v502 = vld [vmem:[%s4] sm:$0xf]
      %v503 = vld [vmem:[%s4 + $0x4] sm:$0xf]
      %v506 = vlaneseq
      %v507 = vshrl.u32 %v506, 7
      %v508 = vsub.s32 0, %v507
      %v509 = vrot.slane %v502, %v508
      %v510 = vlaneseq
      %v511 = vshrl.u32 %v510, 7
      %v512 = vsub.s32 1, %v511
      %v513 = vrot.slane %v502, %v512
      %v514 = vlaneseq
      %v515 = vshrl.u32 %v514, 7
      %v516 = vsub.s32 2, %v515
      %v517 = vrot.slane %v502, %v516
      %v518 = vlaneseq
      %v519 = vshrl.u32 %v518, 7
      %v520 = vsub.s32 3, %v519
      %v521 = vrot.slane %v502, %v520
      %v522 = vlaneseq
      %v523 = vshrl.u32 %v522, 7
      %v524 = vsub.s32 0, %v523
      %v525 = vrot.slane %v503, %v524
      %v526 = vlaneseq
      %v527 = vshrl.u32 %v526, 7
      %v528 = vsub.s32 1, %v527
      %v529 = vrot.slane %v503, %v528
      %v530 = vlaneseq
      %v531 = vshrl.u32 %v530, 7
      %v532 = vsub.s32 2, %v531
      %v533 = vrot.slane %v503, %v532
      %v534 = vlaneseq
      %v535 = vshrl.u32 %v534, 7
      %v536 = vsub.s32 3, %v535
      %v537 = vrot.slane %v503, %v536
      %v546 = vsel %vm489, %v509, 0.0
      %v547 = vsel %vm489, %v525, 0.0
      %v548 = vadd.f32 %v546, %v547
      %v549 = vsel %vm489, %v513, 0.0
      %v550 = vsel %vm489, %v529, 0.0
      %v551 = vadd.f32 %v549, %v550
      %v552 = vsel %vm489, %v517, 0.0
      %v553 = vsel %vm489, %v533, 0.0
      %v554 = vadd.f32 %v552, %v553
      %v555 = vsel %vm489, %v521, 0.0
      %v556 = vsel %vm489, %v537, 0.0
      %v557 = vadd.f32 %v555, %v556
      %v558 = vmul.f32 %v492, 0.00390625
      %v559 = vmul.f32 %v495, 0.00390625
      %v560 = vmul.f32 %v498, 0.00390625
      %v561 = vmul.f32 %v501, 0.00390625
      %v562 = vmul.f32 %v548, 0.00390625
      %v563 = vmul.f32 %v551, 0.00390625
      %v564 = vmul.f32 %v554, 0.00390625
      %v565 = vmul.f32 %v557, 0.00390625
      %v566 = vmul.f32 %v558, %v558
      %v567 = vmul.f32 %v559, %v559
      %v568 = vmul.f32 %v560, %v560
      %v569 = vmul.f32 %v561, %v561
      %v570 = vsub.f32 %v562, %v566
      %v571 = vsub.f32 %v563, %v567
      %v572 = vsub.f32 %v564, %v568
      %v573 = vsub.f32 %v565, %v569
      %v574 = vmax.f32 %v570, 0.0
      %v575 = vmax.f32 %v571, 0.0
      %v576 = vmax.f32 %v572, 0.0
      %v577 = vmax.f32 %v573, 0.0
      %v578 = vld [vmem:[%s5] sm:$0xf]
      %v579 = vadd.f32 %v574, 1e-05
      %v580 = vadd.f32 %v575, 1e-05
      %v581 = vadd.f32 %v576, 1e-05
      %v582 = vadd.f32 %v577, 1e-05
      %v583 = vrsqrt.pop %v579
      %v584 = vrsqrt.pop %v580
      %v585 = vrsqrt.pop %v581
      %v586 = vrsqrt.pop %v582
      %v591 = vcombine.low %v583, %v584
      %v592 = vcombine.low %v585, %v586
      %v594 = vunpack.c.l.s4 1966171168
      %v595 = vunpack.c.0.s8 %v594
      %v596 = vlaneseq
      %v597 = vshrl.u32 %v596, 7
      %v598 = vsub.s32 %v595, %v597
      %v599 = vrot.slane %v591, %v598
      %v601 = vunpack.c.l.s4 1966171168
      %v602 = vunpack.c.0.s8 %v601
      %v603 = vlaneseq
      %v604 = vshrl.u32 %v603, 7
      %v605 = vsub.s32 %v602, %v604
      %v606 = vrot.slane %v592, %v605
      %v607 = vcombine.low %v599, %v606
      %v609 = vunpack.c.l.s4 1966171168
      %v610 = vunpack.c.0.s8 %v609
      %v611 = vlaneseq
      %v612 = vshrl.u32 %v611, 7
      %v613 = vsub.s32 %v610, %v612
      %v614 = vrot.slane %v607, %v613
      %v616 = vmul.f32 %v578, %v614
      %v617 = vld [vmem:[%s6] sm:$0xf]
      %v619 = vlaneseq
      %v620 = vshrl.u32 %v619, 7
      %v621 = vsub.s32 0, %v620
      %v622 = vrot.slane %v616, %v621
      %v623 = vlaneseq
      %v624 = vshrl.u32 %v623, 7
      %v625 = vsub.s32 1, %v624
      %v626 = vrot.slane %v616, %v625
      %v627 = vlaneseq
      %v628 = vshrl.u32 %v627, 7
      %v629 = vsub.s32 2, %v628
      %v630 = vrot.slane %v616, %v629
      %v631 = vlaneseq
      %v632 = vshrl.u32 %v631, 7
      %v633 = vsub.s32 3, %v632
      %v634 = vrot.slane %v616, %v633
      %v639 = vmul.f32 %v558, %v622
      %v640 = vmul.f32 %v559, %v626
      %v641 = vmul.f32 %v560, %v630
      %v642 = vmul.f32 %v561, %v634
      %v647 = vcombine.low %v639, %v640
      %v648 = vcombine.low %v641, %v642
      %v650 = vunpack.c.l.s4 1966171168
      %v651 = vunpack.c.0.s8 %v650
      %v652 = vlaneseq
      %v653 = vshrl.u32 %v652, 7
      %v654 = vsub.s32 %v651, %v653
      %v655 = vrot.slane %v647, %v654
      %v657 = vunpack.c.l.s4 1966171168
      %v658 = vunpack.c.0.s8 %v657
      %v659 = vlaneseq
      %v660 = vshrl.u32 %v659, 7
      %v661 = vsub.s32 %v658, %v660
      %v662 = vrot.slane %v648, %v661
      %v663 = vcombine.low %v655, %v662
      %v665 = vunpack.c.l.s4 1966171168
      %v666 = vunpack.c.0.s8 %v665
      %v667 = vlaneseq
      %v668 = vshrl.u32 %v667, 7
      %v669 = vsub.s32 %v666, %v668
      %v670 = vrot.slane %v663, %v669
      %v672 = vsub.f32 %v617, %v670
      %v673 = vld [vmem:[%s436] sm:$0xff]
      %v674 = vld [vmem:[%s436 + $0x8] sm:$0xff]
      %v675 = vld [vmem:[%s436 + $0x10] sm:$0xff]
      %v676 = vld [vmem:[%s436 + $0x18] sm:$0xff]
      %v677 = vld [vmem:[%s436 + $0x20] sm:$0xff]
      %v678 = vld [vmem:[%s436 + $0x28] sm:$0xff]
      %v679 = vld [vmem:[%s436 + $0x30] sm:$0xff]
      %v680 = vld [vmem:[%s436 + $0x38] sm:$0xff]
      %v681 = vld [vmem:[%s436 + $0x40] sm:$0xff]
      %v682 = vld [vmem:[%s436 + $0x48] sm:$0xff]
      %v683 = vld [vmem:[%s436 + $0x50] sm:$0xff]
      %v684 = vld [vmem:[%s436 + $0x58] sm:$0xff]
      %v685 = vld [vmem:[%s436 + $0x60] sm:$0xff]
      %v686 = vld [vmem:[%s436 + $0x68] sm:$0xff]
      %v687 = vld [vmem:[%s436 + $0x70] sm:$0xff]
      %v688 = vld [vmem:[%s436 + $0x78] sm:$0xff]
      %v689 = vpack.c.bf16 %v674, %v673
      %v690 = vpack.c.bf16 %v676, %v675
      %v691 = vpack.c.bf16 %v678, %v677
      %v692 = vpack.c.bf16 %v680, %v679
      %v693 = vpack.c.bf16 %v682, %v681
      %v694 = vpack.c.bf16 %v684, %v683
      %v695 = vpack.c.bf16 %v686, %v685
      %v696 = vpack.c.bf16 %v688, %v687
      %v697 = vld [vmem:[%s1] sm:$0xff]
      %v698 = vld [vmem:[%s1 + $0x8] sm:$0xff]
      %v699 = vld [vmem:[%s1 + $0x10] sm:$0xff]
      %v700 = vld [vmem:[%s1 + $0x18] sm:$0xff]
      %v701 = vld [vmem:[%s1 + $0x20] sm:$0xff]
      %v702 = vld [vmem:[%s1 + $0x28] sm:$0xff]
      %v703 = vld [vmem:[%s1 + $0x30] sm:$0xff]
      %v704 = vld [vmem:[%s1 + $0x38] sm:$0xff]
      %v705 = vld [vmem:[%s1 + $0x40] sm:$0xff]
      %v706 = vld [vmem:[%s1 + $0x48] sm:$0xff]
      %v707 = vld [vmem:[%s1 + $0x50] sm:$0xff]
      %v708 = vld [vmem:[%s1 + $0x58] sm:$0xff]
      %v709 = vld [vmem:[%s1 + $0x60] sm:$0xff]
      %v710 = vld [vmem:[%s1 + $0x68] sm:$0xff]
      %v711 = vld [vmem:[%s1 + $0x70] sm:$0xff]
      %v712 = vld [vmem:[%s1 + $0x78] sm:$0xff]
      %v713 = vld [vmem:[%s2] sm:$0xf]
      %v715 = vlaneseq
      %v716 = vshrl.u32 %v715, 7
      %v717 = vsub.s32 0, %v716
      %v718 = vrot.slane %v713, %v717
      %v719 = vlaneseq
      %v720 = vshrl.u32 %v719, 7
      %v721 = vsub.s32 1, %v720
      %v722 = vrot.slane %v713, %v721
      %v723 = vlaneseq
      %v724 = vshrl.u32 %v723, 7
      %v725 = vsub.s32 2, %v724
      %v726 = vrot.slane %v713, %v725
      %v727 = vlaneseq
      %v728 = vshrl.u32 %v727, 7
      %v729 = vsub.s32 3, %v728
      %v730 = vrot.slane %v713, %v729
      %v751 = vunpack.c.l.b16 %v697
      %v752 = vunpack.c.h.b16 %v697
      %v753 = vunpack.c.l.b16 %v698
      %v754 = vunpack.c.h.b16 %v698
      %v755 = vunpack.c.l.b16 %v699
      %v756 = vunpack.c.h.b16 %v699
      %v757 = vunpack.c.l.b16 %v700
      %v758 = vunpack.c.h.b16 %v700
      %v759 = vunpack.c.l.b16 %v701
      %v760 = vunpack.c.h.b16 %v701
      %v761 = vunpack.c.l.b16 %v702
      %v762 = vunpack.c.h.b16 %v702
      %v763 = vunpack.c.l.b16 %v703
      %v764 = vunpack.c.h.b16 %v703
      %v765 = vunpack.c.l.b16 %v704
      %v766 = vunpack.c.h.b16 %v704
      %v767 = vunpack.c.l.b16 %v705
      %v768 = vunpack.c.h.b16 %v705
      %v769 = vunpack.c.l.b16 %v706
      %v770 = vunpack.c.h.b16 %v706
      %v771 = vunpack.c.l.b16 %v707
      %v772 = vunpack.c.h.b16 %v707
      %v773 = vunpack.c.l.b16 %v708
      %v774 = vunpack.c.h.b16 %v708
      %v775 = vunpack.c.l.b16 %v709
      %v776 = vunpack.c.h.b16 %v709
      %v777 = vunpack.c.l.b16 %v710
      %v778 = vunpack.c.h.b16 %v710
      %v779 = vunpack.c.l.b16 %v711
      %v780 = vunpack.c.h.b16 %v711
      %v781 = vunpack.c.l.b16 %v712
      %v782 = vunpack.c.h.b16 %v712
      %v783 = vpack.c.b16 %v755, %v751
      %v784 = vpack.c.b16 %v756, %v752
      %v785 = vpack.c.b16 %v757, %v753
      %v786 = vpack.c.b16 %v758, %v754
      %v787 = vpack.c.b16 %v763, %v759
      %v788 = vpack.c.b16 %v764, %v760
      %v789 = vpack.c.b16 %v765, %v761
      %v790 = vpack.c.b16 %v766, %v762
      %v791 = vpack.c.b16 %v771, %v767
      %v792 = vpack.c.b16 %v772, %v768
      %v793 = vpack.c.b16 %v773, %v769
      %v794 = vpack.c.b16 %v774, %v770
      %v795 = vpack.c.b16 %v779, %v775
      %v796 = vpack.c.b16 %v780, %v776
      %v797 = vpack.c.b16 %v781, %v777
      %v798 = vpack.c.b16 %v782, %v778
      %vm815 = vcmask 523264
      %v817 = vsel %vm815, %v689, 0
      %v820 = vsel %vm815, %v690, 0
      %v823 = vsel %vm815, %v691, 0
      %v826 = vsel %vm815, %v692, 0
      %v829 = vsel %vm815, %v693, 0
      %v832 = vsel %vm815, %v694, 0
      %v835 = vsel %vm815, %v695, 0
      %v838 = vsel %vm815, %v696, 0
      %840 = vmatprep.subr.bf16.mxu0 %v784
      %841 = vmatpush1.bf16.msra.mxu0 %v783
      %842 = vmatprep.subr.bf16.mxu0 %v788
      %843 = vmatpush1.bf16.msra.mxu0 %v787
      %844 = vmatprep.subr.bf16.mxu0 %v792
      %845 = vmatpush1.bf16.msra.mxu0 %v791
      %846 = vmatprep.subr.bf16.mxu0 %v796
      %847 = vmatpush1.bf16.msra.mxu0 %v795
      %848 = vmatprep.subr.bf16.mxu0 0
      %849 = vmatpush1.bf16.msra.mxu0 0
      %850 = vmatprep.subr.bf16.mxu0 0
      %851 = vmatpush1.bf16.msra.mxu0 0
      %852 = vmatprep.subr.bf16.mxu0 0
      %853 = vmatpush1.bf16.msra.mxu0 0
      %854 = vmatprep.subr.bf16.mxu0 0
      %855 = vmatpush1.bf16.msra.mxu0 0
      %856 = vmatprep.subr.bf16.mxu0 0
      %857 = vmatpush1.bf16.msra.mxu0 0
      %858 = vmatprep.subr.bf16.mxu0 0
      %859 = vmatpush1.bf16.msra.mxu0 0
      %860 = vmatprep.subr.bf16.mxu0 0
      %861 = vmatpush1.bf16.msra.mxu0 0
      %862 = vmatprep.subr.bf16.mxu0 0
      %863 = vmatpush1.bf16.msra.mxu0 0
      %864 = vmatprep.subr.bf16.mxu0 0
      %865 = vmatpush1.bf16.msra.mxu0 0
      %866 = vmatprep.subr.bf16.mxu0 0
      %867 = vmatpush1.bf16.msra.mxu0 0
      %868 = vmatprep.subr.bf16.mxu0 0
      %869 = vmatpush1.bf16.msra.mxu0 0
      %870 = vmatprep.subr.bf16.mxu0 0
      %871 = vmatpush1.bf16.msra.mxu0 0
      %872 = vmatprep.mubr.bf16.mxu0 0
      %873 = vmatmul.mubr.bf16.gmra.mrb[0].mxu0 %v817
      %v874 = vpop.f32.mrb[0].mxu0
      %v875 = vadd.f32 %v718, %v874
      %v876 = vpop.f32.mrb[0].mxu0
      %v877 = vadd.f32 %v722, %v876
      %v878 = vpop.f32.mrb[0].mxu0
      %v879 = vadd.f32 %v718, %v878
      %v880 = vpop.f32.mrb[0].mxu0
      %v881 = vadd.f32 %v722, %v880
      %882 = vmatprep.mubr.bf16.mxu0 0
      %883 = vmatmul.mubr.bf16.gmra.mrb[0].mxu0 %v820
      %v884 = vpop.f32.mrb[0].mxu0
      %v885 = vadd.f32 %v718, %v884
      %v886 = vpop.f32.mrb[0].mxu0
      %v887 = vadd.f32 %v722, %v886
      %v888 = vpop.f32.mrb[0].mxu0
      %v889 = vadd.f32 %v718, %v888
      %v890 = vpop.f32.mrb[0].mxu0
      %v891 = vadd.f32 %v722, %v890
      %892 = vmatprep.mubr.bf16.mxu0 0
      %893 = vmatmul.mubr.bf16.gmra.mrb[0].mxu0 %v823
      %v894 = vpop.f32.mrb[0].mxu0
      %v895 = vadd.f32 %v718, %v894
      %v896 = vpop.f32.mrb[0].mxu0
      %v897 = vadd.f32 %v722, %v896
      %v898 = vpop.f32.mrb[0].mxu0
      %v899 = vadd.f32 %v718, %v898
      %v900 = vpop.f32.mrb[0].mxu0
      %v901 = vadd.f32 %v722, %v900
      %902 = vmatprep.mubr.bf16.mxu0 0
      %903 = vmatmul.mubr.bf16.gmra.mrb[0].mxu0 %v826
      %v904 = vpop.f32.mrb[0].mxu0
      %v905 = vadd.f32 %v718, %v904
      %v906 = vpop.f32.mrb[0].mxu0
      %v907 = vadd.f32 %v722, %v906
      %v908 = vpop.f32.mrb[0].mxu0
      %v909 = vadd.f32 %v718, %v908
      %v910 = vpop.f32.mrb[0].mxu0
      %v911 = vadd.f32 %v722, %v910
      %912 = vmatprep.mubr.bf16.mxu0 0
      %913 = vmatmul.mubr.bf16.gmra.mrb[0].mxu0 %v829
      %v914 = vpop.f32.mrb[0].mxu0
      %v915 = vadd.f32 %v718, %v914
      %v916 = vpop.f32.mrb[0].mxu0
      %v917 = vadd.f32 %v722, %v916
      %v918 = vpop.f32.mrb[0].mxu0
      %v919 = vadd.f32 %v718, %v918
      %v920 = vpop.f32.mrb[0].mxu0
      %v921 = vadd.f32 %v722, %v920
      %922 = vmatprep.mubr.bf16.mxu0 0
      %923 = vmatmul.mubr.bf16.gmra.mrb[0].mxu0 %v832
      %v924 = vpop.f32.mrb[0].mxu0
      %v925 = vadd.f32 %v718, %v924
      %v926 = vpop.f32.mrb[0].mxu0
      %v927 = vadd.f32 %v722, %v926
      %v928 = vpop.f32.mrb[0].mxu0
      %v929 = vadd.f32 %v718, %v928
      %v930 = vpop.f32.mrb[0].mxu0
      %v931 = vadd.f32 %v722, %v930
      %932 = vmatprep.mubr.bf16.mxu0 0
      %933 = vmatmul.mubr.bf16.gmra.mrb[0].mxu0 %v835
      %v934 = vpop.f32.mrb[0].mxu0
      %v935 = vadd.f32 %v718, %v934
      %v936 = vpop.f32.mrb[0].mxu0
      %v937 = vadd.f32 %v722, %v936
      %v938 = vpop.f32.mrb[0].mxu0
      %v939 = vadd.f32 %v718, %v938
      %v940 = vpop.f32.mrb[0].mxu0
      %v941 = vadd.f32 %v722, %v940
      %942 = vmatprep.mubr.bf16.mxu0 0
      %943 = vmatmul.mubr.bf16.gmra.mrb[0].mxu0 %v838
      %v944 = vpop.f32.mrb[0].mxu0
      %v945 = vadd.f32 %v718, %v944
      %v946 = vpop.f32.mrb[0].mxu0
      %v947 = vadd.f32 %v722, %v946
      %v948 = vpop.f32.mrb[0].mxu0
      %v949 = vadd.f32 %v718, %v948
      %v950 = vpop.f32.mrb[0].mxu0
      %v951 = vadd.f32 %v722, %v950
      %952 = vdwg.mxu0
      %953 = vmatprep.subr.bf16.mxu0 %v786
      %954 = vmatpush1.bf16.msra.mxu0 %v785
      %955 = vmatprep.subr.bf16.mxu0 %v790
      %956 = vmatpush1.bf16.msra.mxu0 %v789
      %957 = vmatprep.subr.bf16.mxu0 %v794
      %958 = vmatpush1.bf16.msra.mxu0 %v793
      %959 = vmatprep.subr.bf16.mxu0 %v798
      %960 = vmatpush1.bf16.msra.mxu0 %v797
      %961 = vmatprep.subr.bf16.mxu0 0
      %962 = vmatpush1.bf16.msra.mxu0 0
      %963 = vmatprep.subr.bf16.mxu0 0
      %964 = vmatpush1.bf16.msra.mxu0 0
      %965 = vmatprep.subr.bf16.mxu0 0
      %966 = vmatpush1.bf16.msra.mxu0 0
      %967 = vmatprep.subr.bf16.mxu0 0
      %968 = vmatpush1.bf16.msra.mxu0 0
      %969 = vmatprep.subr.bf16.mxu0 0
      %970 = vmatpush1.bf16.msra.mxu0 0
      %971 = vmatprep.subr.bf16.mxu0 0
      %972 = vmatpush1.bf16.msra.mxu0 0
      %973 = vmatprep.subr.bf16.mxu0 0
      %974 = vmatpush1.bf16.msra.mxu0 0
      %975 = vmatprep.subr.bf16.mxu0 0
      %976 = vmatpush1.bf16.msra.mxu0 0
      %977 = vmatprep.subr.bf16.mxu0 0
      %978 = vmatpush1.bf16.msra.mxu0 0
      %979 = vmatprep.subr.bf16.mxu0 0
      %980 = vmatpush1.bf16.msra.mxu0 0
      %981 = vmatprep.subr.bf16.mxu0 0
      %982 = vmatpush1.bf16.msra.mxu0 0
      %983 = vmatprep.subr.bf16.mxu0 0
      %984 = vmatpush1.bf16.msra.mxu0 0
      %985 = vmatprep.mubr.bf16.mxu0 0
      %986 = vmatmul.mubr.bf16.gmra.mrb[0].mxu0 %v817
      %v987 = vpop.f32.mrb[0].mxu0
      %v988 = vadd.f32 %v726, %v987
      %v989 = vpop.f32.mrb[0].mxu0
      %v990 = vadd.f32 %v730, %v989
      %v991 = vpop.f32.mrb[0].mxu0
      %v992 = vadd.f32 %v726, %v991
      %v993 = vpop.f32.mrb[0].mxu0
      %v994 = vadd.f32 %v730, %v993
      %995 = vmatprep.mubr.bf16.mxu0 0
      %996 = vmatmul.mubr.bf16.gmra.mrb[0].mxu0 %v820
      %v997 = vpop.f32.mrb[0].mxu0
      %v998 = vadd.f32 %v726, %v997
      %v999 = vpop.f32.mrb[0].mxu0
      %v1000 = vadd.f32 %v730, %v999
      %v1001 = vpop.f32.mrb[0].mxu0
      %v1002 = vadd.f32 %v726, %v1001
      %v1003 = vpop.f32.mrb[0].mxu0
      %v1004 = vadd.f32 %v730, %v1003
      %1005 = vmatprep.mubr.bf16.mxu0 0
      %1006 = vmatmul.mubr.bf16.gmra.mrb[0].mxu0 %v823
      %v1007 = vpop.f32.mrb[0].mxu0
      %v1008 = vadd.f32 %v726, %v1007
      %v1009 = vpop.f32.mrb[0].mxu0
      %v1010 = vadd.f32 %v730, %v1009
      %v1011 = vpop.f32.mrb[0].mxu0
      %v1012 = vadd.f32 %v726, %v1011
      %v1013 = vpop.f32.mrb[0].mxu0
      %v1014 = vadd.f32 %v730, %v1013
      %1015 = vmatprep.mubr.bf16.mxu0 0
      %1016 = vmatmul.mubr.bf16.gmra.mrb[0].mxu0 %v826
      %v1017 = vpop.f32.mrb[0].mxu0
      %v1018 = vadd.f32 %v726, %v1017
      %v1019 = vpop.f32.mrb[0].mxu0
      %v1020 = vadd.f32 %v730, %v1019
      %v1021 = vpop.f32.mrb[0].mxu0
      %v1022 = vadd.f32 %v726, %v1021
      %v1023 = vpop.f32.mrb[0].mxu0
      %v1024 = vadd.f32 %v730, %v1023
      %1025 = vmatprep.mubr.bf16.mxu0 0
      %1026 = vmatmul.mubr.bf16.gmra.mrb[0].mxu0 %v829
      %v1027 = vpop.f32.mrb[0].mxu0
      %v1028 = vadd.f32 %v726, %v1027
      %v1029 = vpop.f32.mrb[0].mxu0
      %v1030 = vadd.f32 %v730, %v1029
      %v1031 = vpop.f32.mrb[0].mxu0
      %v1032 = vadd.f32 %v726, %v1031
      %v1033 = vpop.f32.mrb[0].mxu0
      %v1034 = vadd.f32 %v730, %v1033
      %1035 = vmatprep.mubr.bf16.mxu0 0
      %1036 = vmatmul.mubr.bf16.gmra.mrb[0].mxu0 %v832
      %v1037 = vpop.f32.mrb[0].mxu0
      %v1038 = vadd.f32 %v726, %v1037
      %v1039 = vpop.f32.mrb[0].mxu0
      %v1040 = vadd.f32 %v730, %v1039
      %v1041 = vpop.f32.mrb[0].mxu0
      %v1042 = vadd.f32 %v726, %v1041
      %v1043 = vpop.f32.mrb[0].mxu0
      %v1044 = vadd.f32 %v730, %v1043
      %1045 = vmatprep.mubr.bf16.mxu0 0
      %1046 = vmatmul.mubr.bf16.gmra.mrb[0].mxu0 %v835
      %v1047 = vpop.f32.mrb[0].mxu0
      %v1048 = vadd.f32 %v726, %v1047
      %v1049 = vpop.f32.mrb[0].mxu0
      %v1050 = vadd.f32 %v730, %v1049
      %v1051 = vpop.f32.mrb[0].mxu0
      %v1052 = vadd.f32 %v726, %v1051
      %v1053 = vpop.f32.mrb[0].mxu0
      %v1054 = vadd.f32 %v730, %v1053
      %1055 = vmatprep.mubr.bf16.mxu0 0
      %1056 = vmatmul.mubr.bf16.gmra.mrb[0].mxu0 %v838
      %v1057 = vpop.f32.mrb[0].mxu0
      %v1058 = vadd.f32 %v726, %v1057
      %v1059 = vpop.f32.mrb[0].mxu0
      %v1060 = vadd.f32 %v730, %v1059
      %v1061 = vpop.f32.mrb[0].mxu0
      %v1062 = vadd.f32 %v726, %v1061
      %v1063 = vpop.f32.mrb[0].mxu0
      %v1064 = vadd.f32 %v730, %v1063
      %1065 = vdwg.mxu0
      %v1066 = vmul.f32 %v875, %v622
      %v1067 = vmul.f32 %v877, %v626
      %v1068 = vmul.f32 %v988, %v630
      %v1069 = vmul.f32 %v990, %v634
      %v1070 = vmul.f32 %v879, %v622
      %v1071 = vmul.f32 %v881, %v626
      %v1072 = vmul.f32 %v992, %v630
      %v1073 = vmul.f32 %v994, %v634
      %v1074 = vmul.f32 %v885, %v622
      %v1075 = vmul.f32 %v887, %v626
      %v1076 = vmul.f32 %v998, %v630
      %v1077 = vmul.f32 %v1000, %v634
      %v1078 = vmul.f32 %v889, %v622
      %v1079 = vmul.f32 %v891, %v626
      %v1080 = vmul.f32 %v1002, %v630
      %v1081 = vmul.f32 %v1004, %v634
      %v1082 = vmul.f32 %v895, %v622
      %v1083 = vmul.f32 %v897, %v626
      %v1084 = vmul.f32 %v1008, %v630
      %v1085 = vmul.f32 %v1010, %v634
      %v1086 = vmul.f32 %v899, %v622
      %v1087 = vmul.f32 %v901, %v626
      %v1088 = vmul.f32 %v1012, %v630
      %v1089 = vmul.f32 %v1014, %v634
      %v1090 = vmul.f32 %v905, %v622
      %v1091 = vmul.f32 %v907, %v626
      %v1092 = vmul.f32 %v1018, %v630
      %v1093 = vmul.f32 %v1020, %v634
      %v1094 = vmul.f32 %v909, %v622
      %v1095 = vmul.f32 %v911, %v626
      %v1096 = vmul.f32 %v1022, %v630
      %v1097 = vmul.f32 %v1024, %v634
      %v1098 = vmul.f32 %v915, %v622
      %v1099 = vmul.f32 %v917, %v626
      %v1100 = vmul.f32 %v1028, %v630
      %v1101 = vmul.f32 %v1030, %v634
      %v1102 = vmul.f32 %v919, %v622
      %v1103 = vmul.f32 %v921, %v626
      %v1104 = vmul.f32 %v1032, %v630
      %v1105 = vmul.f32 %v1034, %v634
      %v1106 = vmul.f32 %v925, %v622
      %v1107 = vmul.f32 %v927, %v626
      %v1108 = vmul.f32 %v1038, %v630
      %v1109 = vmul.f32 %v1040, %v634
      %v1110 = vmul.f32 %v929, %v622
      %v1111 = vmul.f32 %v931, %v626
      %v1112 = vmul.f32 %v1042, %v630
      %v1113 = vmul.f32 %v1044, %v634
      %v1114 = vmul.f32 %v935, %v622
      %v1115 = vmul.f32 %v937, %v626
      %v1116 = vmul.f32 %v1048, %v630
      %v1117 = vmul.f32 %v1050, %v634
      %v1118 = vmul.f32 %v939, %v622
      %v1119 = vmul.f32 %v941, %v626
      %v1120 = vmul.f32 %v1052, %v630
      %v1121 = vmul.f32 %v1054, %v634
      %v1122 = vmul.f32 %v945, %v622
      %v1123 = vmul.f32 %v947, %v626
      %v1124 = vmul.f32 %v1058, %v630
      %v1125 = vmul.f32 %v1060, %v634
      %v1126 = vmul.f32 %v949, %v622
      %v1127 = vmul.f32 %v951, %v626
      %v1128 = vmul.f32 %v1062, %v630
      %v1129 = vmul.f32 %v1064, %v634
      %v1131 = vlaneseq
      %v1132 = vshrl.u32 %v1131, 7
      %v1133 = vsub.s32 0, %v1132
      %v1134 = vrot.slane %v672, %v1133
      %v1135 = vlaneseq
      %v1136 = vshrl.u32 %v1135, 7
      %v1137 = vsub.s32 1, %v1136
      %v1138 = vrot.slane %v672, %v1137
      %v1139 = vlaneseq
      %v1140 = vshrl.u32 %v1139, 7
      %v1141 = vsub.s32 2, %v1140
      %v1142 = vrot.slane %v672, %v1141
      %v1143 = vlaneseq
      %v1144 = vshrl.u32 %v1143, 7
      %v1145 = vsub.s32 3, %v1144
      %v1146 = vrot.slane %v672, %v1145
      %v1151 = vadd.f32 %v1066, %v1134
      %v1152 = vadd.f32 %v1067, %v1138
      %v1153 = vadd.f32 %v1068, %v1142
      %v1154 = vadd.f32 %v1069, %v1146
      %v1155 = vadd.f32 %v1070, %v1134
      %v1156 = vadd.f32 %v1071, %v1138
      %v1157 = vadd.f32 %v1072, %v1142
      %v1158 = vadd.f32 %v1073, %v1146
      %v1159 = vadd.f32 %v1074, %v1134
      %v1160 = vadd.f32 %v1075, %v1138
      %v1161 = vadd.f32 %v1076, %v1142
      %v1162 = vadd.f32 %v1077, %v1146
      %v1163 = vadd.f32 %v1078, %v1134
      %v1164 = vadd.f32 %v1079, %v1138
      %v1165 = vadd.f32 %v1080, %v1142
      %v1166 = vadd.f32 %v1081, %v1146
      %v1167 = vadd.f32 %v1082, %v1134
      %v1168 = vadd.f32 %v1083, %v1138
      %v1169 = vadd.f32 %v1084, %v1142
      %v1170 = vadd.f32 %v1085, %v1146
      %v1171 = vadd.f32 %v1086, %v1134
      %v1172 = vadd.f32 %v1087, %v1138
      %v1173 = vadd.f32 %v1088, %v1142
      %v1174 = vadd.f32 %v1089, %v1146
      %v1175 = vadd.f32 %v1090, %v1134
      %v1176 = vadd.f32 %v1091, %v1138
      %v1177 = vadd.f32 %v1092, %v1142
      %v1178 = vadd.f32 %v1093, %v1146
      %v1179 = vadd.f32 %v1094, %v1134
      %v1180 = vadd.f32 %v1095, %v1138
      %v1181 = vadd.f32 %v1096, %v1142
      %v1182 = vadd.f32 %v1097, %v1146
      %v1183 = vadd.f32 %v1098, %v1134
      %v1184 = vadd.f32 %v1099, %v1138
      %v1185 = vadd.f32 %v1100, %v1142
      %v1186 = vadd.f32 %v1101, %v1146
      %v1187 = vadd.f32 %v1102, %v1134
      %v1188 = vadd.f32 %v1103, %v1138
      %v1189 = vadd.f32 %v1104, %v1142
      %v1190 = vadd.f32 %v1105, %v1146
      %v1191 = vadd.f32 %v1106, %v1134
      %v1192 = vadd.f32 %v1107, %v1138
      %v1193 = vadd.f32 %v1108, %v1142
      %v1194 = vadd.f32 %v1109, %v1146
      %v1195 = vadd.f32 %v1110, %v1134
      %v1196 = vadd.f32 %v1111, %v1138
      %v1197 = vadd.f32 %v1112, %v1142
      %v1198 = vadd.f32 %v1113, %v1146
      %v1199 = vadd.f32 %v1114, %v1134
      %v1200 = vadd.f32 %v1115, %v1138
      %v1201 = vadd.f32 %v1116, %v1142
      %v1202 = vadd.f32 %v1117, %v1146
      %v1203 = vadd.f32 %v1118, %v1134
      %v1204 = vadd.f32 %v1119, %v1138
      %v1205 = vadd.f32 %v1120, %v1142
      %v1206 = vadd.f32 %v1121, %v1146
      %v1207 = vadd.f32 %v1122, %v1134
      %v1208 = vadd.f32 %v1123, %v1138
      %v1209 = vadd.f32 %v1124, %v1142
      %v1210 = vadd.f32 %v1125, %v1146
      %v1211 = vadd.f32 %v1126, %v1134
      %v1212 = vadd.f32 %v1127, %v1138
      %v1213 = vadd.f32 %v1128, %v1142
      %v1214 = vadd.f32 %v1129, %v1146
      %v1215 = vmax.f32 %v1151, 0.0
      %v1216 = vmax.f32 %v1152, 0.0
      %v1217 = vmax.f32 %v1153, 0.0
      %v1218 = vmax.f32 %v1154, 0.0
      %v1219 = vmax.f32 %v1155, 0.0
      %v1220 = vmax.f32 %v1156, 0.0
      %v1221 = vmax.f32 %v1157, 0.0
      %v1222 = vmax.f32 %v1158, 0.0
      %v1223 = vmax.f32 %v1159, 0.0
      %v1224 = vmax.f32 %v1160, 0.0
      %v1225 = vmax.f32 %v1161, 0.0
      %v1226 = vmax.f32 %v1162, 0.0
      %v1227 = vmax.f32 %v1163, 0.0
      %v1228 = vmax.f32 %v1164, 0.0
      %v1229 = vmax.f32 %v1165, 0.0
      %v1230 = vmax.f32 %v1166, 0.0
      %v1231 = vmax.f32 %v1167, 0.0
      %v1232 = vmax.f32 %v1168, 0.0
      %v1233 = vmax.f32 %v1169, 0.0
      %v1234 = vmax.f32 %v1170, 0.0
      %v1235 = vmax.f32 %v1171, 0.0
      %v1236 = vmax.f32 %v1172, 0.0
      %v1237 = vmax.f32 %v1173, 0.0
      %v1238 = vmax.f32 %v1174, 0.0
      %v1239 = vmax.f32 %v1175, 0.0
      %v1240 = vmax.f32 %v1176, 0.0
      %v1241 = vmax.f32 %v1177, 0.0
      %v1242 = vmax.f32 %v1178, 0.0
      %v1243 = vmax.f32 %v1179, 0.0
      %v1244 = vmax.f32 %v1180, 0.0
      %v1245 = vmax.f32 %v1181, 0.0
      %v1246 = vmax.f32 %v1182, 0.0
      %v1247 = vmax.f32 %v1183, 0.0
      %v1248 = vmax.f32 %v1184, 0.0
      %v1249 = vmax.f32 %v1185, 0.0
      %v1250 = vmax.f32 %v1186, 0.0
      %v1251 = vmax.f32 %v1187, 0.0
      %v1252 = vmax.f32 %v1188, 0.0
      %v1253 = vmax.f32 %v1189, 0.0
      %v1254 = vmax.f32 %v1190, 0.0
      %v1255 = vmax.f32 %v1191, 0.0
      %v1256 = vmax.f32 %v1192, 0.0
      %v1257 = vmax.f32 %v1193, 0.0
      %v1258 = vmax.f32 %v1194, 0.0
      %v1259 = vmax.f32 %v1195, 0.0
      %v1260 = vmax.f32 %v1196, 0.0
      %v1261 = vmax.f32 %v1197, 0.0
      %v1262 = vmax.f32 %v1198, 0.0
      %v1263 = vmax.f32 %v1199, 0.0
      %v1264 = vmax.f32 %v1200, 0.0
      %v1265 = vmax.f32 %v1201, 0.0
      %v1266 = vmax.f32 %v1202, 0.0
      %v1267 = vmax.f32 %v1203, 0.0
      %v1268 = vmax.f32 %v1204, 0.0
      %v1269 = vmax.f32 %v1205, 0.0
      %v1270 = vmax.f32 %v1206, 0.0
      %v1271 = vmax.f32 %v1207, 0.0
      %v1272 = vmax.f32 %v1208, 0.0
      %v1273 = vmax.f32 %v1209, 0.0
      %v1274 = vmax.f32 %v1210, 0.0
      %v1275 = vmax.f32 %v1211, 0.0
      %v1276 = vmax.f32 %v1212, 0.0
      %v1277 = vmax.f32 %v1213, 0.0
      %v1278 = vmax.f32 %v1214, 0.0
      %v1279 = vpack.c.bf16 %v1219, %v1215
      %v1280 = vpack.c.bf16 %v1220, %v1216
      %v1281 = vpack.c.bf16 %v1221, %v1217
      %v1282 = vpack.c.bf16 %v1222, %v1218
      %v1283 = vpack.c.bf16 %v1227, %v1223
      %v1284 = vpack.c.bf16 %v1228, %v1224
      %v1285 = vpack.c.bf16 %v1229, %v1225
      %v1286 = vpack.c.bf16 %v1230, %v1226
      %v1287 = vpack.c.bf16 %v1235, %v1231
      %v1288 = vpack.c.bf16 %v1236, %v1232
      %v1289 = vpack.c.bf16 %v1237, %v1233
      %v1290 = vpack.c.bf16 %v1238, %v1234
      %v1291 = vpack.c.bf16 %v1243, %v1239
      %v1292 = vpack.c.bf16 %v1244, %v1240
      %v1293 = vpack.c.bf16 %v1245, %v1241
      %v1294 = vpack.c.bf16 %v1246, %v1242
      %v1295 = vpack.c.bf16 %v1251, %v1247
      %v1296 = vpack.c.bf16 %v1252, %v1248
      %v1297 = vpack.c.bf16 %v1253, %v1249
      %v1298 = vpack.c.bf16 %v1254, %v1250
      %v1299 = vpack.c.bf16 %v1259, %v1255
      %v1300 = vpack.c.bf16 %v1260, %v1256
      %v1301 = vpack.c.bf16 %v1261, %v1257
      %v1302 = vpack.c.bf16 %v1262, %v1258
      %v1303 = vpack.c.bf16 %v1267, %v1263
      %v1304 = vpack.c.bf16 %v1268, %v1264
      %v1305 = vpack.c.bf16 %v1269, %v1265
      %v1306 = vpack.c.bf16 %v1270, %v1266
      %v1307 = vpack.c.bf16 %v1275, %v1271
      %v1308 = vpack.c.bf16 %v1276, %v1272
      %v1309 = vpack.c.bf16 %v1277, %v1273
      %v1310 = vpack.c.bf16 %v1278, %v1274
      %v1311 = vld [vmem:[%s7] sm:$0xff]
      %v1312 = vld [vmem:[%s7 + $0x8] sm:$0xff]
      %v1313 = vld [vmem:[%s7 + $0x10] sm:$0xff]
      %v1314 = vld [vmem:[%s7 + $0x18] sm:$0xff]
      %v1315 = vld [vmem:[%s7 + $0x20] sm:$0xff]
      %v1316 = vld [vmem:[%s7 + $0x28] sm:$0xff]
      %v1317 = vld [vmem:[%s7 + $0x30] sm:$0xff]
      %v1318 = vld [vmem:[%s7 + $0x38] sm:$0xff]
      %v1319 = vld [vmem:[%s7 + $0x40] sm:$0xff]
      %v1320 = vld [vmem:[%s7 + $0x48] sm:$0xff]
      %v1321 = vld [vmem:[%s7 + $0x50] sm:$0xff]
      %v1322 = vld [vmem:[%s7 + $0x58] sm:$0xff]
      %v1323 = vld [vmem:[%s7 + $0x60] sm:$0xff]
      %v1324 = vld [vmem:[%s7 + $0x68] sm:$0xff]
      %v1325 = vld [vmem:[%s7 + $0x70] sm:$0xff]
      %v1326 = vld [vmem:[%s7 + $0x78] sm:$0xff]
      %v1327 = vld [vmem:[%s7 + $0x80] sm:$0xff]
      %v1328 = vld [vmem:[%s7 + $0x88] sm:$0xff]
      %v1329 = vld [vmem:[%s7 + $0x90] sm:$0xff]
      %v1330 = vld [vmem:[%s7 + $0x98] sm:$0xff]
      %v1331 = vld [vmem:[%s7 + $0xa0] sm:$0xff]
      %v1332 = vld [vmem:[%s7 + $0xa8] sm:$0xff]
      %v1333 = vld [vmem:[%s7 + $0xb0] sm:$0xff]
      %v1334 = vld [vmem:[%s7 + $0xb8] sm:$0xff]
      %v1335 = vld [vmem:[%s7 + $0xc0] sm:$0xff]
      %v1336 = vld [vmem:[%s7 + $0xc8] sm:$0xff]
      %v1337 = vld [vmem:[%s7 + $0xd0] sm:$0xff]
      %v1338 = vld [vmem:[%s7 + $0xd8] sm:$0xff]
      %v1339 = vld [vmem:[%s7 + $0xe0] sm:$0xff]
      %v1340 = vld [vmem:[%s7 + $0xe8] sm:$0xff]
      %v1341 = vld [vmem:[%s7 + $0xf0] sm:$0xff]
      %v1342 = vld [vmem:[%s7 + $0xf8] sm:$0xff]
      %v1343 = vld [vmem:[%s7 + $0x100] sm:$0xff]
      %v1344 = vld [vmem:[%s7 + $0x108] sm:$0xff]
      %v1345 = vld [vmem:[%s7 + $0x110] sm:$0xff]
      %v1346 = vld [vmem:[%s7 + $0x118] sm:$0xff]
      %v1347 = vld [vmem:[%s7 + $0x120] sm:$0xff]
      %v1348 = vld [vmem:[%s7 + $0x128] sm:$0xff]
      %v1349 = vld [vmem:[%s7 + $0x130] sm:$0xff]
      %v1350 = vld [vmem:[%s7 + $0x138] sm:$0xff]
      %v1351 = vld [vmem:[%s7 + $0x140] sm:$0xff]
      %v1352 = vld [vmem:[%s7 + $0x148] sm:$0xff]
      %v1353 = vld [vmem:[%s7 + $0x150] sm:$0xff]
      %v1354 = vld [vmem:[%s7 + $0x158] sm:$0xff]
      %v1355 = vld [vmem:[%s7 + $0x160] sm:$0xff]
      %v1356 = vld [vmem:[%s7 + $0x168] sm:$0xff]
      %v1357 = vld [vmem:[%s7 + $0x170] sm:$0xff]
      %v1358 = vld [vmem:[%s7 + $0x178] sm:$0xff]
      %v1359 = vld [vmem:[%s7 + $0x180] sm:$0xff]
      %v1360 = vld [vmem:[%s7 + $0x188] sm:$0xff]
      %v1361 = vld [vmem:[%s7 + $0x190] sm:$0xff]
      %v1362 = vld [vmem:[%s7 + $0x198] sm:$0xff]
      %v1363 = vld [vmem:[%s7 + $0x1a0] sm:$0xff]
      %v1364 = vld [vmem:[%s7 + $0x1a8] sm:$0xff]
      %v1365 = vld [vmem:[%s7 + $0x1b0] sm:$0xff]
      %v1366 = vld [vmem:[%s7 + $0x1b8] sm:$0xff]
      %v1367 = vld [vmem:[%s7 + $0x1c0] sm:$0xff]
      %v1368 = vld [vmem:[%s7 + $0x1c8] sm:$0xff]
      %v1369 = vld [vmem:[%s7 + $0x1d0] sm:$0xff]
      %v1370 = vld [vmem:[%s7 + $0x1d8] sm:$0xff]
      %v1371 = vld [vmem:[%s7 + $0x1e0] sm:$0xff]
      %v1372 = vld [vmem:[%s7 + $0x1e8] sm:$0xff]
      %v1373 = vld [vmem:[%s7 + $0x1f0] sm:$0xff]
      %v1374 = vld [vmem:[%s7 + $0x1f8] sm:$0xff]
      %v1375 = vld [vmem:[%s8] sm:$0x3]
      %v1377 = vlaneseq
      %v1378 = vshrl.u32 %v1377, 7
      %v1379 = vsub.s32 0, %v1378
      %v1380 = vrot.slane %v1375, %v1379
      %v1381 = vlaneseq
      %v1382 = vshrl.u32 %v1381, 7
      %v1383 = vsub.s32 1, %v1382
      %v1384 = vrot.slane %v1375, %v1383
      %v1451 = vunpack.c.l.b16 %v1311
      %v1452 = vunpack.c.h.b16 %v1311
      %v1453 = vunpack.c.l.b16 %v1312
      %v1454 = vunpack.c.h.b16 %v1312
      %v1455 = vunpack.c.l.b16 %v1313
      %v1456 = vunpack.c.h.b16 %v1313
      %v1457 = vunpack.c.l.b16 %v1314
      %v1458 = vunpack.c.h.b16 %v1314
      %v1459 = vunpack.c.l.b16 %v1315
      %v1460 = vunpack.c.h.b16 %v1315
      %v1461 = vunpack.c.l.b16 %v1316
      %v1462 = vunpack.c.h.b16 %v1316
      %v1463 = vunpack.c.l.b16 %v1317
      %v1464 = vunpack.c.h.b16 %v1317
      %v1465 = vunpack.c.l.b16 %v1318
      %v1466 = vunpack.c.h.b16 %v1318
      %v1467 = vunpack.c.l.b16 %v1319
      %v1468 = vunpack.c.h.b16 %v1319
      %v1469 = vunpack.c.l.b16 %v1320
      %v1470 = vunpack.c.h.b16 %v1320
      %v1471 = vunpack.c.l.b16 %v1321
      %v1472 = vunpack.c.h.b16 %v1321
      %v1473 = vunpack.c.l.b16 %v1322
      %v1474 = vunpack.c.h.b16 %v1322
      %v1475 = vunpack.c.l.b16 %v1323
      %v1476 = vunpack.c.h.b16 %v1323
      %v1477 = vunpack.c.l.b16 %v1324
      %v1478 = vunpack.c.h.b16 %v1324
      %v1479 = vunpack.c.l.b16 %v1325
      %v1480 = vunpack.c.h.b16 %v1325
      %v1481 = vunpack.c.l.b16 %v1326
      %v1482 = vunpack.c.h.b16 %v1326
      %v1483 = vunpack.c.l.b16 %v1327
      %v1484 = vunpack.c.h.b16 %v1327
      %v1485 = vunpack.c.l.b16 %v1328
      %v1486 = vunpack.c.h.b16 %v1328
      %v1487 = vunpack.c.l.b16 %v1329
      %v1488 = vunpack.c.h.b16 %v1329
      %v1489 = vunpack.c.l.b16 %v1330
      %v1490 = vunpack.c.h.b16 %v1330
      %v1491 = vunpack.c.l.b16 %v1331
      %v1492 = vunpack.c.h.b16 %v1331
      %v1493 = vunpack.c.l.b16 %v1332
      %v1494 = vunpack.c.h.b16 %v1332
      %v1495 = vunpack.c.l.b16 %v1333
      %v1496 = vunpack.c.h.b16 %v1333
      %v1497 = vunpack.c.l.b16 %v1334
      %v1498 = vunpack.c.h.b16 %v1334
      %v1499 = vunpack.c.l.b16 %v1335
      %v1500 = vunpack.c.h.b16 %v1335
      %v1501 = vunpack.c.l.b16 %v1336
      %v1502 = vunpack.c.h.b16 %v1336
      %v1503 = vunpack.c.l.b16 %v1337
      %v1504 = vunpack.c.h.b16 %v1337
      %v1505 = vunpack.c.l.b16 %v1338
      %v1506 = vunpack.c.h.b16 %v1338
      %v1507 = vunpack.c.l.b16 %v1339
      %v1508 = vunpack.c.h.b16 %v1339
      %v1509 = vunpack.c.l.b16 %v1340
      %v1510 = vunpack.c.h.b16 %v1340
      %v1511 = vunpack.c.l.b16 %v1341
      %v1512 = vunpack.c.h.b16 %v1341
      %v1513 = vunpack.c.l.b16 %v1342
      %v1514 = vunpack.c.h.b16 %v1342
      %v1515 = vunpack.c.l.b16 %v1343
      %v1516 = vunpack.c.h.b16 %v1343
      %v1517 = vunpack.c.l.b16 %v1344
      %v1518 = vunpack.c.h.b16 %v1344
      %v1519 = vunpack.c.l.b16 %v1345
      %v1520 = vunpack.c.h.b16 %v1345
      %v1521 = vunpack.c.l.b16 %v1346
      %v1522 = vunpack.c.h.b16 %v1346
      %v1523 = vunpack.c.l.b16 %v1347
      %v1524 = vunpack.c.h.b16 %v1347
      %v1525 = vunpack.c.l.b16 %v1348
      %v1526 = vunpack.c.h.b16 %v1348
      %v1527 = vunpack.c.l.b16 %v1349
      %v1528 = vunpack.c.h.b16 %v1349
      %v1529 = vunpack.c.l.b16 %v1350
      %v1530 = vunpack.c.h.b16 %v1350
      %v1531 = vunpack.c.l.b16 %v1351
      %v1532 = vunpack.c.h.b16 %v1351
      %v1533 = vunpack.c.l.b16 %v1352
      %v1534 = vunpack.c.h.b16 %v1352
      %v1535 = vunpack.c.l.b16 %v1353
      %v1536 = vunpack.c.h.b16 %v1353
      %v1537 = vunpack.c.l.b16 %v1354
      %v1538 = vunpack.c.h.b16 %v1354
      %v1539 = vunpack.c.l.b16 %v1355
      %v1540 = vunpack.c.h.b16 %v1355
      %v1541 = vunpack.c.l.b16 %v1356
      %v1542 = vunpack.c.h.b16 %v1356
      %v1543 = vunpack.c.l.b16 %v1357
      %v1544 = vunpack.c.h.b16 %v1357
      %v1545 = vunpack.c.l.b16 %v1358
      %v1546 = vunpack.c.h.b16 %v1358
      %v1547 = vunpack.c.l.b16 %v1359
      %v1548 = vunpack.c.h.b16 %v1359
      %v1549 = vunpack.c.l.b16 %v1360
      %v1550 = vunpack.c.h.b16 %v1360
      %v1551 = vunpack.c.l.b16 %v1361
      %v1552 = vunpack.c.h.b16 %v1361
      %v1553 = vunpack.c.l.b16 %v1362
      %v1554 = vunpack.c.h.b16 %v1362
      %v1555 = vunpack.c.l.b16 %v1363
      %v1556 = vunpack.c.h.b16 %v1363
      %v1557 = vunpack.c.l.b16 %v1364
      %v1558 = vunpack.c.h.b16 %v1364
      %v1559 = vunpack.c.l.b16 %v1365
      %v1560 = vunpack.c.h.b16 %v1365
      %v1561 = vunpack.c.l.b16 %v1366
      %v1562 = vunpack.c.h.b16 %v1366
      %v1563 = vunpack.c.l.b16 %v1367
      %v1564 = vunpack.c.h.b16 %v1367
      %v1565 = vunpack.c.l.b16 %v1368
      %v1566 = vunpack.c.h.b16 %v1368
      %v1567 = vunpack.c.l.b16 %v1369
      %v1568 = vunpack.c.h.b16 %v1369
      %v1569 = vunpack.c.l.b16 %v1370
      %v1570 = vunpack.c.h.b16 %v1370
      %v1571 = vunpack.c.l.b16 %v1371
      %v1572 = vunpack.c.h.b16 %v1371
      %v1573 = vunpack.c.l.b16 %v1372
      %v1574 = vunpack.c.h.b16 %v1372
      %v1575 = vunpack.c.l.b16 %v1373
      %v1576 = vunpack.c.h.b16 %v1373
      %v1577 = vunpack.c.l.b16 %v1374
      %v1578 = vunpack.c.h.b16 %v1374
      %v1579 = vpack.c.b16 %v1453, %v1451
      %v1580 = vpack.c.b16 %v1454, %v1452
      %v1581 = vpack.c.b16 %v1457, %v1455
      %v1582 = vpack.c.b16 %v1458, %v1456
      %v1583 = vpack.c.b16 %v1461, %v1459
      %v1584 = vpack.c.b16 %v1462, %v1460
      %v1585 = vpack.c.b16 %v1465, %v1463
      %v1586 = vpack.c.b16 %v1466, %v1464
      %v1587 = vpack.c.b16 %v1469, %v1467
      %v1588 = vpack.c.b16 %v1470, %v1468
      %v1589 = vpack.c.b16 %v1473, %v1471
      %v1590 = vpack.c.b16 %v1474, %v1472
      %v1591 = vpack.c.b16 %v1477, %v1475
      %v1592 = vpack.c.b16 %v1478, %v1476
      %v1593 = vpack.c.b16 %v1481, %v1479
      %v1594 = vpack.c.b16 %v1482, %v1480
      %v1595 = vpack.c.b16 %v1485, %v1483
      %v1596 = vpack.c.b16 %v1486, %v1484
      %v1597 = vpack.c.b16 %v1489, %v1487
      %v1598 = vpack.c.b16 %v1490, %v1488
      %v1599 = vpack.c.b16 %v1493, %v1491
      %v1600 = vpack.c.b16 %v1494, %v1492
      %v1601 = vpack.c.b16 %v1497, %v1495
      %v1602 = vpack.c.b16 %v1498, %v1496
      %v1603 = vpack.c.b16 %v1501, %v1499
      %v1604 = vpack.c.b16 %v1502, %v1500
      %v1605 = vpack.c.b16 %v1505, %v1503
      %v1606 = vpack.c.b16 %v1506, %v1504
      %v1607 = vpack.c.b16 %v1509, %v1507
      %v1608 = vpack.c.b16 %v1510, %v1508
      %v1609 = vpack.c.b16 %v1513, %v1511
      %v1610 = vpack.c.b16 %v1514, %v1512
      %v1611 = vpack.c.b16 %v1517, %v1515
      %v1612 = vpack.c.b16 %v1518, %v1516
      %v1613 = vpack.c.b16 %v1521, %v1519
      %v1614 = vpack.c.b16 %v1522, %v1520
      %v1615 = vpack.c.b16 %v1525, %v1523
      %v1616 = vpack.c.b16 %v1526, %v1524
      %v1617 = vpack.c.b16 %v1529, %v1527
      %v1618 = vpack.c.b16 %v1530, %v1528
      %v1619 = vpack.c.b16 %v1533, %v1531
      %v1620 = vpack.c.b16 %v1534, %v1532
      %v1621 = vpack.c.b16 %v1537, %v1535
      %v1622 = vpack.c.b16 %v1538, %v1536
      %v1623 = vpack.c.b16 %v1541, %v1539
      %v1624 = vpack.c.b16 %v1542, %v1540
      %v1625 = vpack.c.b16 %v1545, %v1543
      %v1626 = vpack.c.b16 %v1546, %v1544
      %v1627 = vpack.c.b16 %v1549, %v1547
      %v1628 = vpack.c.b16 %v1550, %v1548
      %v1629 = vpack.c.b16 %v1553, %v1551
      %v1630 = vpack.c.b16 %v1554, %v1552
      %v1631 = vpack.c.b16 %v1557, %v1555
      %v1632 = vpack.c.b16 %v1558, %v1556
      %v1633 = vpack.c.b16 %v1561, %v1559
      %v1634 = vpack.c.b16 %v1562, %v1560
      %v1635 = vpack.c.b16 %v1565, %v1563
      %v1636 = vpack.c.b16 %v1566, %v1564
      %v1637 = vpack.c.b16 %v1569, %v1567
      %v1638 = vpack.c.b16 %v1570, %v1568
      %v1639 = vpack.c.b16 %v1573, %v1571
      %v1640 = vpack.c.b16 %v1574, %v1572
      %v1641 = vpack.c.b16 %v1577, %v1575
      %v1642 = vpack.c.b16 %v1578, %v1576
      %1707 = vmatprep.subr.bf16.mxu0 %v1580
      %1708 = vmatpush1.bf16.msra.mxu0 %v1579
      %1709 = vmatprep.subr.bf16.mxu0 %v1582
      %1710 = vmatpush1.bf16.msra.mxu0 %v1581
      %1711 = vmatprep.subr.bf16.mxu0 %v1584
      %1712 = vmatpush1.bf16.msra.mxu0 %v1583
      %1713 = vmatprep.subr.bf16.mxu0 %v1586
      %1714 = vmatpush1.bf16.msra.mxu0 %v1585
      %1715 = vmatprep.subr.bf16.mxu0 %v1588
      %1716 = vmatpush1.bf16.msra.mxu0 %v1587
      %1717 = vmatprep.subr.bf16.mxu0 %v1590
      %1718 = vmatpush1.bf16.msra.mxu0 %v1589
      %1719 = vmatprep.subr.bf16.mxu0 %v1592
      %1720 = vmatpush1.bf16.msra.mxu0 %v1591
      %1721 = vmatprep.subr.bf16.mxu0 %v1594
      %1722 = vmatpush1.bf16.msra.mxu0 %v1593
      %1723 = vmatprep.subr.bf16.mxu0 %v1596
      %1724 = vmatpush1.bf16.msra.mxu0 %v1595
      %1725 = vmatprep.subr.bf16.mxu0 %v1598
      %1726 = vmatpush1.bf16.msra.mxu0 %v1597
      %1727 = vmatprep.subr.bf16.mxu0 %v1600
      %1728 = vmatpush1.bf16.msra.mxu0 %v1599
      %1729 = vmatprep.subr.bf16.mxu0 %v1602
      %1730 = vmatpush1.bf16.msra.mxu0 %v1601
      %1731 = vmatprep.subr.bf16.mxu0 %v1604
      %1732 = vmatpush1.bf16.msra.mxu0 %v1603
      %1733 = vmatprep.subr.bf16.mxu0 %v1606
      %1734 = vmatpush1.bf16.msra.mxu0 %v1605
      %1735 = vmatprep.subr.bf16.mxu0 %v1608
      %1736 = vmatpush1.bf16.msra.mxu0 %v1607
      %1737 = vmatprep.subr.bf16.mxu0 %v1610
      %1738 = vmatpush1.bf16.msra.mxu0 %v1609
      %1739 = vmatprep.mubr.bf16.mxu0 %v1280
      %1740 = vmatmul.mubr.bf16.gmra.mrb[0].mxu0 %v1279
      %v1741 = vpop.f32.mrb[0].mxu0
      %v1742 = vadd.f32 %v1380, %v1741
      %v1743 = vpop.f32.mrb[0].mxu0
      %v1744 = vadd.f32 %v1384, %v1743
      %v1745 = vpop.f32.mrb[0].mxu0
      %v1746 = vadd.f32 %v1380, %v1745
      %v1747 = vpop.f32.mrb[0].mxu0
      %v1748 = vadd.f32 %v1384, %v1747
      %1749 = vmatprep.mubr.bf16.mxu0 %v1284
      %1750 = vmatmul.mubr.bf16.gmra.mrb[0].mxu0 %v1283
      %v1751 = vpop.f32.mrb[0].mxu0
      %v1752 = vadd.f32 %v1380, %v1751
      %v1753 = vpop.f32.mrb[0].mxu0
      %v1754 = vadd.f32 %v1384, %v1753
      %v1755 = vpop.f32.mrb[0].mxu0
      %v1756 = vadd.f32 %v1380, %v1755
      %v1757 = vpop.f32.mrb[0].mxu0
      %v1758 = vadd.f32 %v1384, %v1757
      %1759 = vmatprep.mubr.bf16.mxu0 %v1288
      %1760 = vmatmul.mubr.bf16.gmra.mrb[0].mxu0 %v1287
      %v1761 = vpop.f32.mrb[0].mxu0
      %v1762 = vadd.f32 %v1380, %v1761
      %v1763 = vpop.f32.mrb[0].mxu0
      %v1764 = vadd.f32 %v1384, %v1763
      %v1765 = vpop.f32.mrb[0].mxu0
      %v1766 = vadd.f32 %v1380, %v1765
      %v1767 = vpop.f32.mrb[0].mxu0
      %v1768 = vadd.f32 %v1384, %v1767
      %1769 = vmatprep.mubr.bf16.mxu0 %v1292
      %1770 = vmatmul.mubr.bf16.gmra.mrb[0].mxu0 %v1291
      %v1771 = vpop.f32.mrb[0].mxu0
      %v1772 = vadd.f32 %v1380, %v1771
      %v1773 = vpop.f32.mrb[0].mxu0
      %v1774 = vadd.f32 %v1384, %v1773
      %v1775 = vpop.f32.mrb[0].mxu0
      %v1776 = vadd.f32 %v1380, %v1775
      %v1777 = vpop.f32.mrb[0].mxu0
      %v1778 = vadd.f32 %v1384, %v1777
      %1779 = vmatprep.mubr.bf16.mxu0 %v1296
      %1780 = vmatmul.mubr.bf16.gmra.mrb[0].mxu0 %v1295
      %v1781 = vpop.f32.mrb[0].mxu0
      %v1782 = vadd.f32 %v1380, %v1781
      %v1783 = vpop.f32.mrb[0].mxu0
      %v1784 = vadd.f32 %v1384, %v1783
      %v1785 = vpop.f32.mrb[0].mxu0
      %v1786 = vadd.f32 %v1380, %v1785
      %v1787 = vpop.f32.mrb[0].mxu0
      %v1788 = vadd.f32 %v1384, %v1787
      %1789 = vmatprep.mubr.bf16.mxu0 %v1300
      %1790 = vmatmul.mubr.bf16.gmra.mrb[0].mxu0 %v1299
      %v1791 = vpop.f32.mrb[0].mxu0
      %v1792 = vadd.f32 %v1380, %v1791
      %v1793 = vpop.f32.mrb[0].mxu0
      %v1794 = vadd.f32 %v1384, %v1793
      %v1795 = vpop.f32.mrb[0].mxu0
      %v1796 = vadd.f32 %v1380, %v1795
      %v1797 = vpop.f32.mrb[0].mxu0
      %v1798 = vadd.f32 %v1384, %v1797
      %1799 = vmatprep.mubr.bf16.mxu0 %v1304
      %1800 = vmatmul.mubr.bf16.gmra.mrb[0].mxu0 %v1303
      %v1801 = vpop.f32.mrb[0].mxu0
      %v1802 = vadd.f32 %v1380, %v1801
      %v1803 = vpop.f32.mrb[0].mxu0
      %v1804 = vadd.f32 %v1384, %v1803
      %v1805 = vpop.f32.mrb[0].mxu0
      %v1806 = vadd.f32 %v1380, %v1805
      %v1807 = vpop.f32.mrb[0].mxu0
      %v1808 = vadd.f32 %v1384, %v1807
      %1809 = vmatprep.mubr.bf16.mxu0 %v1308
      %1810 = vmatmul.mubr.bf16.gmra.mrb[0].mxu0 %v1307
      %v1811 = vpop.f32.mrb[0].mxu0
      %v1812 = vadd.f32 %v1380, %v1811
      %v1813 = vpop.f32.mrb[0].mxu0
      %v1814 = vadd.f32 %v1384, %v1813
      %v1815 = vpop.f32.mrb[0].mxu0
      %v1816 = vadd.f32 %v1380, %v1815
      %v1817 = vpop.f32.mrb[0].mxu0
      %v1818 = vadd.f32 %v1384, %v1817
      %1819 = vdwg.mxu0
      %1820 = vmatprep.subr.bf16.mxu0 %v1612
      %1821 = vmatpush1.bf16.msra.mxu0 %v1611
      %1822 = vmatprep.subr.bf16.mxu0 %v1614
      %1823 = vmatpush1.bf16.msra.mxu0 %v1613
      %1824 = vmatprep.subr.bf16.mxu0 %v1616
      %1825 = vmatpush1.bf16.msra.mxu0 %v1615
      %1826 = vmatprep.subr.bf16.mxu0 %v1618
      %1827 = vmatpush1.bf16.msra.mxu0 %v1617
      %1828 = vmatprep.subr.bf16.mxu0 %v1620
      %1829 = vmatpush1.bf16.msra.mxu0 %v1619
      %1830 = vmatprep.subr.bf16.mxu0 %v1622
      %1831 = vmatpush1.bf16.msra.mxu0 %v1621
      %1832 = vmatprep.subr.bf16.mxu0 %v1624
      %1833 = vmatpush1.bf16.msra.mxu0 %v1623
      %1834 = vmatprep.subr.bf16.mxu0 %v1626
      %1835 = vmatpush1.bf16.msra.mxu0 %v1625
      %1836 = vmatprep.subr.bf16.mxu0 %v1628
      %1837 = vmatpush1.bf16.msra.mxu0 %v1627
      %1838 = vmatprep.subr.bf16.mxu0 %v1630
      %1839 = vmatpush1.bf16.msra.mxu0 %v1629
      %1840 = vmatprep.subr.bf16.mxu0 %v1632
      %1841 = vmatpush1.bf16.msra.mxu0 %v1631
      %1842 = vmatprep.subr.bf16.mxu0 %v1634
      %1843 = vmatpush1.bf16.msra.mxu0 %v1633
      %1844 = vmatprep.subr.bf16.mxu0 %v1636
      %1845 = vmatpush1.bf16.msra.mxu0 %v1635
      %1846 = vmatprep.subr.bf16.mxu0 %v1638
      %1847 = vmatpush1.bf16.msra.mxu0 %v1637
      %1848 = vmatprep.subr.bf16.mxu0 %v1640
      %1849 = vmatpush1.bf16.msra.mxu0 %v1639
      %1850 = vmatprep.subr.bf16.mxu0 %v1642
      %1851 = vmatpush1.bf16.msra.mxu0 %v1641
      %1852 = vmatprep.mubr.bf16.mxu0 %v1282
      %1853 = vmatmul.mubr.bf16.gmra.mrb[0].mxu0 %v1281
      %v1854 = vpop.f32.mrb[0].mxu0
      %v1855 = vadd.f32 %v1742, %v1854
      %v1856 = vpop.f32.mrb[0].mxu0
      %v1857 = vadd.f32 %v1744, %v1856
      %v1858 = vpop.f32.mrb[0].mxu0
      %v1859 = vadd.f32 %v1746, %v1858
      %v1860 = vpop.f32.mrb[0].mxu0
      %v1861 = vadd.f32 %v1748, %v1860
      %1862 = vmatprep.mubr.bf16.mxu0 %v1286
      %1863 = vmatmul.mubr.bf16.gmra.mrb[0].mxu0 %v1285
      %v1864 = vpop.f32.mrb[0].mxu0
      %v1865 = vadd.f32 %v1752, %v1864
      %v1866 = vpop.f32.mrb[0].mxu0
      %v1867 = vadd.f32 %v1754, %v1866
      %v1868 = vpop.f32.mrb[0].mxu0
      %v1869 = vadd.f32 %v1756, %v1868
      %v1870 = vpop.f32.mrb[0].mxu0
      %v1871 = vadd.f32 %v1758, %v1870
      %1872 = vmatprep.mubr.bf16.mxu0 %v1290
      %1873 = vmatmul.mubr.bf16.gmra.mrb[0].mxu0 %v1289
      %v1874 = vpop.f32.mrb[0].mxu0
      %v1875 = vadd.f32 %v1762, %v1874
      %v1876 = vpop.f32.mrb[0].mxu0
      %v1877 = vadd.f32 %v1764, %v1876
      %v1878 = vpop.f32.mrb[0].mxu0
      %v1879 = vadd.f32 %v1766, %v1878
      %v1880 = vpop.f32.mrb[0].mxu0
      %v1881 = vadd.f32 %v1768, %v1880
      %1882 = vmatprep.mubr.bf16.mxu0 %v1294
      %1883 = vmatmul.mubr.bf16.gmra.mrb[0].mxu0 %v1293
      %v1884 = vpop.f32.mrb[0].mxu0
      %v1885 = vadd.f32 %v1772, %v1884
      %v1886 = vpop.f32.mrb[0].mxu0
      %v1887 = vadd.f32 %v1774, %v1886
      %v1888 = vpop.f32.mrb[0].mxu0
      %v1889 = vadd.f32 %v1776, %v1888
      %v1890 = vpop.f32.mrb[0].mxu0
      %v1891 = vadd.f32 %v1778, %v1890
      %1892 = vmatprep.mubr.bf16.mxu0 %v1298
      %1893 = vmatmul.mubr.bf16.gmra.mrb[0].mxu0 %v1297
      %v1894 = vpop.f32.mrb[0].mxu0
      %v1895 = vadd.f32 %v1782, %v1894
      %v1896 = vpop.f32.mrb[0].mxu0
      %v1897 = vadd.f32 %v1784, %v1896
      %v1898 = vpop.f32.mrb[0].mxu0
      %v1899 = vadd.f32 %v1786, %v1898
      %v1900 = vpop.f32.mrb[0].mxu0
      %v1901 = vadd.f32 %v1788, %v1900
      %1902 = vmatprep.mubr.bf16.mxu0 %v1302
      %1903 = vmatmul.mubr.bf16.gmra.mrb[0].mxu0 %v1301
      %v1904 = vpop.f32.mrb[0].mxu0
      %v1905 = vadd.f32 %v1792, %v1904
      %v1906 = vpop.f32.mrb[0].mxu0
      %v1907 = vadd.f32 %v1794, %v1906
      %v1908 = vpop.f32.mrb[0].mxu0
      %v1909 = vadd.f32 %v1796, %v1908
      %v1910 = vpop.f32.mrb[0].mxu0
      %v1911 = vadd.f32 %v1798, %v1910
      %1912 = vmatprep.mubr.bf16.mxu0 %v1306
      %1913 = vmatmul.mubr.bf16.gmra.mrb[0].mxu0 %v1305
      %v1914 = vpop.f32.mrb[0].mxu0
      %v1915 = vadd.f32 %v1802, %v1914
      %v1916 = vpop.f32.mrb[0].mxu0
      %v1917 = vadd.f32 %v1804, %v1916
      %v1918 = vpop.f32.mrb[0].mxu0
      %v1919 = vadd.f32 %v1806, %v1918
      %v1920 = vpop.f32.mrb[0].mxu0
      %v1921 = vadd.f32 %v1808, %v1920
      %1922 = vmatprep.mubr.bf16.mxu0 %v1310
      %1923 = vmatmul.mubr.bf16.gmra.mrb[0].mxu0 %v1309
      %v1924 = vpop.f32.mrb[0].mxu0
      %v1925 = vadd.f32 %v1812, %v1924
      %v1926 = vpop.f32.mrb[0].mxu0
      %v1927 = vadd.f32 %v1814, %v1926
      %v1928 = vpop.f32.mrb[0].mxu0
      %v1929 = vadd.f32 %v1816, %v1928
      %v1930 = vpop.f32.mrb[0].mxu0
      %v1931 = vadd.f32 %v1818, %v1930
      %1932 = vdwg.mxu0
      %v1933 = vmax.f32 %v1855, 0.0
      %v1934 = vmax.f32 %v1857, 0.0
      %v1935 = vmax.f32 %v1859, 0.0
      %v1936 = vmax.f32 %v1861, 0.0
      %v1937 = vmax.f32 %v1865, 0.0
      %v1938 = vmax.f32 %v1867, 0.0
      %v1939 = vmax.f32 %v1869, 0.0
      %v1940 = vmax.f32 %v1871, 0.0
      %v1941 = vmax.f32 %v1875, 0.0
      %v1942 = vmax.f32 %v1877, 0.0
      %v1943 = vmax.f32 %v1879, 0.0
      %v1944 = vmax.f32 %v1881, 0.0
      %v1945 = vmax.f32 %v1885, 0.0
      %v1946 = vmax.f32 %v1887, 0.0
      %v1947 = vmax.f32 %v1889, 0.0
      %v1948 = vmax.f32 %v1891, 0.0
      %v1949 = vmax.f32 %v1895, 0.0
      %v1950 = vmax.f32 %v1897, 0.0
      %v1951 = vmax.f32 %v1899, 0.0
      %v1952 = vmax.f32 %v1901, 0.0
      %v1953 = vmax.f32 %v1905, 0.0
      %v1954 = vmax.f32 %v1907, 0.0
      %v1955 = vmax.f32 %v1909, 0.0
      %v1956 = vmax.f32 %v1911, 0.0
      %v1957 = vmax.f32 %v1915, 0.0
      %v1958 = vmax.f32 %v1917, 0.0
      %v1959 = vmax.f32 %v1919, 0.0
      %v1960 = vmax.f32 %v1921, 0.0
      %v1961 = vmax.f32 %v1925, 0.0
      %v1962 = vmax.f32 %v1927, 0.0
      %v1963 = vmax.f32 %v1929, 0.0
      %v1964 = vmax.f32 %v1931, 0.0
      %v1965 = vpack.c.bf16 %v1935, %v1933
      %v1966 = vpack.c.bf16 %v1936, %v1934
      %v1967 = vpack.c.bf16 %v1939, %v1937
      %v1968 = vpack.c.bf16 %v1940, %v1938
      %v1969 = vpack.c.bf16 %v1943, %v1941
      %v1970 = vpack.c.bf16 %v1944, %v1942
      %v1971 = vpack.c.bf16 %v1947, %v1945
      %v1972 = vpack.c.bf16 %v1948, %v1946
      %v1973 = vpack.c.bf16 %v1951, %v1949
      %v1974 = vpack.c.bf16 %v1952, %v1950
      %v1975 = vpack.c.bf16 %v1955, %v1953
      %v1976 = vpack.c.bf16 %v1956, %v1954
      %v1977 = vpack.c.bf16 %v1959, %v1957
      %v1978 = vpack.c.bf16 %v1960, %v1958
      %v1979 = vpack.c.bf16 %v1963, %v1961
      %v1980 = vpack.c.bf16 %v1964, %v1962
      %v1981 = vld [vmem:[%s9] sm:$0xf]
      %v1982 = vld [vmem:[%s9 + $0x4] sm:$0xf]
      %v1983 = vld [vmem:[%s9 + $0x8] sm:$0xf]
      %v1984 = vld [vmem:[%s9 + $0xc] sm:$0xf]
      %v1985 = vld [vmem:[%s9 + $0x10] sm:$0xf]
      %v1986 = vld [vmem:[%s9 + $0x14] sm:$0xf]
      %v1987 = vld [vmem:[%s9 + $0x18] sm:$0xf]
      %v1988 = vld [vmem:[%s9 + $0x1c] sm:$0xf]
      %v1989 = vld [vmem:[%s9 + $0x20] sm:$0xf]
      %v1990 = vld [vmem:[%s9 + $0x24] sm:$0xf]
      %v1991 = vld [vmem:[%s9 + $0x28] sm:$0xf]
      %v1992 = vld [vmem:[%s9 + $0x2c] sm:$0xf]
      %v1993 = vld [vmem:[%s9 + $0x30] sm:$0xf]
      %v1994 = vld [vmem:[%s9 + $0x34] sm:$0xf]
      %v1995 = vld [vmem:[%s9 + $0x38] sm:$0xf]
      %v1996 = vld [vmem:[%s9 + $0x3c] sm:$0xf]
      %v1997 = vld [vmem:[%s9 + $0x40] sm:$0xf]
      %v1998 = vld [vmem:[%s9 + $0x44] sm:$0xf]
      %v1999 = vld [vmem:[%s9 + $0x48] sm:$0xf]
      %v2000 = vld [vmem:[%s9 + $0x4c] sm:$0xf]
      %v2001 = vld [vmem:[%s9 + $0x50] sm:$0xf]
      %v2002 = vld [vmem:[%s9 + $0x54] sm:$0xf]
      %v2003 = vld [vmem:[%s9 + $0x58] sm:$0xf]
      %v2004 = vld [vmem:[%s9 + $0x5c] sm:$0xf]
      %v2005 = vld [vmem:[%s9 + $0x60] sm:$0xf]
      %v2006 = vld [vmem:[%s9 + $0x64] sm:$0xf]
      %v2007 = vld [vmem:[%s9 + $0x68] sm:$0xf]
      %v2008 = vld [vmem:[%s9 + $0x6c] sm:$0xf]
      %v2009 = vld [vmem:[%s9 + $0x70] sm:$0xf]
      %v2010 = vld [vmem:[%s9 + $0x74] sm:$0xf]
      %v2011 = vld [vmem:[%s9 + $0x78] sm:$0xf]
      %v2012 = vld [vmem:[%s9 + $0x7c] sm:$0xf]
      %v2013 = vld [vmem:[%s10] sm:$0x1]
      %v2015 = vlaneseq
      %v2016 = vshrl.u32 %v2015, 7
      %v2017 = vsub.s32 0, %v2016
      %v2018 = vrot.slane %v2013, %v2017
      %v2052 = vunpack.c.l.b16 %v1981
      %v2053 = vunpack.c.l.b16 %v1982
      %v2054 = vunpack.c.l.b16 %v1983
      %v2055 = vunpack.c.l.b16 %v1984
      %v2056 = vunpack.c.l.b16 %v1985
      %v2057 = vunpack.c.l.b16 %v1986
      %v2058 = vunpack.c.l.b16 %v1987
      %v2059 = vunpack.c.l.b16 %v1988
      %v2060 = vunpack.c.l.b16 %v1989
      %v2061 = vunpack.c.l.b16 %v1990
      %v2062 = vunpack.c.l.b16 %v1991
      %v2063 = vunpack.c.l.b16 %v1992
      %v2064 = vunpack.c.l.b16 %v1993
      %v2065 = vunpack.c.l.b16 %v1994
      %v2066 = vunpack.c.l.b16 %v1995
      %v2067 = vunpack.c.l.b16 %v1996
      %v2068 = vunpack.c.l.b16 %v1997
      %v2069 = vunpack.c.l.b16 %v1998
      %v2070 = vunpack.c.l.b16 %v1999
      %v2071 = vunpack.c.l.b16 %v2000
      %v2072 = vunpack.c.l.b16 %v2001
      %v2073 = vunpack.c.l.b16 %v2002
      %v2074 = vunpack.c.l.b16 %v2003
      %v2075 = vunpack.c.l.b16 %v2004
      %v2076 = vunpack.c.l.b16 %v2005
      %v2077 = vunpack.c.l.b16 %v2006
      %v2078 = vunpack.c.l.b16 %v2007
      %v2079 = vunpack.c.l.b16 %v2008
      %v2080 = vunpack.c.l.b16 %v2009
      %v2081 = vunpack.c.l.b16 %v2010
      %v2082 = vunpack.c.l.b16 %v2011
      %v2083 = vunpack.c.l.b16 %v2012
      %v2084 = vpack.c.b16 %v2053, %v2052
      %v2085 = vpack.c.b16 %v2055, %v2054
      %v2086 = vpack.c.b16 %v2057, %v2056
      %v2087 = vpack.c.b16 %v2059, %v2058
      %v2088 = vpack.c.b16 %v2061, %v2060
      %v2089 = vpack.c.b16 %v2063, %v2062
      %v2090 = vpack.c.b16 %v2065, %v2064
      %v2091 = vpack.c.b16 %v2067, %v2066
      %v2092 = vpack.c.b16 %v2069, %v2068
      %v2093 = vpack.c.b16 %v2071, %v2070
      %v2094 = vpack.c.b16 %v2073, %v2072
      %v2095 = vpack.c.b16 %v2075, %v2074
      %v2096 = vpack.c.b16 %v2077, %v2076
      %v2097 = vpack.c.b16 %v2079, %v2078
      %v2098 = vpack.c.b16 %v2081, %v2080
      %v2099 = vpack.c.b16 %v2083, %v2082
      %2116 = vmatprep.subr.bf16.mxu0 0
      %2117 = vmatpush1.bf16.msra.mxu0 %v2084
      %2118 = vmatprep.subr.bf16.mxu0 0
      %2119 = vmatpush1.bf16.msra.mxu0 %v2085
      %2120 = vmatprep.subr.bf16.mxu0 0
      %2121 = vmatpush1.bf16.msra.mxu0 %v2086
      %2122 = vmatprep.subr.bf16.mxu0 0
      %2123 = vmatpush1.bf16.msra.mxu0 %v2087
      %2124 = vmatprep.subr.bf16.mxu0 0
      %2125 = vmatpush1.bf16.msra.mxu0 %v2088
      %2126 = vmatprep.subr.bf16.mxu0 0
      %2127 = vmatpush1.bf16.msra.mxu0 %v2089
      %2128 = vmatprep.subr.bf16.mxu0 0
      %2129 = vmatpush1.bf16.msra.mxu0 %v2090
      %2130 = vmatprep.subr.bf16.mxu0 0
      %2131 = vmatpush1.bf16.msra.mxu0 %v2091
      %2132 = vmatprep.subr.bf16.mxu0 0
      %2133 = vmatpush1.bf16.msra.mxu0 %v2092
      %2134 = vmatprep.subr.bf16.mxu0 0
      %2135 = vmatpush1.bf16.msra.mxu0 %v2093
      %2136 = vmatprep.subr.bf16.mxu0 0
      %2137 = vmatpush1.bf16.msra.mxu0 %v2094
      %2138 = vmatprep.subr.bf16.mxu0 0
      %2139 = vmatpush1.bf16.msra.mxu0 %v2095
      %2140 = vmatprep.subr.bf16.mxu0 0
      %2141 = vmatpush1.bf16.msra.mxu0 %v2096
      %2142 = vmatprep.subr.bf16.mxu0 0
      %2143 = vmatpush1.bf16.msra.mxu0 %v2097
      %2144 = vmatprep.subr.bf16.mxu0 0
      %2145 = vmatpush1.bf16.msra.mxu0 %v2098
      %2146 = vmatprep.subr.bf16.mxu0 0
      %2147 = vmatpush1.bf16.msra.mxu0 %v2099
      %2148 = vmatprep.mubr.bf16.mxu0 %v1966
      %2149 = vmatmul.mubr.bf16.gmra.mrb[0].mxu0 %v1965
      %v2150 = vpop.f32.mrb[0].mxu0
      %v2151 = vadd.f32 %v2018, %v2150
      %v2152 = vpop.f32.mrb[0].mxu0
      %v2153 = vpop.f32.mrb[0].mxu0
      %v2154 = vadd.f32 %v2018, %v2153
      %v2155 = vpop.f32.mrb[0].mxu0
      %2156 = vmatprep.mubr.bf16.mxu0 %v1968
      %2157 = vmatmul.mubr.bf16.gmra.mrb[0].mxu0 %v1967
      %v2158 = vpop.f32.mrb[0].mxu0
      %v2159 = vadd.f32 %v2018, %v2158
      %v2160 = vpop.f32.mrb[0].mxu0
      %v2161 = vpop.f32.mrb[0].mxu0
      %v2162 = vadd.f32 %v2018, %v2161
      %v2163 = vpop.f32.mrb[0].mxu0
      %2164 = vmatprep.mubr.bf16.mxu0 %v1970
      %2165 = vmatmul.mubr.bf16.gmra.mrb[0].mxu0 %v1969
      %v2166 = vpop.f32.mrb[0].mxu0
      %v2167 = vadd.f32 %v2018, %v2166
      %v2168 = vpop.f32.mrb[0].mxu0
      %v2169 = vpop.f32.mrb[0].mxu0
      %v2170 = vadd.f32 %v2018, %v2169
      %v2171 = vpop.f32.mrb[0].mxu0
      %2172 = vmatprep.mubr.bf16.mxu0 %v1972
      %2173 = vmatmul.mubr.bf16.gmra.mrb[0].mxu0 %v1971
      %v2174 = vpop.f32.mrb[0].mxu0
      %v2175 = vadd.f32 %v2018, %v2174
      %v2176 = vpop.f32.mrb[0].mxu0
      %v2177 = vpop.f32.mrb[0].mxu0
      %v2178 = vadd.f32 %v2018, %v2177
      %v2179 = vpop.f32.mrb[0].mxu0
      %2180 = vmatprep.mubr.bf16.mxu0 %v1974
      %2181 = vmatmul.mubr.bf16.gmra.mrb[0].mxu0 %v1973
      %v2182 = vpop.f32.mrb[0].mxu0
      %v2183 = vadd.f32 %v2018, %v2182
      %v2184 = vpop.f32.mrb[0].mxu0
      %v2185 = vpop.f32.mrb[0].mxu0
      %v2186 = vadd.f32 %v2018, %v2185
      %v2187 = vpop.f32.mrb[0].mxu0
      %2188 = vmatprep.mubr.bf16.mxu0 %v1976
      %2189 = vmatmul.mubr.bf16.gmra.mrb[0].mxu0 %v1975
      %v2190 = vpop.f32.mrb[0].mxu0
      %v2191 = vadd.f32 %v2018, %v2190
      %v2192 = vpop.f32.mrb[0].mxu0
      %v2193 = vpop.f32.mrb[0].mxu0
      %v2194 = vadd.f32 %v2018, %v2193
      %v2195 = vpop.f32.mrb[0].mxu0
      %2196 = vmatprep.mubr.bf16.mxu0 %v1978
      %2197 = vmatmul.mubr.bf16.gmra.mrb[0].mxu0 %v1977
      %v2198 = vpop.f32.mrb[0].mxu0
      %v2199 = vadd.f32 %v2018, %v2198
      %v2200 = vpop.f32.mrb[0].mxu0
      %v2201 = vpop.f32.mrb[0].mxu0
      %v2202 = vadd.f32 %v2018, %v2201
      %v2203 = vpop.f32.mrb[0].mxu0
      %2204 = vmatprep.mubr.bf16.mxu0 %v1980
      %2205 = vmatmul.mubr.bf16.gmra.mrb[0].mxu0 %v1979
      %v2206 = vpop.f32.mrb[0].mxu0
      %v2207 = vadd.f32 %v2018, %v2206
      %v2208 = vpop.f32.mrb[0].mxu0
      %v2209 = vpop.f32.mrb[0].mxu0
      %v2210 = vadd.f32 %v2018, %v2209
      %v2211 = vpop.f32.mrb[0].mxu0
      %2212 = vdwg.mxu0
      %v2213 = vmax.f32 %v2151, 0.0
      %v2214 = vmax.f32 %v2154, 0.0
      %v2215 = vmax.f32 %v2159, 0.0
      %v2216 = vmax.f32 %v2162, 0.0
      %v2217 = vmax.f32 %v2167, 0.0
      %v2218 = vmax.f32 %v2170, 0.0
      %v2219 = vmax.f32 %v2175, 0.0
      %v2220 = vmax.f32 %v2178, 0.0
      %v2221 = vmax.f32 %v2183, 0.0
      %v2222 = vmax.f32 %v2186, 0.0
      %v2223 = vmax.f32 %v2191, 0.0
      %v2224 = vmax.f32 %v2194, 0.0
      %v2225 = vmax.f32 %v2199, 0.0
      %v2226 = vmax.f32 %v2202, 0.0
      %v2227 = vmax.f32 %v2207, 0.0
      %v2228 = vmax.f32 %v2210, 0.0
      %v2229 = vpack.c.bf16 %v2214, %v2213
      %v2230 = vpack.c.bf16 %v2216, %v2215
      %v2231 = vpack.c.bf16 %v2218, %v2217
      %v2232 = vpack.c.bf16 %v2220, %v2219
      %v2233 = vpack.c.bf16 %v2222, %v2221
      %v2234 = vpack.c.bf16 %v2224, %v2223
      %v2235 = vpack.c.bf16 %v2226, %v2225
      %v2236 = vpack.c.bf16 %v2228, %v2227
      %v2237 = vld [vmem:[%s11] sm:$0xf]
      %v2238 = vld [vmem:[%s11 + $0x4] sm:$0xf]
      %v2239 = vld [vmem:[%s11 + $0x8] sm:$0xf]
      %v2240 = vld [vmem:[%s11 + $0xc] sm:$0xf]
      %v2241 = vld [vmem:[%s11 + $0x10] sm:$0xf]
      %v2242 = vld [vmem:[%s11 + $0x14] sm:$0xf]
      %v2243 = vld [vmem:[%s11 + $0x18] sm:$0xf]
      %v2244 = vld [vmem:[%s11 + $0x1c] sm:$0xf]
      %v2245 = vld [vmem:[%s11 + $0x20] sm:$0xf]
      %v2246 = vld [vmem:[%s11 + $0x24] sm:$0xf]
      %v2247 = vld [vmem:[%s11 + $0x28] sm:$0xf]
      %v2248 = vld [vmem:[%s11 + $0x2c] sm:$0xf]
      %v2249 = vld [vmem:[%s11 + $0x30] sm:$0xf]
      %v2250 = vld [vmem:[%s11 + $0x34] sm:$0xf]
      %v2251 = vld [vmem:[%s11 + $0x38] sm:$0xf]
      %v2252 = vld [vmem:[%s11 + $0x3c] sm:$0xf]
      %v2253 = vld [vmem:[%s12] sm:$0x1]
      %v2255 = vlaneseq
      %v2256 = vshrl.u32 %v2255, 7
      %v2257 = vsub.s32 0, %v2256
      %v2258 = vrot.slane %v2253, %v2257
      %v2276 = vunpack.c.l.b16 %v2237
      %v2277 = vunpack.c.l.b16 %v2238
      %v2278 = vunpack.c.l.b16 %v2239
      %v2279 = vunpack.c.l.b16 %v2240
      %v2280 = vunpack.c.l.b16 %v2241
      %v2281 = vunpack.c.l.b16 %v2242
      %v2282 = vunpack.c.l.b16 %v2243
      %v2283 = vunpack.c.l.b16 %v2244
      %v2284 = vunpack.c.l.b16 %v2245
      %v2285 = vunpack.c.l.b16 %v2246
      %v2286 = vunpack.c.l.b16 %v2247
      %v2287 = vunpack.c.l.b16 %v2248
      %v2288 = vunpack.c.l.b16 %v2249
      %v2289 = vunpack.c.l.b16 %v2250
      %v2290 = vunpack.c.l.b16 %v2251
      %v2291 = vunpack.c.l.b16 %v2252
      %v2292 = vpack.c.b16 %v2277, %v2276
      %v2293 = vpack.c.b16 %v2279, %v2278
      %v2294 = vpack.c.b16 %v2281, %v2280
      %v2295 = vpack.c.b16 %v2283, %v2282
      %v2296 = vpack.c.b16 %v2285, %v2284
      %v2297 = vpack.c.b16 %v2287, %v2286
      %v2298 = vpack.c.b16 %v2289, %v2288
      %v2299 = vpack.c.b16 %v2291, %v2290
      %2308 = vmatprep.subr.bf16.mxu0 0
      %2309 = vmatpush1.bf16.msra.mxu0 %v2292
      %2310 = vmatprep.subr.bf16.mxu0 0
      %2311 = vmatpush1.bf16.msra.mxu0 %v2293
      %2312 = vmatprep.subr.bf16.mxu0 0
      %2313 = vmatpush1.bf16.msra.mxu0 %v2294
      %2314 = vmatprep.subr.bf16.mxu0 0
      %2315 = vmatpush1.bf16.msra.mxu0 %v2295
      %2316 = vmatprep.subr.bf16.mxu0 0
      %2317 = vmatpush1.bf16.msra.mxu0 %v2296
      %2318 = vmatprep.subr.bf16.mxu0 0
      %2319 = vmatpush1.bf16.msra.mxu0 %v2297
      %2320 = vmatprep.subr.bf16.mxu0 0
      %2321 = vmatpush1.bf16.msra.mxu0 %v2298
      %2322 = vmatprep.subr.bf16.mxu0 0
      %2323 = vmatpush1.bf16.msra.mxu0 %v2299
      %2324 = vmatprep.subr.bf16.mxu0 0
      %2325 = vmatpush1.bf16.msra.mxu0 0
      %2326 = vmatprep.subr.bf16.mxu0 0
      %2327 = vmatpush1.bf16.msra.mxu0 0
      %2328 = vmatprep.subr.bf16.mxu0 0
      %2329 = vmatpush1.bf16.msra.mxu0 0
      %2330 = vmatprep.subr.bf16.mxu0 0
      %2331 = vmatpush1.bf16.msra.mxu0 0
      %2332 = vmatprep.subr.bf16.mxu0 0
      %2333 = vmatpush1.bf16.msra.mxu0 0
      %2334 = vmatprep.subr.bf16.mxu0 0
      %2335 = vmatpush1.bf16.msra.mxu0 0
      %2336 = vmatprep.subr.bf16.mxu0 0
      %2337 = vmatpush1.bf16.msra.mxu0 0
      %2338 = vmatprep.subr.bf16.mxu0 0
      %2339 = vmatpush1.bf16.msra.mxu0 0
      %2340 = vmatprep.mubr.bf16.mxu0 0
      %2341 = vmatmul.mubr.bf16.gmra.mrb[0].mxu0 %v2229
      %v2342 = vpop.f32.mrb[0].mxu0
      %v2343 = vadd.f32 %v2258, %v2342
      %v2344 = vpop.f32.mrb[0].mxu0
      %v2345 = vpop.f32.mrb[0].mxu0
      %v2346 = vadd.f32 %v2258, %v2345
      %v2347 = vpop.f32.mrb[0].mxu0
      %2348 = vmatprep.mubr.bf16.mxu0 0
      %2349 = vmatmul.mubr.bf16.gmra.mrb[0].mxu0 %v2230
      %v2350 = vpop.f32.mrb[0].mxu0
      %v2351 = vadd.f32 %v2258, %v2350
      %v2352 = vpop.f32.mrb[0].mxu0
      %v2353 = vpop.f32.mrb[0].mxu0
      %v2354 = vadd.f32 %v2258, %v2353
      %v2355 = vpop.f32.mrb[0].mxu0
      %2356 = vmatprep.mubr.bf16.mxu0 0
      %2357 = vmatmul.mubr.bf16.gmra.mrb[0].mxu0 %v2231
      %v2358 = vpop.f32.mrb[0].mxu0
      %v2359 = vadd.f32 %v2258, %v2358
      %v2360 = vpop.f32.mrb[0].mxu0
      %v2361 = vpop.f32.mrb[0].mxu0
      %v2362 = vadd.f32 %v2258, %v2361
      %v2363 = vpop.f32.mrb[0].mxu0
      %2364 = vmatprep.mubr.bf16.mxu0 0
      %2365 = vmatmul.mubr.bf16.gmra.mrb[0].mxu0 %v2232
      %v2366 = vpop.f32.mrb[0].mxu0
      %v2367 = vadd.f32 %v2258, %v2366
      %v2368 = vpop.f32.mrb[0].mxu0
      %v2369 = vpop.f32.mrb[0].mxu0
      %v2370 = vadd.f32 %v2258, %v2369
      %v2371 = vpop.f32.mrb[0].mxu0
      %2372 = vmatprep.mubr.bf16.mxu0 0
      %2373 = vmatmul.mubr.bf16.gmra.mrb[0].mxu0 %v2233
      %v2374 = vpop.f32.mrb[0].mxu0
      %v2375 = vadd.f32 %v2258, %v2374
      %v2376 = vpop.f32.mrb[0].mxu0
      %v2377 = vpop.f32.mrb[0].mxu0
      %v2378 = vadd.f32 %v2258, %v2377
      %v2379 = vpop.f32.mrb[0].mxu0
      %2380 = vmatprep.mubr.bf16.mxu0 0
      %2381 = vmatmul.mubr.bf16.gmra.mrb[0].mxu0 %v2234
      %v2382 = vpop.f32.mrb[0].mxu0
      %v2383 = vadd.f32 %v2258, %v2382
      %v2384 = vpop.f32.mrb[0].mxu0
      %v2385 = vpop.f32.mrb[0].mxu0
      %v2386 = vadd.f32 %v2258, %v2385
      %v2387 = vpop.f32.mrb[0].mxu0
      %2388 = vmatprep.mubr.bf16.mxu0 0
      %2389 = vmatmul.mubr.bf16.gmra.mrb[0].mxu0 %v2235
      %v2390 = vpop.f32.mrb[0].mxu0
      %v2391 = vadd.f32 %v2258, %v2390
      %v2392 = vpop.f32.mrb[0].mxu0
      %v2393 = vpop.f32.mrb[0].mxu0
      %v2394 = vadd.f32 %v2258, %v2393
      %v2395 = vpop.f32.mrb[0].mxu0
      %2396 = vmatprep.mubr.bf16.mxu0 0
      %2397 = vmatmul.mubr.bf16.gmra.mrb[0].mxu0 %v2236
      %v2398 = vpop.f32.mrb[0].mxu0
      %v2399 = vadd.f32 %v2258, %v2398
      %v2400 = vpop.f32.mrb[0].mxu0
      %v2401 = vpop.f32.mrb[0].mxu0
      %v2402 = vadd.f32 %v2258, %v2401
      %v2403 = vpop.f32.mrb[0].mxu0
      %2404 = vdwg.mxu0
      %2405 = vst [vmem:[%s442] sm:$0xff] %v2343
      %2406 = vst [vmem:[%s442 + $0x8] sm:$0xff] %v2346
      %2407 = vst [vmem:[%s442 + $0x10] sm:$0xff] %v2351
      %2408 = vst [vmem:[%s442 + $0x18] sm:$0xff] %v2354
      %2409 = vst [vmem:[%s442 + $0x20] sm:$0xff] %v2359
      %2410 = vst [vmem:[%s442 + $0x28] sm:$0xff] %v2362
      %2411 = vst [vmem:[%s442 + $0x30] sm:$0xff] %v2367
      %2412 = vst [vmem:[%s442 + $0x38] sm:$0xff] %v2370
      %2413 = vst [vmem:[%s442 + $0x40] sm:$0xff] %v2375
      %2414 = vst [vmem:[%s442 + $0x48] sm:$0xff] %v2378
      %2415 = vst [vmem:[%s442 + $0x50] sm:$0xff] %v2383
      %2416 = vst [vmem:[%s442 + $0x58] sm:$0xff] %v2386
      %2417 = vst [vmem:[%s442 + $0x60] sm:$0xff] %v2391
      %2418 = vst [vmem:[%s442 + $0x68] sm:$0xff] %v2394
      %2419 = vst [vmem:[%s442 + $0x70] sm:$0xff] %v2399
      %2420 = vst [vmem:[%s442 + $0x78] sm:$0xff] %v2402
      %s2421 = smul.u32 16, %s24
      %p2422 = scmp.lt.s32.totalorder %s2421, 31
      %s2423 = scalar_select %p2422, %s2421, 31
      %s2424 = smul.addr %s2423, 8
      %s2425 = scalar_lea.vmem %s13, %s2424
      // Predicated region
      $region73: #{encoder_pet_forward.3} parent=71 // pred_check
        %p2426 = pneg %p320
      $region74: #{encoder_pet_forward.3} parent=71 // pred_check_branch
        %2428 = sbr.rel (%p2426) target = $region76
      $region75: #{encoder_pet_forward.3} parent=71 // pred_region
        %s2429 = smul.u32 16, %s24
      $region76: #{encoder_pet_forward.3} parent=71 // pred_fallthru
        _
    $region72: #{encoder_pet_forward.3} parent=5 // pred_fallthru
      _
    %p2430 = scmp.le.s32.totalorder 2, %s19
    // Predicated region
    $region77: #{encoder_pet_forward.3} parent=5 // pred_check
      %p2431 = pneg %p2430
    $region78: #{encoder_pet_forward.3} parent=5 // pred_check_branch
      %2433 = sbr.rel (%p2431) target = $region80
    $region79: #{encoder_pet_forward.3} parent=5 // pred_region
      %s2434 = ssub.s32 %s19, 2
      // Predicated region
      $region81: #{encoder_pet_forward.3} parent=79 // pred_check
        %p2435 = pneg %p326
      $region82: #{encoder_pet_forward.3} parent=79 // pred_check_branch
        %2437 = sbr.rel (%p2435) target = $region84
      $region83: #{encoder_pet_forward.3} parent=79 // pred_region
        %s2438 = smul.u32 16, %s25
        %p2439 = scmp.lt.s32.totalorder %s2438, 31
        %s2440 = scalar_select %p2439, %s2438, 31
        %s2441 = smul.addr %s2440, 8
        %s2442 = scalar_lea.vmem %s13, %s2441
      $region84: #{encoder_pet_forward.3} parent=79 // pred_fallthru
        _
    $region80: #{encoder_pet_forward.3} parent=5 // pred_fallthru
      _
  $region6: #{encoder_pet_forward.3} parent=0 // loop_footer
    %s23 = sadd.s32 1, %s19
  $region7: #{encoder_pet_forward.3} parent=0 // loop_footer_branch
    %18 = sbr.rel target = $region3
  $region8: #{encoder_pet_forward.3} parent=0 // loop_exit
    _

</llo_original>
